<compile_context>
chip_gen: v7x
topology: tpu7x:2x2x1
jax: 0.10.0
libtpu: 0.0.40
codegen_flags: <defaults>
</compile_context>

<pallas_src>
import functools

import jax
import jax.numpy as jnp
from jax.experimental import pallas as pl
from jax.experimental.pallas import tpu as pltpu


def _round_up(x, m):
    return (x + m - 1) // m * m


def _choose_tiling(n):
    """Pick (padded N, TM, TK).

    Small graphs: collapse the reduction axis (TK = Np, single k step) so the
    accumulator init/finalize and streamed-x re-fetch happen exactly once per
    row block.  Large graphs: TM=1024 / TK=2048 (A tile DMA rows are 2 KiB
    contiguous, x re-stream overhead ~12% of the A stream).
    """
    if n <= 8192:
        np_ = _round_up(max(n, 1), 512)
        tm = min(512, np_)
        tk = np_
    else:
        np_ = _round_up(n, 2048)
        tm = 1024
        tk = 2048
    return np_, tm, tk


def sage_layer_kernel(a_ref, xk_ref, xi_ref, invdeg_ref, wl_ref, wr_ref, b_ref,
                      out_ref, acc_ref, *, final, n_valid):
    """One SAGEConv layer: out = act( mean_agg(A, x) @ Wl + b + x @ Wr ).

    Grid = (row blocks i, adjacency column blocks k); k is the reduction axis.
    a_ref:      (TM, TK)  int8  edge-count adjacency tile (exact small ints)
    xk_ref:     (TK, Fp)  bf16  streamed node features (k block)
    xi_ref:     (TM, Fp)  bf16  self node features     (i block)
    invdeg_ref: (TM, 1)   f32   1/deg per row           (i block)
    wl_ref:     (Fp, Gp)  bf16  neighbor weight
    wr_ref:     (Fp, Gp)  bf16  self weight
    b_ref:      (1, Gp)   f32   bias
    acc_ref:    (TM, Fp)  f32   accumulator scratch (unnormalized neighbor sum)
    """
    k = pl.program_id(1)

    @pl.when(k == 0)
    def _():
        acc_ref[...] = jnp.zeros_like(acc_ref)

    # Dominant matmul: widen int8 counts to bf16 on the VPU (slack there),
    # bf16 x bf16 -> f32 accumulate on the MXU.
    # TODO(synk): on v7x, feed the MXU fp8(e4m3) adjacency directly instead of
    # the int8 -> bf16 widen (no int MXU path there).
    acc_ref[...] += jnp.dot(a_ref[...].astype(jnp.bfloat16), xk_ref[...],
                            preferred_element_type=jnp.float32)

    @pl.when(k == pl.num_programs(1) - 1)
    def _():
        # Mean aggregation: exact f32 1/deg scaling at finalize.
        agg = (acc_ref[...] * invdeg_ref[...]).astype(jnp.bfloat16)
        # Two accumulating dots (no (TM, 2Fp) concat temp).
        z = jnp.dot(agg, wl_ref[...], preferred_element_type=jnp.float32)
        z = z + jnp.dot(xi_ref[...], wr_ref[...],
                        preferred_element_type=jnp.float32)
        z = z + b_ref[...]

        if final:
            # log_softmax over the first n_valid (real) class columns only.
            col = jax.lax.broadcasted_iota(jnp.int32, z.shape, 1)
            valid = col < n_valid
            m = jnp.max(jnp.where(valid, z, -1e30), axis=1, keepdims=True)
            s = z - m
            e = jnp.where(valid, jnp.exp(s), 0.0)
            lse = jnp.log(jnp.sum(e, axis=1, keepdims=True))
            out_ref[...] = jnp.where(valid, s - lse, 0.0).astype(out_ref.dtype)
        else:
            out_ref[...] = jnp.maximum(z, 0.0).astype(out_ref.dtype)


def _sage_layer(a_i8, x, inv_deg, wl, wr, b, *, tm, tk, final, n_valid,
                out_dtype):
    """Run one tiled SAGEConv layer.

    a_i8: (Np, Np) int8, x: (Np, Fp) bf16, inv_deg: (Np, 1) f32,
    wl/wr: (Fp, Gp) bf16, b: (1, Gp) f32.
    """
    np_ = a_i8.shape[0]
    fp = x.shape[1]
    gp = wl.shape[1]
    grid = (np_ // tm, np_ // tk)

    kernel = functools.partial(sage_layer_kernel, final=final, n_valid=n_valid)

    return pl.pallas_call(
        kernel,
        out_shape=jax.ShapeDtypeStruct((np_, gp), out_dtype),
        grid_spec=pltpu.PrefetchScalarGridSpec(
            num_scalar_prefetch=0,
            grid=grid,
            in_specs=[
                pl.BlockSpec((tm, tk), lambda i, k: (i, k)),     # A (int8)
                pl.BlockSpec((tk, fp), lambda i, k: (k, 0)),     # x (stream)
                pl.BlockSpec((tm, fp), lambda i, k: (i, 0)),     # x (self)
                pl.BlockSpec((tm, 1), lambda i, k: (i, 0)),      # 1/deg
                pl.BlockSpec((fp, gp), lambda i, k: (0, 0)),     # Wl
                pl.BlockSpec((fp, gp), lambda i, k: (0, 0)),     # Wr
                pl.BlockSpec((1, gp), lambda i, k: (0, 0)),      # bias
            ],
            out_specs=pl.BlockSpec((tm, gp), lambda i, k: (i, 0)),
            scratch_shapes=[pltpu.VMEM((tm, fp), jnp.float32)],
        ),
        compiler_params=pltpu.CompilerParams(
            dimension_semantics=("parallel", "arbitrary"),
            vmem_limit_bytes=48 * 1024 * 1024,
        ),
    )(a_i8, x, x, inv_deg, wl, wr, b)


def build_padded_adjacency(edge_index, num_padded):
    """Edge-count adjacency (int8, already padded to Np) and per-row 1/deg.

    Matches PyG SAGEConv scatter-mean aggregation (duplicate edges counted).
    int8 is exact for realistic edge multiplicities (< 128 duplicates).
    """
    src = edge_index[0]
    dst = edge_index[1]
    a = jnp.zeros((num_padded, num_padded), jnp.int8)
    a = a.at[dst, src].add(jnp.ones_like(src, dtype=jnp.int8))
    deg = jnp.zeros((num_padded,), jnp.float32).at[dst].add(1.0)
    inv_deg = jnp.where(deg > 0.0, 1.0 / jnp.maximum(deg, 1.0), 0.0)
    return a, inv_deg.reshape(num_padded, 1)
    # TODO(synk): for realistically sparse graphs (E << N^2), replace the dense
    # A matmul with a CSR scalar-prefetch gather (PrefetchScalarGridSpec with
    # row offsets/indices + pl.Element) — that changes O(N^2 F) to O(E F).


def graphsage_forward(x, edge_index, params):
    """Full GraphSAGE forward (eval mode).  x: (N, F) f32, edge_index: (2, E)."""
    w1l, b1, w1r, w2l, b2, w2r = params
    n, f = x.shape
    h_dim = w1l.shape[1]
    c_dim = w2l.shape[1]

    np_, tm, tk = _choose_tiling(n)
    fp = _round_up(f, 128)
    hp = _round_up(h_dim, 128)
    cp = _round_up(c_dim, 128)

    # Adjacency built directly in its final padded int8 form (no extra N^2
    # cast/pad pass), 1/deg kept as a separate f32 column.
    a_i8, inv_deg = build_padded_adjacency(edge_index, np_)

    # Zero-pad + cast node features to bf16 (lane dense / MXU friendly).
    x_p = jnp.zeros((np_, fp), jnp.bfloat16).at[:n, :f].set(
        x.astype(jnp.bfloat16))

    # Weights kept separate (no [Wl; Wr] concat), zero-padded so padded lanes
    # contribute exactly 0.
    w1l_p = jnp.zeros((fp, hp), jnp.bfloat16).at[:f, :h_dim].set(
        w1l.astype(jnp.bfloat16))
    w1r_p = jnp.zeros((fp, hp), jnp.bfloat16).at[:f, :h_dim].set(
        w1r.astype(jnp.bfloat16))
    b1_p = jnp.zeros((1, hp), jnp.float32).at[0, :h_dim].set(b1)

    w2l_p = jnp.zeros((hp, cp), jnp.bfloat16).at[:h_dim, :c_dim].set(
        w2l.astype(jnp.bfloat16))
    w2r_p = jnp.zeros((hp, cp), jnp.bfloat16).at[:h_dim, :c_dim].set(
        w2r.astype(jnp.bfloat16))
    b2_p = jnp.zeros((1, cp), jnp.float32).at[0, :c_dim].set(b2)

    # Layer 1: SAGEConv + ReLU, h kept in bf16 for the layer-2 stream.
    h = _sage_layer(a_i8, x_p, inv_deg, w1l_p, w1r_p, b1_p, tm=tm, tk=tk,
                    final=False, n_valid=h_dim, out_dtype=jnp.bfloat16)
    # TODO(synk): dropout is identity in eval mode; training-mode dropout would
    # need pltpu.prng_seed / prng_random_bits masking inside the layer kernel.

    # Layer 2: SAGEConv + masked log_softmax over the real classes.
    z = _sage_layer(a_i8, h, inv_deg, w2l_p, w2r_p, b2_p, tm=tm, tk=tk,
                    final=True, n_valid=c_dim, out_dtype=jnp.float32)

    return z[:n, :c_dim]


if __name__ == "__main__":
    key = jax.random.PRNGKey(0)

    num_nodes = 600           # pads to 1024 -> grid (2 row blocks, 1 k block)
    num_edges = 3000
    in_channels = 16
    hidden_channels = 32
    out_channels = 8

    keys = jax.random.split(key, 8)

    x = jax.random.normal(keys[0], (num_nodes, in_channels), jnp.float32)
    edge_index = jax.random.randint(keys[1], (2, num_edges), 0, num_nodes,
                                    jnp.int32)

    def init_w(k, fan_in, fan_out):
        return 0.1 * jax.random.normal(k, (fan_in, fan_out), jnp.float32)

    w1l = init_w(keys[2], in_channels, hidden_channels)
    w1r = init_w(keys[3], in_channels, hidden_channels)
    b1 = 0.05 * jax.random.normal(keys[6], (hidden_channels,), jnp.float32)
    w2l = init_w(keys[4], hidden_channels, out_channels)
    w2r = init_w(keys[5], hidden_channels, out_channels)
    b2 = 0.05 * jax.random.normal(keys[7], (out_channels,), jnp.float32)

    params = (w1l, b1, w1r, w2l, b2, w2r)

    out = graphsage_forward(x, edge_index, params)
    out = jax.block_until_ready(out)

    # Pure-JAX f32 reference (kernel uses bf16 operands -> loose tolerance).
    a_cnt = jnp.zeros((num_nodes, num_nodes), jnp.float32).at[
        edge_index[1], edge_index[0]].add(1.0)
    deg = a_cnt.sum(axis=1, keepdims=True)
    a_norm = jnp.where(deg > 0, a_cnt / jnp.maximum(deg, 1.0), 0.0)

    h_ref = jax.nn.relu(a_norm @ x @ w1l + b1 + x @ w1r)
    z_ref = a_norm @ h_ref @ w2l + b2 + h_ref @ w2r
    ref = jax.nn.log_softmax(z_ref, axis=1)

    assert out.shape == (num_nodes, out_channels)
    assert jnp.allclose(jnp.exp(out).sum(axis=1), 1.0, atol=1e-4)
    max_err = float(jnp.max(jnp.abs(out - ref)))
    assert max_err < 5e-2, f"max abs err vs reference: {max_err}"
    print("KERNEL_OK")
</pallas_src>

<mosaic_0001>
module attributes {stable_mosaic.version = 11 : i64} {
  func.func @sage_layer_kernel(%arg0: i32, %arg1: i32, %arg2: memref<512x1024xi8, #tpu.memory_space<vmem>>, %arg3: memref<1024x128xbf16, #tpu.memory_space<vmem>>, %arg4: memref<512x128xbf16, #tpu.memory_space<vmem>>, %arg5: memref<512x1xf32, #tpu.memory_space<vmem>>, %arg6: memref<128x128xbf16, #tpu.memory_space<vmem>>, %arg7: memref<128x128xbf16, #tpu.memory_space<vmem>>, %arg8: memref<1x128xf32, #tpu.memory_space<vmem>>, %arg9: memref<512x128xbf16, #tpu.memory_space<vmem>>, %arg10: memref<512x128xf32, #tpu.memory_space<vmem>>) attributes {dimension_semantics = [#tpu.dimension_semantics<parallel>, #tpu.dimension_semantics<arbitrary>], iteration_bounds = array<i64: 2, 1>, scalar_prefetch = 0 : i64, scratch_operands = 1 : i64, tpu.core_type = #tpu.core_type<tc>, window_params = [{transform_indices = @transform_0, window_bounds = array<i64: 512, 1024>}, {transform_indices = @transform_1, window_bounds = array<i64: 1024, 128>}, {transform_indices = @transform_2, window_bounds = array<i64: 512, 128>}, {transform_indices = @transform_3, window_bounds = array<i64: 512, 1>}, {pipeline_mode = #tpu.pipeline_mode<synchronous>, transform_indices = @transform_4, window_bounds = array<i64: 128, 128>}, {pipeline_mode = #tpu.pipeline_mode<synchronous>, transform_indices = @transform_5, window_bounds = array<i64: 128, 128>}, {pipeline_mode = #tpu.pipeline_mode<synchronous>, transform_indices = @transform_6, window_bounds = array<i64: 1, 128>}, {transform_indices = @transform_7, window_bounds = array<i64: 512, 128>}]} {
    %c0_i32 = arith.constant 0 : i32
    %0 = arith.cmpi eq, %arg1, %c0_i32 : i32
    %1 = arith.extui %0 : i1 to i32
    %c0_i32_0 = arith.constant 0 : i32
    %2 = arith.cmpi ne, %1, %c0_i32_0 : i32
    scf.if %2 {
      %cst_10 = arith.constant 0.000000e+00 : f32
      %13 = vector.broadcast %cst_10 : f32 to vector<512x128xf32>
      %c0_11 = arith.constant 0 : index
      %c0_12 = arith.constant 0 : index
      %14 = vector.load %arg10[%c0_11, %c0_12] : memref<512x128xf32, #tpu.memory_space<vmem>>, vector<512x128xf32>
      tpu.vector_store %arg10[%c0_11, %c0_12], %13 {strides = array<i32>} : memref<512x128xf32, #tpu.memory_space<vmem>>, vector<512x128xf32>,
    } else {
    }
    %c0 = arith.constant 0 : index
    %c0_1 = arith.constant 0 : index
    %3 = vector.load %arg10[%c0, %c0_1] : memref<512x128xf32, #tpu.memory_space<vmem>>, vector<512x128xf32>
    %c0_2 = arith.constant 0 : index
    %c0_3 = arith.constant 0 : index
    %4 = vector.load %arg2[%c0_2, %c0_3] : memref<512x1024xi8, #tpu.memory_space<vmem>>, vector<512x1024xi8>
    %5 = arith.sitofp %4 : vector<512x1024xi8> to vector<512x1024xbf16>
    %c0_4 = arith.constant 0 : index
    %c0_5 = arith.constant 0 : index
    %6 = vector.load %arg3[%c0_4, %c0_5] : memref<1024x128xbf16, #tpu.memory_space<vmem>>, vector<1024x128xbf16>
    %cst = arith.constant dense<0.000000e+00> : vector<512x128xf32>
    %7 = tpu.matmul %5, %6, %cst {dimension_numbers = #tpu.dot_dimension_numbers<[1], [0], [0], [1], [0, 0, 1, 1], [], []>} : vector<512x1024xbf16>, vector<1024x128xbf16>, vector<512x128xf32> -> vector<512x128xf32>
    %8 = arith.addf %3, %7 : vector<512x128xf32>
    %c0_6 = arith.constant 0 : index
    %c0_7 = arith.constant 0 : index
    %9 = vector.load %arg10[%c0_6, %c0_7] : memref<512x128xf32, #tpu.memory_space<vmem>>, vector<512x128xf32>
    tpu.vector_store %arg10[%c0_6, %c0_7], %8 {strides = array<i32>} : memref<512x128xf32, #tpu.memory_space<vmem>>, vector<512x128xf32>,
    %c0_i32_8 = arith.constant 0 : i32
    %10 = arith.cmpi eq, %arg1, %c0_i32_8 : i32
    %11 = arith.extui %10 : i1 to i32
    %c0_i32_9 = arith.constant 0 : i32
    %12 = arith.cmpi ne, %11, %c0_i32_9 : i32
    scf.if %12 {
      %c0_10 = arith.constant 0 : index
      %c0_11 = arith.constant 0 : index
      %13 = vector.load %arg10[%c0_10, %c0_11] : memref<512x128xf32, #tpu.memory_space<vmem>>, vector<512x128xf32>
      %c0_12 = arith.constant 0 : index
      %c0_13 = arith.constant 0 : index
      %14 = vector.load %arg5[%c0_12, %c0_13] : memref<512x1xf32, #tpu.memory_space<vmem>>, vector<512x1xf32>
      %15 = vector.broadcast %14 : vector<512x1xf32> to vector<512x128xf32>
      %16 = arith.mulf %13, %15 : vector<512x128xf32>
      %17 = arith.truncf %16 : vector<512x128xf32> to vector<512x128xbf16>
      %c0_14 = arith.constant 0 : index
      %c0_15 = arith.constant 0 : index
      %18 = vector.load %arg6[%c0_14, %c0_15] : memref<128x128xbf16, #tpu.memory_space<vmem>>, vector<128x128xbf16>
      %cst_16 = arith.constant dense<0.000000e+00> : vector<512x128xf32>
      %19 = tpu.matmul %17, %18, %cst_16 {dimension_numbers = #tpu.dot_dimension_numbers<[1], [0], [0], [1], [0, 0, 1, 1], [], []>} : vector<512x128xbf16>, vector<128x128xbf16>, vector<512x128xf32> -> vector<512x128xf32>
      %c0_17 = arith.constant 0 : index
      %c0_18 = arith.constant 0 : index
      %20 = vector.load %arg4[%c0_17, %c0_18] : memref<512x128xbf16, #tpu.memory_space<vmem>>, vector<512x128xbf16>
      %c0_19 = arith.constant 0 : index
      %c0_20 = arith.constant 0 : index
      %21 = vector.load %arg7[%c0_19, %c0_20] : memref<128x128xbf16, #tpu.memory_space<vmem>>, vector<128x128xbf16>
      %cst_21 = arith.constant dense<0.000000e+00> : vector<512x128xf32>
      %22 = tpu.matmul %20, %21, %cst_21 {dimension_numbers = #tpu.dot_dimension_numbers<[1], [0], [0], [1], [0, 0, 1, 1], [], []>} : vector<512x128xbf16>, vector<128x128xbf16>, vector<512x128xf32> -> vector<512x128xf32>
      %23 = arith.addf %19, %22 : vector<512x128xf32>
      %c0_22 = arith.constant 0 : index
      %c0_23 = arith.constant 0 : index
      %24 = vector.load %arg8[%c0_22, %c0_23] : memref<1x128xf32, #tpu.memory_space<vmem>>, vector<1x128xf32>
      %25 = vector.broadcast %24 : vector<1x128xf32> to vector<512x128xf32>
      %26 = arith.addf %23, %25 : vector<512x128xf32>
      %cst_24 = arith.constant 0.000000e+00 : f32
      %27 = vector.broadcast %cst_24 : f32 to vector<512x128xf32>
      %28 = arith.maximumf %26, %27 : vector<512x128xf32>
      %29 = arith.truncf %28 : vector<512x128xf32> to vector<512x128xbf16>
      %c0_25 = arith.constant 0 : index
      %c0_26 = arith.constant 0 : index
      %30 = vector.load %arg9[%c0_25, %c0_26] : memref<512x128xbf16, #tpu.memory_space<vmem>>, vector<512x128xbf16>
      tpu.vector_store %arg9[%c0_25, %c0_26], %29 {strides = array<i32>} : memref<512x128xbf16, #tpu.memory_space<vmem>>, vector<512x128xbf16>,
    } else {
    }
    return
  }
  func.func @transform_0(%arg0: i32, %arg1: i32) -> (i32, i32) {
    %c0_i32 = arith.constant 0 : i32
    return %arg0, %arg1 : i32, i32
  }
  func.func @transform_1(%arg0: i32, %arg1: i32) -> (i32, i32) {
    %c0_i32 = arith.constant 0 : i32
    %c0_i32_0 = arith.constant 0 : i32
    return %arg1, %c0_i32 : i32, i32
  }
  func.func @transform_2(%arg0: i32, %arg1: i32) -> (i32, i32) {
    %c0_i32 = arith.constant 0 : i32
    %c0_i32_0 = arith.constant 0 : i32
    return %arg0, %c0_i32 : i32, i32
  }
  func.func @transform_3(%arg0: i32, %arg1: i32) -> (i32, i32) {
    %c0_i32 = arith.constant 0 : i32
    %c0_i32_0 = arith.constant 0 : i32
    return %arg0, %c0_i32 : i32, i32
  }
  func.func @transform_4(%arg0: i32, %arg1: i32) -> (i32, i32) {
    %c0_i32 = arith.constant 0 : i32
    %c0_i32_0 = arith.constant 0 : i32
    %c0_i32_1 = arith.constant 0 : i32
    return %c0_i32, %c0_i32_0 : i32, i32
  }
  func.func @transform_5(%arg0: i32, %arg1: i32) -> (i32, i32) {
    %c0_i32 = arith.constant 0 : i32
    %c0_i32_0 = arith.constant 0 : i32
    %c0_i32_1 = arith.constant 0 : i32
    return %c0_i32, %c0_i32_0 : i32, i32
  }
  func.func @transform_6(%arg0: i32, %arg1: i32) -> (i32, i32) {
    %c0_i32 = arith.constant 0 : i32
    %c0_i32_0 = arith.constant 0 : i32
    %c0_i32_1 = arith.constant 0 : i32
    return %c0_i32, %c0_i32_0 : i32, i32
  }
  func.func @transform_7(%arg0: i32, %arg1: i32) -> (i32, i32) {
    %c0_i32 = arith.constant 0 : i32
    %c0_i32_0 = arith.constant 0 : i32
    return %arg0, %c0_i32 : i32, i32
  }
}

</mosaic_0001>

<llo_original>
// kernel: tpu_custom_call.1
$region0: #{tpu_custom_call.1}
  #allocation0 [shape = 'u32[]', space=smem, size = 0x4, offset = 0x4, fixed_abs, tag = 'smem constant byte address 0x4 - core index']
  #allocation1 [shape = 'u32[144,128]{1,0:T(1,128)}', space=vmem, size = 0x12000, scoped, tag = 'internal scratch']
  #allocation2 [shape = 'f32[512,128]{1,0:T(8,128)}', space=vmem, size = 0x40000, scoped, tag = 'scratch operand']
  %s0 = inlined_call_operand.hbm [shape: s8[1024,1024], index: 0, kind: input, shape index: {}]
  %s1 = inlined_call_operand.vmem [shape: bf16[1024,128], index: 1, kind: input, shape index: {}]
  %s2 = inlined_call_operand.vmem [shape: bf16[1024,128], index: 2, kind: input, shape index: {}]
  %s3 = inlined_call_operand.vmem [shape: f32[1024,1], index: 3, kind: input, shape index: {}]
  %s4 = inlined_call_operand.hbm [shape: bf16[128,128], index: 4, kind: input, shape index: {}]
  %s5 = inlined_call_operand.hbm [shape: bf16[128,128], index: 5, kind: input, shape index: {}]
  %s6 = inlined_call_operand.vmem [shape: f32[1,128], index: 6, kind: input, shape index: {}]
  %s7 = inlined_call_operand.hbm [shape: bf16[1024,128], index: 7, kind: output, shape index: {}]
  %s8 = sld [smem:[#allocation0]]
  $region81: #{tpu_custom_call.1} parent=0
    _
  %s10 = ssub.s32 1, %s8
  %s11 = scalar_select 0, %s10, %s8
  $region1: #{tpu_custom_call.1} parent=0
    #allocation3 [shape = 'u8[1048576]{0}', space=vmem, size = 0x100000, scoped, tag = 'input window, operand 0']
    #allocation4 [shape = 's32[2]{0}', space=sflag, size = 0x8, scoped, tag = 'scoped memory for tpu_custom_call.1']
    #allocation5 [shape = 's32[2]{0}', space=sflag, size = 0x8, scoped, tag = 'scoped memory for tpu_custom_call.1']
    #allocation6 [shape = 'u8[32768]{0}', space=vmem, size = 0x8000, scoped, tag = 'input window, operand 4, single buffered']
    #allocation7 [shape = 's32[1]{0}', space=sflag, size = 0x4, scoped, tag = 'scoped memory for tpu_custom_call.1']
    #allocation8 [shape = 'u8[32768]{0}', space=vmem, size = 0x8000, scoped, tag = 'input window, operand 5, single buffered']
    #allocation9 [shape = 'u8[262144]{0}', space=vmem, size = 0x40000, scoped, tag = 'output window, operand 0']
    %12 = vsyncpa [#allocation4], 0
    %s13 = scalar_lea.sflag [#allocation4], 1
    %14 = vsyncpa %s13, 0
    %15 = vsyncpa [#allocation7], 0
    %16 = vsyncpa [#allocation5], 0
    %s17 = scalar_lea.sflag [#allocation5], 1
    %18 = vsyncpa %s17, 0
    loop: start=0, step=1, limit=4
    $region2: #{tpu_custom_call.1} parent=1 // loop_pre_header
      _
    $region3: #{tpu_custom_call.1} parent=1 // loop_header
      %s20 = sphi 0, %s24
      %p21 = scmp.ge.s32.totalorder %s20, 4
      %s27 = sphi 0, %s39
      %s28 = sphi 0, %s35
      %s29 = sphi 0, %s27
      %s30 = sphi 0, %s28
      %s31 = sphi 0, %s29
      %s32 = sphi 0, %s30
      %s44 = sphi 0, %s46
      %s47 = sphi 0, %s44
      %s48 = sphi 0, %s47
      %s64 = sphi 0, %s48
      %s70 = sphi 0, %s72
      %s73 = sphi 0, %s70
      %s74 = sphi 0, %s73
      %s90 = sphi 0, %s74
      %s96 = sphi 0, %s98
      %s99 = sphi 0, %s96
      %s100 = sphi 0, %s99
      %s116 = sphi 0, %s100
      %s122 = sphi 0, %s124
      %s125 = sphi 0, %s122
      %s126 = sphi 0, %s125
      %s142 = sphi 0, %s126
      %s146 = sphi 0, %s146
      %s148 = sphi 0, %s146
      %s149 = sphi 0, %s148
      %s163 = sphi 0, %s149
      %s167 = sphi 0, %s167
      %s169 = sphi 0, %s167
      %s170 = sphi 0, %s169
      %s184 = sphi 0, %s170
      %s188 = sphi 0, %s188
      %s190 = sphi 0, %s188
      %s191 = sphi 0, %s190
      %s205 = sphi 0, %s191
      %s211 = sphi 0, %s213
      %s214 = sphi 0, %s211
      %s215 = sphi 0, %s214
      %s231 = sphi 0, %s215
    $region4: #{tpu_custom_call.1} parent=1 // loop_header_branch
      %23 = sbr.rel (%p21) target = $region8
    $region5: #{tpu_custom_call.1} parent=1 // loop_body
      %s25 = ssub.s32 %s20, 1
      %s26 = ssub.s32 %s20, 2
      %s33 = sadd.s32 1, %s28
      %p34 = scmp.ge.s32.totalorder %s33, 1
      %s35 = scalar_select %p34, 0, %s33
      %s36 = sadd.s32 1, %s27
      %s37 = scalar_select %p34, %s36, %s27
      %p38 = scmp.ge.s32.totalorder %s37, 2
      %s39 = scalar_select %p38, 0, %s37
      %s40 = ssub.s32 %s27, %s39
      %s41 = ssub.s32 %s28, %s35
      %s42 = sor.u32 %s40, %s41
      %p43 = scmp.eq.s32.totalorder %s42, 0
      %s45 = sadd.s32 %s44, 1
      %s46 = scalar_select %p43, %s44, %s45
      %p49 = pneg %p43
      %p50 = scmp.eq.s32.totalorder %s20, 1
      %p51 = por %p49, %p50
      %p52 = scmp.ne.s32.totalorder %s44, %s47
      %p53 = scmp.eq.s32.totalorder %s20, 0
      %p54 = por %p52, %p53
      %p55 = scmp.ne.s32.totalorder %s44, %s47
      %p56 = scmp.eq.s32.totalorder %s25, 1
      %p57 = por %p55, %p56
      %p58 = scmp.ne.s32.totalorder %s47, %s48
      %p59 = scmp.eq.s32.totalorder %s25, 0
      %p60 = por %p58, %p59
      %p61 = scmp.ne.s32.totalorder %s47, %s48
      %p62 = scmp.eq.s32.totalorder %s26, 1
      %p63 = por %p61, %p62
      %p65 = scmp.ne.s32.totalorder %s48, %s64
      %p66 = scmp.eq.s32.totalorder %s26, 0
      %p67 = por %p65, %p66
      %s68 = ssub.s32 %s28, %s35
      %p69 = scmp.eq.s32.totalorder %s68, 0
      %s71 = sadd.s32 %s70, 1
      %s72 = scalar_select %p69, %s70, %s71
      %p75 = pneg %p69
      %p76 = scmp.eq.s32.totalorder %s20, 1
      %p77 = por %p75, %p76
      %p78 = scmp.ne.s32.totalorder %s70, %s73
      %p79 = scmp.eq.s32.totalorder %s20, 0
      %p80 = por %p78, %p79
      %p81 = scmp.ne.s32.totalorder %s70, %s73
      %p82 = scmp.eq.s32.totalorder %s25, 1
      %p83 = por %p81, %p82
      %p84 = scmp.ne.s32.totalorder %s73, %s74
      %p85 = scmp.eq.s32.totalorder %s25, 0
      %p86 = por %p84, %p85
      %p87 = scmp.ne.s32.totalorder %s73, %s74
      %p88 = scmp.eq.s32.totalorder %s26, 1
      %p89 = por %p87, %p88
      %p91 = scmp.ne.s32.totalorder %s74, %s90
      %p92 = scmp.eq.s32.totalorder %s26, 0
      %p93 = por %p91, %p92
      %s94 = ssub.s32 %s27, %s39
      %p95 = scmp.eq.s32.totalorder %s94, 0
      %s97 = sadd.s32 %s96, 1
      %s98 = scalar_select %p95, %s96, %s97
      %p101 = pneg %p95
      %p102 = scmp.eq.s32.totalorder %s20, 1
      %p103 = por %p101, %p102
      %p104 = scmp.ne.s32.totalorder %s96, %s99
      %p105 = scmp.eq.s32.totalorder %s20, 0
      %p106 = por %p104, %p105
      %p107 = scmp.ne.s32.totalorder %s96, %s99
      %p108 = scmp.eq.s32.totalorder %s25, 1
      %p109 = por %p107, %p108
      %p110 = scmp.ne.s32.totalorder %s99, %s100
      %p111 = scmp.eq.s32.totalorder %s25, 0
      %p112 = por %p110, %p111
      %p113 = scmp.ne.s32.totalorder %s99, %s100
      %p114 = scmp.eq.s32.totalorder %s26, 1
      %p115 = por %p113, %p114
      %p117 = scmp.ne.s32.totalorder %s100, %s116
      %p118 = scmp.eq.s32.totalorder %s26, 0
      %p119 = por %p117, %p118
      %s120 = ssub.s32 %s27, %s39
      %p121 = scmp.eq.s32.totalorder %s120, 0
      %s123 = sadd.s32 %s122, 1
      %s124 = scalar_select %p121, %s122, %s123
      %p127 = pneg %p121
      %p128 = scmp.eq.s32.totalorder %s20, 1
      %p129 = por %p127, %p128
      %p130 = scmp.ne.s32.totalorder %s122, %s125
      %p131 = scmp.eq.s32.totalorder %s20, 0
      %p132 = por %p130, %p131
      %p133 = scmp.ne.s32.totalorder %s122, %s125
      %p134 = scmp.eq.s32.totalorder %s25, 1
      %p135 = por %p133, %p134
      %p136 = scmp.ne.s32.totalorder %s125, %s126
      %p137 = scmp.eq.s32.totalorder %s25, 0
      %p138 = por %p136, %p137
      %p139 = scmp.ne.s32.totalorder %s125, %s126
      %p140 = scmp.eq.s32.totalorder %s26, 1
      %p141 = por %p139, %p140
      %p143 = scmp.ne.s32.totalorder %s126, %s142
      %p144 = scmp.eq.s32.totalorder %s26, 0
      %p145 = por %p143, %p144
      %s147 = sadd.s32 %s146, 1
      %p150 = scmp.eq.s32.totalorder %s20, 1
      %p151 = scmp.ne.s32.totalorder %s146, %s148
      %p152 = scmp.eq.s32.totalorder %s20, 0
      %p153 = por %p151, %p152
      %p154 = scmp.ne.s32.totalorder %s146, %s148
      %p155 = scmp.eq.s32.totalorder %s25, 1
      %p156 = por %p154, %p155
      %p157 = scmp.ne.s32.totalorder %s148, %s149
      %p158 = scmp.eq.s32.totalorder %s25, 0
      %p159 = por %p157, %p158
      %p160 = scmp.ne.s32.totalorder %s148, %s149
      %p161 = scmp.eq.s32.totalorder %s26, 1
      %p162 = por %p160, %p161
      %p164 = scmp.ne.s32.totalorder %s149, %s163
      %p165 = scmp.eq.s32.totalorder %s26, 0
      %p166 = por %p164, %p165
      %s168 = sadd.s32 %s167, 1
      %p171 = scmp.eq.s32.totalorder %s20, 1
      %p172 = scmp.ne.s32.totalorder %s167, %s169
      %p173 = scmp.eq.s32.totalorder %s20, 0
      %p174 = por %p172, %p173
      %p175 = scmp.ne.s32.totalorder %s167, %s169
      %p176 = scmp.eq.s32.totalorder %s25, 1
      %p177 = por %p175, %p176
      %p178 = scmp.ne.s32.totalorder %s169, %s170
      %p179 = scmp.eq.s32.totalorder %s25, 0
      %p180 = por %p178, %p179
      %p181 = scmp.ne.s32.totalorder %s169, %s170
      %p182 = scmp.eq.s32.totalorder %s26, 1
      %p183 = por %p181, %p182
      %p185 = scmp.ne.s32.totalorder %s170, %s184
      %p186 = scmp.eq.s32.totalorder %s26, 0
      %p187 = por %p185, %p186
      %s189 = sadd.s32 %s188, 1
      %p192 = scmp.eq.s32.totalorder %s20, 1
      %p193 = scmp.ne.s32.totalorder %s188, %s190
      %p194 = scmp.eq.s32.totalorder %s20, 0
      %p195 = por %p193, %p194
      %p196 = scmp.ne.s32.totalorder %s188, %s190
      %p197 = scmp.eq.s32.totalorder %s25, 1
      %p198 = por %p196, %p197
      %p199 = scmp.ne.s32.totalorder %s190, %s191
      %p200 = scmp.eq.s32.totalorder %s25, 0
      %p201 = por %p199, %p200
      %p202 = scmp.ne.s32.totalorder %s190, %s191
      %p203 = scmp.eq.s32.totalorder %s26, 1
      %p204 = por %p202, %p203
      %p206 = scmp.ne.s32.totalorder %s191, %s205
      %p207 = scmp.eq.s32.totalorder %s26, 0
      %p208 = por %p206, %p207
      %s209 = ssub.s32 %s27, %s39
      %p210 = scmp.eq.s32.totalorder %s209, 0
      %s212 = sadd.s32 %s211, 1
      %s213 = scalar_select %p210, %s211, %s212
      %p216 = pneg %p210
      %p217 = scmp.eq.s32.totalorder %s20, 1
      %p218 = por %p216, %p217
      %p219 = scmp.ne.s32.totalorder %s211, %s214
      %p220 = scmp.eq.s32.totalorder %s20, 0
      %p221 = por %p219, %p220
      %p222 = scmp.ne.s32.totalorder %s211, %s214
      %p223 = scmp.eq.s32.totalorder %s25, 1
      %p224 = por %p222, %p223
      %p225 = scmp.ne.s32.totalorder %s214, %s215
      %p226 = scmp.eq.s32.totalorder %s25, 0
      %p227 = por %p225, %p226
      %p228 = scmp.ne.s32.totalorder %s214, %s215
      %p229 = scmp.eq.s32.totalorder %s26, 1
      %p230 = por %p228, %p229
      %p232 = scmp.ne.s32.totalorder %s215, %s231
      %p233 = scmp.eq.s32.totalorder %s26, 0
      %p234 = por %p232, %p233
      %p235 = scmp.le.s32.totalorder 1, %s20
      %p236 = scmp.lt.s32.totalorder %s20, 3
      %p237 = pnand %p235, %p236
      %p238 = pneg %p237
      // Predicated region
      $region9: #{tpu_custom_call.1} parent=5 // pred_check
        _
      $region10: #{tpu_custom_call.1} parent=5 // pred_check_branch
        %240 = sbr.rel (%p237) target = $region12
      $region11: #{tpu_custom_call.1} parent=5 // pred_region
        %s241 = ssub.s32 %s20, 1
        // Predicated region
        $region13: #{tpu_custom_call.1} parent=11 // pred_check
          %p242 = pneg %p86
        $region14: #{tpu_custom_call.1} parent=11 // pred_check_branch
          %244 = sbr.rel (%p242) target = $region16
        $region15: #{tpu_custom_call.1} parent=11 // pred_region
          %s245 = smul.u32 128, %s30
          %p246 = scmp.lt.s32.totalorder %s245, 127
          %s247 = scalar_select %p246, %s245, 127
          %s248 = smul.addr %s247, 4
          %s249 = scalar_lea.vmem %s1, %s248
          %s250 = smul.u32 128, %s30
        $region16: #{tpu_custom_call.1} parent=11 // pred_fallthru
          _
        // Predicated region
        $region17: #{tpu_custom_call.1} parent=11 // pred_check
          %p251 = pneg %p159
        $region18: #{tpu_custom_call.1} parent=11 // pred_check_branch
          %253 = sbr.rel (%p251) target = $region20
        $region19: #{tpu_custom_call.1} parent=11 // pred_region
          %s255 = ssub.s32 1024, 1024
          %256 = vsyncadd [#allocation7], %s255
          %s257 = sshll.u32 [#allocation6], 4
          %s258 = int_to_ptr.vmem [resolvable:$true] %s257
          %263 = dma.hbm_to_vmem [thread:$0]  %s4, 1024, %s258, [#allocation7], 64, 64, 4
        $region20: #{tpu_custom_call.1} parent=11 // pred_fallthru
          _
        // Predicated region
        $region21: #{tpu_custom_call.1} parent=11 // pred_check
          %p264 = pneg %p180
        $region22: #{tpu_custom_call.1} parent=11 // pred_check_branch
          %266 = sbr.rel (%p264) target = $region24
        $region23: #{tpu_custom_call.1} parent=11 // pred_region
          %s268 = ssub.s32 1024, 1024
          %269 = vsyncadd [#allocation7], %s268
          %s270 = sshll.u32 [#allocation8], 4
          %s271 = int_to_ptr.vmem [resolvable:$true] %s270
          %276 = dma.hbm_to_vmem [thread:$0]  %s5, 1024, %s271, [#allocation7], 64, 64, 4
        $region24: #{tpu_custom_call.1} parent=11 // pred_fallthru
          _
        // Predicated region
        $region25: #{tpu_custom_call.1} parent=11 // pred_check
          %p277 = pneg %p201
        $region26: #{tpu_custom_call.1} parent=11 // pred_check_branch
          %279 = sbr.rel (%p277) target = $region28
        $region27: #{tpu_custom_call.1} parent=11 // pred_region
          _
        $region28: #{tpu_custom_call.1} parent=11 // pred_fallthru
          _
      $region12: #{tpu_custom_call.1} parent=5 // pred_fallthru
        _
      %p280 = scmp.lt.s32.totalorder %s20, 2
      // Predicated region
      $region29: #{tpu_custom_call.1} parent=5 // pred_check
        %p281 = pneg %p280
      $region30: #{tpu_custom_call.1} parent=5 // pred_check_branch
        %283 = sbr.rel (%p281) target = $region32
      $region31: #{tpu_custom_call.1} parent=5 // pred_region
        // Predicated region
        $region33: #{tpu_custom_call.1} parent=31 // pred_check
          %p284 = pneg %p54
        $region34: #{tpu_custom_call.1} parent=31 // pred_check_branch
          %286 = sbr.rel (%p284) target = $region36
        $region35: #{tpu_custom_call.1} parent=31 // pred_region
          %s287 = sand.u32 %s44, 1
          %s288 = scalar_lea.sflag [#allocation4], %s287
          %s289 = sand.u32 %s44, 1
          %s290 = smul.addr %s289, 1024
          %s291 = scalar_lea.vmem [#allocation3], %s290
          %s292 = smul.u32 16, %s27
          %s293 = smul.u32 8, %s28
          %s295 = ssub.s32 16384, 16384
          %296 = vsyncadd %s288, %s295
          %s297 = smul.addr %s292, 8
          %s298 = sadd.s32 %s293, %s297
          %s299 = smul.addr %s298, 128
          %s300 = scalar_lea.hbm %s0, %s299
          %s301 = sshll.u32 %s291, 4
          %s302 = int_to_ptr.vmem [resolvable:$true] %s301
          %307 = dma.hbm_to_vmem [thread:$0]  %s300, 16384, %s302, %s288, 1024, 1024, 64
        $region36: #{tpu_custom_call.1} parent=31 // pred_fallthru
          _
        // Predicated region
        $region37: #{tpu_custom_call.1} parent=31 // pred_check
          %p308 = pneg %p106
        $region38: #{tpu_custom_call.1} parent=31 // pred_check_branch
          %310 = sbr.rel (%p308) target = $region40
        $region39: #{tpu_custom_call.1} parent=31 // pred_region
          %s311 = smul.u32 64, %s27
          %p312 = scmp.lt.s32.totalorder %s311, 127
          %s313 = scalar_select %p312, %s311, 127
          %s314 = smul.addr %s313, 4
          %s315 = scalar_lea.vmem %s2, %s314
          %s316 = smul.u32 64, %s27
        $region40: #{tpu_custom_call.1} parent=31 // pred_fallthru
          _
        // Predicated region
        $region41: #{tpu_custom_call.1} parent=31 // pred_check
          %p317 = pneg %p132
        $region42: #{tpu_custom_call.1} parent=31 // pred_check_branch
          %319 = sbr.rel (%p317) target = $region44
        $region43: #{tpu_custom_call.1} parent=31 // pred_region
          %s320 = smul.u32 64, %s27
          %p321 = scmp.lt.s32.totalorder %s320, 127
          %s322 = scalar_select %p321, %s320, 127
          %s323 = smul.addr %s322, 8
          %s324 = scalar_lea.vmem %s3, %s323
          %s325 = smul.u32 64, %s27
        $region44: #{tpu_custom_call.1} parent=31 // pred_fallthru
          _
      $region32: #{tpu_custom_call.1} parent=5 // pred_fallthru
        _
      %p326 = scmp.le.s32.totalorder 1, %s20
      %p327 = scmp.lt.s32.totalorder %s20, 3
      %p328 = pnand %p326, %p327
      %p329 = pneg %p328
      // Predicated region
      $region45: #{tpu_custom_call.1} parent=5 // pred_check
        _
      $region46: #{tpu_custom_call.1} parent=5 // pred_check_branch
        %331 = sbr.rel (%p328) target = $region48
      $region47: #{tpu_custom_call.1} parent=5 // pred_region
        %s332 = ssub.s32 %s20, 1
        %s333 = sand.u32 %s47, 1
        %s334 = scalar_lea.sflag [#allocation4], %s333
        %s335 = sand.u32 %s47, 1
        %s336 = smul.addr %s335, 1024
        %s337 = scalar_lea.vmem [#allocation3], %s336
        // Predicated region
        $region49: #{tpu_custom_call.1} parent=47 // pred_check
          %p338 = pneg %p60
        $region50: #{tpu_custom_call.1} parent=47 // pred_check_branch
          %340 = sbr.rel (%p338) target = $region52
        $region51: #{tpu_custom_call.1} parent=47 // pred_region
          %341 = dma.done %s334, 16384
        $region52: #{tpu_custom_call.1} parent=47 // pred_fallthru
          _
        // Predicated region
        $region53: #{tpu_custom_call.1} parent=47 // pred_check
          %p342 = pneg %p159
        $region54: #{tpu_custom_call.1} parent=47 // pred_check_branch
          %344 = sbr.rel (%p342) target = $region56
        $region55: #{tpu_custom_call.1} parent=47 // pred_region
          %345 = dma.done [#allocation7], 1024
        $region56: #{tpu_custom_call.1} parent=47 // pred_fallthru
          _
        // Predicated region
        $region57: #{tpu_custom_call.1} parent=47 // pred_check
          %p346 = pneg %p180
        $region58: #{tpu_custom_call.1} parent=47 // pred_check_branch
          %348 = sbr.rel (%p346) target = $region60
        $region59: #{tpu_custom_call.1} parent=47 // pred_region
          %349 = dma.done [#allocation7], 1024
        $region60: #{tpu_custom_call.1} parent=47 // pred_fallthru
          _
        %s350 = sand.u32 %s47, 1
        %s351 = scalar_lea.sflag [#allocation4], %s350
        %s352 = sand.u32 %s47, 1
        %s353 = smul.addr %s352, 1024
        %s354 = scalar_lea.vmem [#allocation3], %s353
        %p355 = pneg %p60
        %p356 = pneg %p57
        %s357 = smul.u32 128, %s30
        %p358 = scmp.lt.s32.totalorder %s357, 127
        %s359 = scalar_select %p358, %s357, 127
        %s360 = smul.addr %s359, 4
        %s361 = scalar_lea.vmem %s1, %s360
        %p362 = pneg %p86
        %p363 = pneg %p83
        %s364 = smul.u32 64, %s29
        %p365 = scmp.lt.s32.totalorder %s364, 127
        %s366 = scalar_select %p365, %s364, 127
        %s367 = smul.addr %s366, 4
        %s368 = scalar_lea.vmem %s2, %s367
        %p369 = pneg %p112
        %p370 = pneg %p109
        %s371 = smul.u32 64, %s29
        %p372 = scmp.lt.s32.totalorder %s371, 127
        %s373 = scalar_select %p372, %s371, 127
        %s374 = smul.addr %s373, 8
        %s375 = scalar_lea.vmem %s3, %s374
        %p376 = pneg %p138
        %p377 = pneg %p135
        %p378 = pneg %p159
        %p379 = pneg %p156
        %p380 = pneg %p180
        %p381 = pneg %p177
        %p382 = pneg %p201
        %p383 = pneg %p198
        %p384 = pneg %p227
        %p385 = pneg %p224
        %s386 = sand.u32 %s214, 1
        %s387 = scalar_lea.sflag [#allocation5], %s386
        %s388 = sand.u32 %s214, 1
        %s389 = smul.addr %s388, 256
        %s390 = scalar_lea.vmem [#allocation9], %s389
        %s391 = smul.u32 16, %s29
        %s392 = smul.u32 8, %s30
        %s393 = smul.u32 128, %s30
        %p394 = scmp.lt.s32.totalorder %s393, 127
        %s395 = scalar_select %p394, %s393, 127
        %s396 = smul.addr %s395, 4
        %s397 = scalar_lea.vmem %s1, %s396
        %s398 = smul.u32 128, %s30
        %s399 = smul.u32 64, %s29
        %p400 = scmp.lt.s32.totalorder %s399, 127
        %s401 = scalar_select %p400, %s399, 127
        %s402 = smul.addr %s401, 4
        %s403 = scalar_lea.vmem %s2, %s402
        %s404 = smul.u32 64, %s29
        %s405 = smul.u32 64, %s29
        %p406 = scmp.lt.s32.totalorder %s405, 127
        %s407 = scalar_select %p406, %s405, 127
        %s408 = smul.addr %s407, 8
        %s409 = scalar_lea.vmem %s3, %s408
        %s410 = smul.u32 64, %s29
        %s411 = smul.u32 64, %s29
        %p413 = scmp.eq.s32.totalorder %s30, 0
        // Predicated region
        $region61: #{tpu_custom_call.1} parent=47 // pred_check
          %p414 = pneg %p413
        $region62: #{tpu_custom_call.1} parent=47 // pred_check_branch
          %416 = sbr.rel (%p414) target = $region64
        $region63: #{tpu_custom_call.1} parent=47 // pred_region
          %417 = vst [vmem:[#allocation2] sm:$0xff] 0.0
          %418 = vst [vmem:[#allocation2 + $0x8] sm:$0xff] 0.0
          %419 = vst [vmem:[#allocation2 + $0x10] sm:$0xff] 0.0
          %420 = vst [vmem:[#allocation2 + $0x18] sm:$0xff] 0.0
          %421 = vst [vmem:[#allocation2 + $0x20] sm:$0xff] 0.0
          %422 = vst [vmem:[#allocation2 + $0x28] sm:$0xff] 0.0
          %423 = vst [vmem:[#allocation2 + $0x30] sm:$0xff] 0.0
          %424 = vst [vmem:[#allocation2 + $0x38] sm:$0xff] 0.0
          %425 = vst [vmem:[#allocation2 + $0x40] sm:$0xff] 0.0
          %426 = vst [vmem:[#allocation2 + $0x48] sm:$0xff] 0.0
          %427 = vst [vmem:[#allocation2 + $0x50] sm:$0xff] 0.0
          %428 = vst [vmem:[#allocation2 + $0x58] sm:$0xff] 0.0
          %429 = vst [vmem:[#allocation2 + $0x60] sm:$0xff] 0.0
          %430 = vst [vmem:[#allocation2 + $0x68] sm:$0xff] 0.0
          %431 = vst [vmem:[#allocation2 + $0x70] sm:$0xff] 0.0
          %432 = vst [vmem:[#allocation2 + $0x78] sm:$0xff] 0.0
          %433 = vst [vmem:[#allocation2 + $0x80] sm:$0xff] 0.0
          %434 = vst [vmem:[#allocation2 + $0x88] sm:$0xff] 0.0
          %435 = vst [vmem:[#allocation2 + $0x90] sm:$0xff] 0.0
          %436 = vst [vmem:[#allocation2 + $0x98] sm:$0xff] 0.0
          %437 = vst [vmem:[#allocation2 + $0xa0] sm:$0xff] 0.0
          %438 = vst [vmem:[#allocation2 + $0xa8] sm:$0xff] 0.0
          %439 = vst [vmem:[#allocation2 + $0xb0] sm:$0xff] 0.0
          %440 = vst [vmem:[#allocation2 + $0xb8] sm:$0xff] 0.0
          %441 = vst [vmem:[#allocation2 + $0xc0] sm:$0xff] 0.0
          %442 = vst [vmem:[#allocation2 + $0xc8] sm:$0xff] 0.0
          %443 = vst [vmem:[#allocation2 + $0xd0] sm:$0xff] 0.0
          %444 = vst [vmem:[#allocation2 + $0xd8] sm:$0xff] 0.0
          %445 = vst [vmem:[#allocation2 + $0xe0] sm:$0xff] 0.0
          %446 = vst [vmem:[#allocation2 + $0xe8] sm:$0xff] 0.0
          %447 = vst [vmem:[#allocation2 + $0xf0] sm:$0xff] 0.0
          %448 = vst [vmem:[#allocation2 + $0xf8] sm:$0xff] 0.0
          %449 = vst [vmem:[#allocation2 + $0x100] sm:$0xff] 0.0
          %450 = vst [vmem:[#allocation2 + $0x108] sm:$0xff] 0.0
          %451 = vst [vmem:[#allocation2 + $0x110] sm:$0xff] 0.0
          %452 = vst [vmem:[#allocation2 + $0x118] sm:$0xff] 0.0
          %453 = vst [vmem:[#allocation2 + $0x120] sm:$0xff] 0.0
          %454 = vst [vmem:[#allocation2 + $0x128] sm:$0xff] 0.0
          %455 = vst [vmem:[#allocation2 + $0x130] sm:$0xff] 0.0
          %456 = vst [vmem:[#allocation2 + $0x138] sm:$0xff] 0.0
          %457 = vst [vmem:[#allocation2 + $0x140] sm:$0xff] 0.0
          %458 = vst [vmem:[#allocation2 + $0x148] sm:$0xff] 0.0
          %459 = vst [vmem:[#allocation2 + $0x150] sm:$0xff] 0.0
          %460 = vst [vmem:[#allocation2 + $0x158] sm:$0xff] 0.0
          %461 = vst [vmem:[#allocation2 + $0x160] sm:$0xff] 0.0
          %462 = vst [vmem:[#allocation2 + $0x168] sm:$0xff] 0.0
          %463 = vst [vmem:[#allocation2 + $0x170] sm:$0xff] 0.0
          %464 = vst [vmem:[#allocation2 + $0x178] sm:$0xff] 0.0
          %465 = vst [vmem:[#allocation2 + $0x180] sm:$0xff] 0.0
          %466 = vst [vmem:[#allocation2 + $0x188] sm:$0xff] 0.0
          %467 = vst [vmem:[#allocation2 + $0x190] sm:$0xff] 0.0
          %468 = vst [vmem:[#allocation2 + $0x198] sm:$0xff] 0.0
          %469 = vst [vmem:[#allocation2 + $0x1a0] sm:$0xff] 0.0
          %470 = vst [vmem:[#allocation2 + $0x1a8] sm:$0xff] 0.0
          %471 = vst [vmem:[#allocation2 + $0x1b0] sm:$0xff] 0.0
          %472 = vst [vmem:[#allocation2 + $0x1b8] sm:$0xff] 0.0
          %473 = vst [vmem:[#allocation2 + $0x1c0] sm:$0xff] 0.0
          %474 = vst [vmem:[#allocation2 + $0x1c8] sm:$0xff] 0.0
          %475 = vst [vmem:[#allocation2 + $0x1d0] sm:$0xff] 0.0
          %476 = vst [vmem:[#allocation2 + $0x1d8] sm:$0xff] 0.0
          %477 = vst [vmem:[#allocation2 + $0x1e0] sm:$0xff] 0.0
          %478 = vst [vmem:[#allocation2 + $0x1e8] sm:$0xff] 0.0
          %479 = vst [vmem:[#allocation2 + $0x1f0] sm:$0xff] 0.0
          %480 = vst [vmem:[#allocation2 + $0x1f8] sm:$0xff] 0.0
        $region64: #{tpu_custom_call.1} parent=47 // pred_fallthru
          _
        %v481 = vld [vmem:[#allocation2] sm:$0xff]
        %v482 = vld [vmem:[#allocation2 + $0x8] sm:$0xff]
        %v483 = vld [vmem:[#allocation2 + $0x10] sm:$0xff]
        %v484 = vld [vmem:[#allocation2 + $0x18] sm:$0xff]
        %v485 = vld [vmem:[#allocation2 + $0x20] sm:$0xff]
        %v486 = vld [vmem:[#allocation2 + $0x28] sm:$0xff]
        %v487 = vld [vmem:[#allocation2 + $0x30] sm:$0xff]
        %v488 = vld [vmem:[#allocation2 + $0x38] sm:$0xff]
        %v489 = vld [vmem:[#allocation2 + $0x40] sm:$0xff]
        %v490 = vld [vmem:[#allocation2 + $0x48] sm:$0xff]
        %v491 = vld [vmem:[#allocation2 + $0x50] sm:$0xff]
        %v492 = vld [vmem:[#allocation2 + $0x58] sm:$0xff]
        %v493 = vld [vmem:[#allocation2 + $0x60] sm:$0xff]
        %v494 = vld [vmem:[#allocation2 + $0x68] sm:$0xff]
        %v495 = vld [vmem:[#allocation2 + $0x70] sm:$0xff]
        %v496 = vld [vmem:[#allocation2 + $0x78] sm:$0xff]
        %v497 = vld [vmem:[#allocation2 + $0x80] sm:$0xff]
        %v498 = vld [vmem:[#allocation2 + $0x88] sm:$0xff]
        %v499 = vld [vmem:[#allocation2 + $0x90] sm:$0xff]
        %v500 = vld [vmem:[#allocation2 + $0x98] sm:$0xff]
        %v501 = vld [vmem:[#allocation2 + $0xa0] sm:$0xff]
        %v502 = vld [vmem:[#allocation2 + $0xa8] sm:$0xff]
        %v503 = vld [vmem:[#allocation2 + $0xb0] sm:$0xff]
        %v504 = vld [vmem:[#allocation2 + $0xb8] sm:$0xff]
        %v505 = vld [vmem:[#allocation2 + $0xc0] sm:$0xff]
        %v506 = vld [vmem:[#allocation2 + $0xc8] sm:$0xff]
        %v507 = vld [vmem:[#allocation2 + $0xd0] sm:$0xff]
        %v508 = vld [vmem:[#allocation2 + $0xd8] sm:$0xff]
        %v509 = vld [vmem:[#allocation2 + $0xe0] sm:$0xff]
        %v510 = vld [vmem:[#allocation2 + $0xe8] sm:$0xff]
        %v511 = vld [vmem:[#allocation2 + $0xf0] sm:$0xff]
        %v512 = vld [vmem:[#allocation2 + $0xf8] sm:$0xff]
        %v513 = vld [vmem:[#allocation2 + $0x100] sm:$0xff]
        %v514 = vld [vmem:[#allocation2 + $0x108] sm:$0xff]
        %v515 = vld [vmem:[#allocation2 + $0x110] sm:$0xff]
        %v516 = vld [vmem:[#allocation2 + $0x118] sm:$0xff]
        %v517 = vld [vmem:[#allocation2 + $0x120] sm:$0xff]
        %v518 = vld [vmem:[#allocation2 + $0x128] sm:$0xff]
        %v519 = vld [vmem:[#allocation2 + $0x130] sm:$0xff]
        %v520 = vld [vmem:[#allocation2 + $0x138] sm:$0xff]
        %v521 = vld [vmem:[#allocation2 + $0x140] sm:$0xff]
        %v522 = vld [vmem:[#allocation2 + $0x148] sm:$0xff]
        %v523 = vld [vmem:[#allocation2 + $0x150] sm:$0xff]
        %v524 = vld [vmem:[#allocation2 + $0x158] sm:$0xff]
        %v525 = vld [vmem:[#allocation2 + $0x160] sm:$0xff]
        %v526 = vld [vmem:[#allocation2 + $0x168] sm:$0xff]
        %v527 = vld [vmem:[#allocation2 + $0x170] sm:$0xff]
        %v528 = vld [vmem:[#allocation2 + $0x178] sm:$0xff]
        %v529 = vld [vmem:[#allocation2 + $0x180] sm:$0xff]
        %v530 = vld [vmem:[#allocation2 + $0x188] sm:$0xff]
        %v531 = vld [vmem:[#allocation2 + $0x190] sm:$0xff]
        %v532 = vld [vmem:[#allocation2 + $0x198] sm:$0xff]
        %v533 = vld [vmem:[#allocation2 + $0x1a0] sm:$0xff]
        %v534 = vld [vmem:[#allocation2 + $0x1a8] sm:$0xff]
        %v535 = vld [vmem:[#allocation2 + $0x1b0] sm:$0xff]
        %v536 = vld [vmem:[#allocation2 + $0x1b8] sm:$0xff]
        %v537 = vld [vmem:[#allocation2 + $0x1c0] sm:$0xff]
        %v538 = vld [vmem:[#allocation2 + $0x1c8] sm:$0xff]
        %v539 = vld [vmem:[#allocation2 + $0x1d0] sm:$0xff]
        %v540 = vld [vmem:[#allocation2 + $0x1d8] sm:$0xff]
        %v541 = vld [vmem:[#allocation2 + $0x1e0] sm:$0xff]
        %v542 = vld [vmem:[#allocation2 + $0x1e8] sm:$0xff]
        %v543 = vld [vmem:[#allocation2 + $0x1f0] sm:$0xff]
        %v544 = vld [vmem:[#allocation2 + $0x1f8] sm:$0xff]
        %v545 = vld [vmem:[%s337] sm:$0xff]
        %v546 = vld [vmem:[%s337 + $0x8] sm:$0xff]
        %v547 = vld [vmem:[%s337 + $0x10] sm:$0xff]
        %v548 = vld [vmem:[%s337 + $0x18] sm:$0xff]
        %v549 = vld [vmem:[%s337 + $0x20] sm:$0xff]
        %v550 = vld [vmem:[%s337 + $0x28] sm:$0xff]
        %v551 = vld [vmem:[%s337 + $0x30] sm:$0xff]
        %v552 = vld [vmem:[%s337 + $0x38] sm:$0xff]
        %v553 = vld [vmem:[%s337 + $0x40] sm:$0xff]
        %v554 = vld [vmem:[%s337 + $0x48] sm:$0xff]
        %v555 = vld [vmem:[%s337 + $0x50] sm:$0xff]
        %v556 = vld [vmem:[%s337 + $0x58] sm:$0xff]
        %v557 = vld [vmem:[%s337 + $0x60] sm:$0xff]
        %v558 = vld [vmem:[%s337 + $0x68] sm:$0xff]
        %v559 = vld [vmem:[%s337 + $0x70] sm:$0xff]
        %v560 = vld [vmem:[%s337 + $0x78] sm:$0xff]
        %v561 = vld [vmem:[%s337 + $0x80] sm:$0xff]
        %v562 = vld [vmem:[%s337 + $0x88] sm:$0xff]
        %v563 = vld [vmem:[%s337 + $0x90] sm:$0xff]
        %v564 = vld [vmem:[%s337 + $0x98] sm:$0xff]
        %v565 = vld [vmem:[%s337 + $0xa0] sm:$0xff]
        %v566 = vld [vmem:[%s337 + $0xa8] sm:$0xff]
        %v567 = vld [vmem:[%s337 + $0xb0] sm:$0xff]
        %v568 = vld [vmem:[%s337 + $0xb8] sm:$0xff]
        %v569 = vld [vmem:[%s337 + $0xc0] sm:$0xff]
        %v570 = vld [vmem:[%s337 + $0xc8] sm:$0xff]
        %v571 = vld [vmem:[%s337 + $0xd0] sm:$0xff]
        %v572 = vld [vmem:[%s337 + $0xd8] sm:$0xff]
        %v573 = vld [vmem:[%s337 + $0xe0] sm:$0xff]
        %v574 = vld [vmem:[%s337 + $0xe8] sm:$0xff]
        %v575 = vld [vmem:[%s337 + $0xf0] sm:$0xff]
        %v576 = vld [vmem:[%s337 + $0xf8] sm:$0xff]
        %v577 = vld [vmem:[%s337 + $0x100] sm:$0xff]
        %v578 = vld [vmem:[%s337 + $0x108] sm:$0xff]
        %v579 = vld [vmem:[%s337 + $0x110] sm:$0xff]
        %v580 = vld [vmem:[%s337 + $0x118] sm:$0xff]
        %v581 = vld [vmem:[%s337 + $0x120] sm:$0xff]
        %v582 = vld [vmem:[%s337 + $0x128] sm:$0xff]
        %v583 = vld [vmem:[%s337 + $0x130] sm:$0xff]
        %v584 = vld [vmem:[%s337 + $0x138] sm:$0xff]
        %v585 = vld [vmem:[%s337 + $0x140] sm:$0xff]
        %v586 = vld [vmem:[%s337 + $0x148] sm:$0xff]
        %v587 = vld [vmem:[%s337 + $0x150] sm:$0xff]
        %v588 = vld [vmem:[%s337 + $0x158] sm:$0xff]
        %v589 = vld [vmem:[%s337 + $0x160] sm:$0xff]
        %v590 = vld [vmem:[%s337 + $0x168] sm:$0xff]
        %v591 = vld [vmem:[%s337 + $0x170] sm:$0xff]
        %v592 = vld [vmem:[%s337 + $0x178] sm:$0xff]
        %v593 = vld [vmem:[%s337 + $0x180] sm:$0xff]
        %v594 = vld [vmem:[%s337 + $0x188] sm:$0xff]
        %v595 = vld [vmem:[%s337 + $0x190] sm:$0xff]
        %v596 = vld [vmem:[%s337 + $0x198] sm:$0xff]
        %v597 = vld [vmem:[%s337 + $0x1a0] sm:$0xff]
        %v598 = vld [vmem:[%s337 + $0x1a8] sm:$0xff]
        %v599 = vld [vmem:[%s337 + $0x1b0] sm:$0xff]
        %v600 = vld [vmem:[%s337 + $0x1b8] sm:$0xff]
        %v601 = vld [vmem:[%s337 + $0x1c0] sm:$0xff]
        %v602 = vld [vmem:[%s337 + $0x1c8] sm:$0xff]
        %v603 = vld [vmem:[%s337 + $0x1d0] sm:$0xff]
        %v604 = vld [vmem:[%s337 + $0x1d8] sm:$0xff]
        %v605 = vld [vmem:[%s337 + $0x1e0] sm:$0xff]
        %v606 = vld [vmem:[%s337 + $0x1e8] sm:$0xff]
        %v607 = vld [vmem:[%s337 + $0x1f0] sm:$0xff]
        %v608 = vld [vmem:[%s337 + $0x1f8] sm:$0xff]
        %v609 = vld [vmem:[%s337 + $0x200] sm:$0xff]
        %v610 = vld [vmem:[%s337 + $0x208] sm:$0xff]
        %v611 = vld [vmem:[%s337 + $0x210] sm:$0xff]
        %v612 = vld [vmem:[%s337 + $0x218] sm:$0xff]
        %v613 = vld [vmem:[%s337 + $0x220] sm:$0xff]
        %v614 = vld [vmem:[%s337 + $0x228] sm:$0xff]
        %v615 = vld [vmem:[%s337 + $0x230] sm:$0xff]
        %v616 = vld [vmem:[%s337 + $0x238] sm:$0xff]
        %v617 = vld [vmem:[%s337 + $0x240] sm:$0xff]
        %v618 = vld [vmem:[%s337 + $0x248] sm:$0xff]
        %v619 = vld [vmem:[%s337 + $0x250] sm:$0xff]
        %v620 = vld [vmem:[%s337 + $0x258] sm:$0xff]
        %v621 = vld [vmem:[%s337 + $0x260] sm:$0xff]
        %v622 = vld [vmem:[%s337 + $0x268] sm:$0xff]
        %v623 = vld [vmem:[%s337 + $0x270] sm:$0xff]
        %v624 = vld [vmem:[%s337 + $0x278] sm:$0xff]
        %v625 = vld [vmem:[%s337 + $0x280] sm:$0xff]
        %v626 = vld [vmem:[%s337 + $0x288] sm:$0xff]
        %v627 = vld [vmem:[%s337 + $0x290] sm:$0xff]
        %v628 = vld [vmem:[%s337 + $0x298] sm:$0xff]
        %v629 = vld [vmem:[%s337 + $0x2a0] sm:$0xff]
        %v630 = vld [vmem:[%s337 + $0x2a8] sm:$0xff]
        %v631 = vld [vmem:[%s337 + $0x2b0] sm:$0xff]
        %v632 = vld [vmem:[%s337 + $0x2b8] sm:$0xff]
        %v633 = vld [vmem:[%s337 + $0x2c0] sm:$0xff]
        %v634 = vld [vmem:[%s337 + $0x2c8] sm:$0xff]
        %v635 = vld [vmem:[%s337 + $0x2d0] sm:$0xff]
        %v636 = vld [vmem:[%s337 + $0x2d8] sm:$0xff]
        %v637 = vld [vmem:[%s337 + $0x2e0] sm:$0xff]
        %v638 = vld [vmem:[%s337 + $0x2e8] sm:$0xff]
        %v639 = vld [vmem:[%s337 + $0x2f0] sm:$0xff]
        %v640 = vld [vmem:[%s337 + $0x2f8] sm:$0xff]
        %v641 = vld [vmem:[%s337 + $0x300] sm:$0xff]
        %v642 = vld [vmem:[%s337 + $0x308] sm:$0xff]
        %v643 = vld [vmem:[%s337 + $0x310] sm:$0xff]
        %v644 = vld [vmem:[%s337 + $0x318] sm:$0xff]
        %v645 = vld [vmem:[%s337 + $0x320] sm:$0xff]
        %v646 = vld [vmem:[%s337 + $0x328] sm:$0xff]
        %v647 = vld [vmem:[%s337 + $0x330] sm:$0xff]
        %v648 = vld [vmem:[%s337 + $0x338] sm:$0xff]
        %v649 = vld [vmem:[%s337 + $0x340] sm:$0xff]
        %v650 = vld [vmem:[%s337 + $0x348] sm:$0xff]
        %v651 = vld [vmem:[%s337 + $0x350] sm:$0xff]
        %v652 = vld [vmem:[%s337 + $0x358] sm:$0xff]
        %v653 = vld [vmem:[%s337 + $0x360] sm:$0xff]
        %v654 = vld [vmem:[%s337 + $0x368] sm:$0xff]
        %v655 = vld [vmem:[%s337 + $0x370] sm:$0xff]
        %v656 = vld [vmem:[%s337 + $0x378] sm:$0xff]
        %v657 = vld [vmem:[%s337 + $0x380] sm:$0xff]
        %v658 = vld [vmem:[%s337 + $0x388] sm:$0xff]
        %v659 = vld [vmem:[%s337 + $0x390] sm:$0xff]
        %v660 = vld [vmem:[%s337 + $0x398] sm:$0xff]
        %v661 = vld [vmem:[%s337 + $0x3a0] sm:$0xff]
        %v662 = vld [vmem:[%s337 + $0x3a8] sm:$0xff]
        %v663 = vld [vmem:[%s337 + $0x3b0] sm:$0xff]
        %v664 = vld [vmem:[%s337 + $0x3b8] sm:$0xff]
        %v665 = vld [vmem:[%s337 + $0x3c0] sm:$0xff]
        %v666 = vld [vmem:[%s337 + $0x3c8] sm:$0xff]
        %v667 = vld [vmem:[%s337 + $0x3d0] sm:$0xff]
        %v668 = vld [vmem:[%s337 + $0x3d8] sm:$0xff]
        %v669 = vld [vmem:[%s337 + $0x3e0] sm:$0xff]
        %v670 = vld [vmem:[%s337 + $0x3e8] sm:$0xff]
        %v671 = vld [vmem:[%s337 + $0x3f0] sm:$0xff]
        %v672 = vld [vmem:[%s337 + $0x3f8] sm:$0xff]
        %v673 = vunpack.c.l.s8.bf16 %v545
        %v674 = vunpack.c.l.s8.bf16 %v546
        %v675 = vunpack.c.l.s8.bf16 %v547
        %v676 = vunpack.c.l.s8.bf16 %v548
        %v677 = vunpack.c.l.s8.bf16 %v549
        %v678 = vunpack.c.l.s8.bf16 %v550
        %v679 = vunpack.c.l.s8.bf16 %v551
        %v680 = vunpack.c.l.s8.bf16 %v552
        %v681 = vunpack.c.h.s8.bf16 %v545
        %v682 = vunpack.c.h.s8.bf16 %v546
        %v683 = vunpack.c.h.s8.bf16 %v547
        %v684 = vunpack.c.h.s8.bf16 %v548
        %v685 = vunpack.c.h.s8.bf16 %v549
        %v686 = vunpack.c.h.s8.bf16 %v550
        %v687 = vunpack.c.h.s8.bf16 %v551
        %v688 = vunpack.c.h.s8.bf16 %v552
        %v689 = vunpack.c.l.s8.bf16 %v553
        %v690 = vunpack.c.l.s8.bf16 %v554
        %v691 = vunpack.c.l.s8.bf16 %v555
        %v692 = vunpack.c.l.s8.bf16 %v556
        %v693 = vunpack.c.l.s8.bf16 %v557
        %v694 = vunpack.c.l.s8.bf16 %v558
        %v695 = vunpack.c.l.s8.bf16 %v559
        %v696 = vunpack.c.l.s8.bf16 %v560
        %v697 = vunpack.c.h.s8.bf16 %v553
        %v698 = vunpack.c.h.s8.bf16 %v554
        %v699 = vunpack.c.h.s8.bf16 %v555
        %v700 = vunpack.c.h.s8.bf16 %v556
        %v701 = vunpack.c.h.s8.bf16 %v557
        %v702 = vunpack.c.h.s8.bf16 %v558
        %v703 = vunpack.c.h.s8.bf16 %v559
        %v704 = vunpack.c.h.s8.bf16 %v560
        %v705 = vunpack.c.l.s8.bf16 %v561
        %v706 = vunpack.c.l.s8.bf16 %v562
        %v707 = vunpack.c.l.s8.bf16 %v563
        %v708 = vunpack.c.l.s8.bf16 %v564
        %v709 = vunpack.c.l.s8.bf16 %v565
        %v710 = vunpack.c.l.s8.bf16 %v566
        %v711 = vunpack.c.l.s8.bf16 %v567
        %v712 = vunpack.c.l.s8.bf16 %v568
        %v713 = vunpack.c.h.s8.bf16 %v561
        %v714 = vunpack.c.h.s8.bf16 %v562
        %v715 = vunpack.c.h.s8.bf16 %v563
        %v716 = vunpack.c.h.s8.bf16 %v564
        %v717 = vunpack.c.h.s8.bf16 %v565
        %v718 = vunpack.c.h.s8.bf16 %v566
        %v719 = vunpack.c.h.s8.bf16 %v567
        %v720 = vunpack.c.h.s8.bf16 %v568
        %v721 = vunpack.c.l.s8.bf16 %v569
        %v722 = vunpack.c.l.s8.bf16 %v570
        %v723 = vunpack.c.l.s8.bf16 %v571
        %v724 = vunpack.c.l.s8.bf16 %v572
        %v725 = vunpack.c.l.s8.bf16 %v573
        %v726 = vunpack.c.l.s8.bf16 %v574
        %v727 = vunpack.c.l.s8.bf16 %v575
        %v728 = vunpack.c.l.s8.bf16 %v576
        %v729 = vunpack.c.h.s8.bf16 %v569
        %v730 = vunpack.c.h.s8.bf16 %v570
        %v731 = vunpack.c.h.s8.bf16 %v571
        %v732 = vunpack.c.h.s8.bf16 %v572
        %v733 = vunpack.c.h.s8.bf16 %v573
        %v734 = vunpack.c.h.s8.bf16 %v574
        %v735 = vunpack.c.h.s8.bf16 %v575
        %v736 = vunpack.c.h.s8.bf16 %v576
        %v737 = vunpack.c.l.s8.bf16 %v577
        %v738 = vunpack.c.l.s8.bf16 %v578
        %v739 = vunpack.c.l.s8.bf16 %v579
        %v740 = vunpack.c.l.s8.bf16 %v580
        %v741 = vunpack.c.l.s8.bf16 %v581
        %v742 = vunpack.c.l.s8.bf16 %v582
        %v743 = vunpack.c.l.s8.bf16 %v583
        %v744 = vunpack.c.l.s8.bf16 %v584
        %v745 = vunpack.c.h.s8.bf16 %v577
        %v746 = vunpack.c.h.s8.bf16 %v578
        %v747 = vunpack.c.h.s8.bf16 %v579
        %v748 = vunpack.c.h.s8.bf16 %v580
        %v749 = vunpack.c.h.s8.bf16 %v581
        %v750 = vunpack.c.h.s8.bf16 %v582
        %v751 = vunpack.c.h.s8.bf16 %v583
        %v752 = vunpack.c.h.s8.bf16 %v584
        %v753 = vunpack.c.l.s8.bf16 %v585
        %v754 = vunpack.c.l.s8.bf16 %v586
        %v755 = vunpack.c.l.s8.bf16 %v587
        %v756 = vunpack.c.l.s8.bf16 %v588
        %v757 = vunpack.c.l.s8.bf16 %v589
        %v758 = vunpack.c.l.s8.bf16 %v590
        %v759 = vunpack.c.l.s8.bf16 %v591
        %v760 = vunpack.c.l.s8.bf16 %v592
        %v761 = vunpack.c.h.s8.bf16 %v585
        %v762 = vunpack.c.h.s8.bf16 %v586
        %v763 = vunpack.c.h.s8.bf16 %v587
        %v764 = vunpack.c.h.s8.bf16 %v588
        %v765 = vunpack.c.h.s8.bf16 %v589
        %v766 = vunpack.c.h.s8.bf16 %v590
        %v767 = vunpack.c.h.s8.bf16 %v591
        %v768 = vunpack.c.h.s8.bf16 %v592
        %v769 = vunpack.c.l.s8.bf16 %v593
        %v770 = vunpack.c.l.s8.bf16 %v594
        %v771 = vunpack.c.l.s8.bf16 %v595
        %v772 = vunpack.c.l.s8.bf16 %v596
        %v773 = vunpack.c.l.s8.bf16 %v597
        %v774 = vunpack.c.l.s8.bf16 %v598
        %v775 = vunpack.c.l.s8.bf16 %v599
        %v776 = vunpack.c.l.s8.bf16 %v600
        %v777 = vunpack.c.h.s8.bf16 %v593
        %v778 = vunpack.c.h.s8.bf16 %v594
        %v779 = vunpack.c.h.s8.bf16 %v595
        %v780 = vunpack.c.h.s8.bf16 %v596
        %v781 = vunpack.c.h.s8.bf16 %v597
        %v782 = vunpack.c.h.s8.bf16 %v598
        %v783 = vunpack.c.h.s8.bf16 %v599
        %v784 = vunpack.c.h.s8.bf16 %v600
        %v785 = vunpack.c.l.s8.bf16 %v601
        %v786 = vunpack.c.l.s8.bf16 %v602
        %v787 = vunpack.c.l.s8.bf16 %v603
        %v788 = vunpack.c.l.s8.bf16 %v604
        %v789 = vunpack.c.l.s8.bf16 %v605
        %v790 = vunpack.c.l.s8.bf16 %v606
        %v791 = vunpack.c.l.s8.bf16 %v607
        %v792 = vunpack.c.l.s8.bf16 %v608
        %v793 = vunpack.c.h.s8.bf16 %v601
        %v794 = vunpack.c.h.s8.bf16 %v602
        %v795 = vunpack.c.h.s8.bf16 %v603
        %v796 = vunpack.c.h.s8.bf16 %v604
        %v797 = vunpack.c.h.s8.bf16 %v605
        %v798 = vunpack.c.h.s8.bf16 %v606
        %v799 = vunpack.c.h.s8.bf16 %v607
        %v800 = vunpack.c.h.s8.bf16 %v608
        %v801 = vunpack.c.l.s8.bf16 %v609
        %v802 = vunpack.c.l.s8.bf16 %v610
        %v803 = vunpack.c.l.s8.bf16 %v611
        %v804 = vunpack.c.l.s8.bf16 %v612
        %v805 = vunpack.c.l.s8.bf16 %v613
        %v806 = vunpack.c.l.s8.bf16 %v614
        %v807 = vunpack.c.l.s8.bf16 %v615
        %v808 = vunpack.c.l.s8.bf16 %v616
        %v809 = vunpack.c.h.s8.bf16 %v609
        %v810 = vunpack.c.h.s8.bf16 %v610
        %v811 = vunpack.c.h.s8.bf16 %v611
        %v812 = vunpack.c.h.s8.bf16 %v612
        %v813 = vunpack.c.h.s8.bf16 %v613
        %v814 = vunpack.c.h.s8.bf16 %v614
        %v815 = vunpack.c.h.s8.bf16 %v615
        %v816 = vunpack.c.h.s8.bf16 %v616
        %v817 = vunpack.c.l.s8.bf16 %v617
        %v818 = vunpack.c.l.s8.bf16 %v618
        %v819 = vunpack.c.l.s8.bf16 %v619
        %v820 = vunpack.c.l.s8.bf16 %v620
        %v821 = vunpack.c.l.s8.bf16 %v621
        %v822 = vunpack.c.l.s8.bf16 %v622
        %v823 = vunpack.c.l.s8.bf16 %v623
        %v824 = vunpack.c.l.s8.bf16 %v624
        %v825 = vunpack.c.h.s8.bf16 %v617
        %v826 = vunpack.c.h.s8.bf16 %v618
        %v827 = vunpack.c.h.s8.bf16 %v619
        %v828 = vunpack.c.h.s8.bf16 %v620
        %v829 = vunpack.c.h.s8.bf16 %v621
        %v830 = vunpack.c.h.s8.bf16 %v622
        %v831 = vunpack.c.h.s8.bf16 %v623
        %v832 = vunpack.c.h.s8.bf16 %v624
        %v833 = vunpack.c.l.s8.bf16 %v625
        %v834 = vunpack.c.l.s8.bf16 %v626
        %v835 = vunpack.c.l.s8.bf16 %v627
        %v836 = vunpack.c.l.s8.bf16 %v628
        %v837 = vunpack.c.l.s8.bf16 %v629
        %v838 = vunpack.c.l.s8.bf16 %v630
        %v839 = vunpack.c.l.s8.bf16 %v631
        %v840 = vunpack.c.l.s8.bf16 %v632
        %v841 = vunpack.c.h.s8.bf16 %v625
        %v842 = vunpack.c.h.s8.bf16 %v626
        %v843 = vunpack.c.h.s8.bf16 %v627
        %v844 = vunpack.c.h.s8.bf16 %v628
        %v845 = vunpack.c.h.s8.bf16 %v629
        %v846 = vunpack.c.h.s8.bf16 %v630
        %v847 = vunpack.c.h.s8.bf16 %v631
        %v848 = vunpack.c.h.s8.bf16 %v632
        %v849 = vunpack.c.l.s8.bf16 %v633
        %v850 = vunpack.c.l.s8.bf16 %v634
        %v851 = vunpack.c.l.s8.bf16 %v635
        %v852 = vunpack.c.l.s8.bf16 %v636
        %v853 = vunpack.c.l.s8.bf16 %v637
        %v854 = vunpack.c.l.s8.bf16 %v638
        %v855 = vunpack.c.l.s8.bf16 %v639
        %v856 = vunpack.c.l.s8.bf16 %v640
        %v857 = vunpack.c.h.s8.bf16 %v633
        %v858 = vunpack.c.h.s8.bf16 %v634
        %v859 = vunpack.c.h.s8.bf16 %v635
        %v860 = vunpack.c.h.s8.bf16 %v636
        %v861 = vunpack.c.h.s8.bf16 %v637
        %v862 = vunpack.c.h.s8.bf16 %v638
        %v863 = vunpack.c.h.s8.bf16 %v639
        %v864 = vunpack.c.h.s8.bf16 %v640
        %v865 = vunpack.c.l.s8.bf16 %v641
        %v866 = vunpack.c.l.s8.bf16 %v642
        %v867 = vunpack.c.l.s8.bf16 %v643
        %v868 = vunpack.c.l.s8.bf16 %v644
        %v869 = vunpack.c.l.s8.bf16 %v645
        %v870 = vunpack.c.l.s8.bf16 %v646
        %v871 = vunpack.c.l.s8.bf16 %v647
        %v872 = vunpack.c.l.s8.bf16 %v648
        %v873 = vunpack.c.h.s8.bf16 %v641
        %v874 = vunpack.c.h.s8.bf16 %v642
        %v875 = vunpack.c.h.s8.bf16 %v643
        %v876 = vunpack.c.h.s8.bf16 %v644
        %v877 = vunpack.c.h.s8.bf16 %v645
        %v878 = vunpack.c.h.s8.bf16 %v646
        %v879 = vunpack.c.h.s8.bf16 %v647
        %v880 = vunpack.c.h.s8.bf16 %v648
        %v881 = vunpack.c.l.s8.bf16 %v649
        %v882 = vunpack.c.l.s8.bf16 %v650
        %v883 = vunpack.c.l.s8.bf16 %v651
        %v884 = vunpack.c.l.s8.bf16 %v652
        %v885 = vunpack.c.l.s8.bf16 %v653
        %v886 = vunpack.c.l.s8.bf16 %v654
        %v887 = vunpack.c.l.s8.bf16 %v655
        %v888 = vunpack.c.l.s8.bf16 %v656
        %v889 = vunpack.c.h.s8.bf16 %v649
        %v890 = vunpack.c.h.s8.bf16 %v650
        %v891 = vunpack.c.h.s8.bf16 %v651
        %v892 = vunpack.c.h.s8.bf16 %v652
        %v893 = vunpack.c.h.s8.bf16 %v653
        %v894 = vunpack.c.h.s8.bf16 %v654
        %v895 = vunpack.c.h.s8.bf16 %v655
        %v896 = vunpack.c.h.s8.bf16 %v656
        %v897 = vunpack.c.l.s8.bf16 %v657
        %v898 = vunpack.c.l.s8.bf16 %v658
        %v899 = vunpack.c.l.s8.bf16 %v659
        %v900 = vunpack.c.l.s8.bf16 %v660
        %v901 = vunpack.c.l.s8.bf16 %v661
        %v902 = vunpack.c.l.s8.bf16 %v662
        %v903 = vunpack.c.l.s8.bf16 %v663
        %v904 = vunpack.c.l.s8.bf16 %v664
        %v905 = vunpack.c.h.s8.bf16 %v657
        %v906 = vunpack.c.h.s8.bf16 %v658
        %v907 = vunpack.c.h.s8.bf16 %v659
        %v908 = vunpack.c.h.s8.bf16 %v660
        %v909 = vunpack.c.h.s8.bf16 %v661
        %v910 = vunpack.c.h.s8.bf16 %v662
        %v911 = vunpack.c.h.s8.bf16 %v663
        %v912 = vunpack.c.h.s8.bf16 %v664
        %v913 = vunpack.c.l.s8.bf16 %v665
        %v914 = vunpack.c.l.s8.bf16 %v666
        %v915 = vunpack.c.l.s8.bf16 %v667
        %v916 = vunpack.c.l.s8.bf16 %v668
        %v917 = vunpack.c.l.s8.bf16 %v669
        %v918 = vunpack.c.l.s8.bf16 %v670
        %v919 = vunpack.c.l.s8.bf16 %v671
        %v920 = vunpack.c.l.s8.bf16 %v672
        %v921 = vunpack.c.h.s8.bf16 %v665
        %v922 = vunpack.c.h.s8.bf16 %v666
        %v923 = vunpack.c.h.s8.bf16 %v667
        %v924 = vunpack.c.h.s8.bf16 %v668
        %v925 = vunpack.c.h.s8.bf16 %v669
        %v926 = vunpack.c.h.s8.bf16 %v670
        %v927 = vunpack.c.h.s8.bf16 %v671
        %v928 = vunpack.c.h.s8.bf16 %v672
        %v929 = vld [vmem:[%s397] sm:$0xf]
        %v930 = vld [vmem:[%s397 + $0x4] sm:$0xf]
        %v931 = vld [vmem:[%s397 + $0x8] sm:$0xf]
        %v932 = vld [vmem:[%s397 + $0xc] sm:$0xf]
        %v933 = vld [vmem:[%s397 + $0x10] sm:$0xf]
        %v934 = vld [vmem:[%s397 + $0x14] sm:$0xf]
        %v935 = vld [vmem:[%s397 + $0x18] sm:$0xf]
        %v936 = vld [vmem:[%s397 + $0x1c] sm:$0xf]
        %v937 = vld [vmem:[%s397 + $0x20] sm:$0xf]
        %v938 = vld [vmem:[%s397 + $0x24] sm:$0xf]
        %v939 = vld [vmem:[%s397 + $0x28] sm:$0xf]
        %v940 = vld [vmem:[%s397 + $0x2c] sm:$0xf]
        %v941 = vld [vmem:[%s397 + $0x30] sm:$0xf]
        %v942 = vld [vmem:[%s397 + $0x34] sm:$0xf]
        %v943 = vld [vmem:[%s397 + $0x38] sm:$0xf]
        %v944 = vld [vmem:[%s397 + $0x3c] sm:$0xf]
        %v945 = vld [vmem:[%s397 + $0x40] sm:$0xf]
        %v946 = vld [vmem:[%s397 + $0x44] sm:$0xf]
        %v947 = vld [vmem:[%s397 + $0x48] sm:$0xf]
        %v948 = vld [vmem:[%s397 + $0x4c] sm:$0xf]
        %v949 = vld [vmem:[%s397 + $0x50] sm:$0xf]
        %v950 = vld [vmem:[%s397 + $0x54] sm:$0xf]
        %v951 = vld [vmem:[%s397 + $0x58] sm:$0xf]
        %v952 = vld [vmem:[%s397 + $0x5c] sm:$0xf]
        %v953 = vld [vmem:[%s397 + $0x60] sm:$0xf]
        %v954 = vld [vmem:[%s397 + $0x64] sm:$0xf]
        %v955 = vld [vmem:[%s397 + $0x68] sm:$0xf]
        %v956 = vld [vmem:[%s397 + $0x6c] sm:$0xf]
        %v957 = vld [vmem:[%s397 + $0x70] sm:$0xf]
        %v958 = vld [vmem:[%s397 + $0x74] sm:$0xf]
        %v959 = vld [vmem:[%s397 + $0x78] sm:$0xf]
        %v960 = vld [vmem:[%s397 + $0x7c] sm:$0xf]
        %v961 = vld [vmem:[%s397 + $0x80] sm:$0xf]
        %v962 = vld [vmem:[%s397 + $0x84] sm:$0xf]
        %v963 = vld [vmem:[%s397 + $0x88] sm:$0xf]
        %v964 = vld [vmem:[%s397 + $0x8c] sm:$0xf]
        %v965 = vld [vmem:[%s397 + $0x90] sm:$0xf]
        %v966 = vld [vmem:[%s397 + $0x94] sm:$0xf]
        %v967 = vld [vmem:[%s397 + $0x98] sm:$0xf]
        %v968 = vld [vmem:[%s397 + $0x9c] sm:$0xf]
        %v969 = vld [vmem:[%s397 + $0xa0] sm:$0xf]
        %v970 = vld [vmem:[%s397 + $0xa4] sm:$0xf]
        %v971 = vld [vmem:[%s397 + $0xa8] sm:$0xf]
        %v972 = vld [vmem:[%s397 + $0xac] sm:$0xf]
        %v973 = vld [vmem:[%s397 + $0xb0] sm:$0xf]
        %v974 = vld [vmem:[%s397 + $0xb4] sm:$0xf]
        %v975 = vld [vmem:[%s397 + $0xb8] sm:$0xf]
        %v976 = vld [vmem:[%s397 + $0xbc] sm:$0xf]
        %v977 = vld [vmem:[%s397 + $0xc0] sm:$0xf]
        %v978 = vld [vmem:[%s397 + $0xc4] sm:$0xf]
        %v979 = vld [vmem:[%s397 + $0xc8] sm:$0xf]
        %v980 = vld [vmem:[%s397 + $0xcc] sm:$0xf]
        %v981 = vld [vmem:[%s397 + $0xd0] sm:$0xf]
        %v982 = vld [vmem:[%s397 + $0xd4] sm:$0xf]
        %v983 = vld [vmem:[%s397 + $0xd8] sm:$0xf]
        %v984 = vld [vmem:[%s397 + $0xdc] sm:$0xf]
        %v985 = vld [vmem:[%s397 + $0xe0] sm:$0xf]
        %v986 = vld [vmem:[%s397 + $0xe4] sm:$0xf]
        %v987 = vld [vmem:[%s397 + $0xe8] sm:$0xf]
        %v988 = vld [vmem:[%s397 + $0xec] sm:$0xf]
        %v989 = vld [vmem:[%s397 + $0xf0] sm:$0xf]
        %v990 = vld [vmem:[%s397 + $0xf4] sm:$0xf]
        %v991 = vld [vmem:[%s397 + $0xf8] sm:$0xf]
        %v992 = vld [vmem:[%s397 + $0xfc] sm:$0xf]
        %v993 = vld [vmem:[%s397 + $0x100] sm:$0xf]
        %v994 = vld [vmem:[%s397 + $0x104] sm:$0xf]
        %v995 = vld [vmem:[%s397 + $0x108] sm:$0xf]
        %v996 = vld [vmem:[%s397 + $0x10c] sm:$0xf]
        %v997 = vld [vmem:[%s397 + $0x110] sm:$0xf]
        %v998 = vld [vmem:[%s397 + $0x114] sm:$0xf]
        %v999 = vld [vmem:[%s397 + $0x118] sm:$0xf]
        %v1000 = vld [vmem:[%s397 + $0x11c] sm:$0xf]
        %v1001 = vld [vmem:[%s397 + $0x120] sm:$0xf]
        %v1002 = vld [vmem:[%s397 + $0x124] sm:$0xf]
        %v1003 = vld [vmem:[%s397 + $0x128] sm:$0xf]
        %v1004 = vld [vmem:[%s397 + $0x12c] sm:$0xf]
        %v1005 = vld [vmem:[%s397 + $0x130] sm:$0xf]
        %v1006 = vld [vmem:[%s397 + $0x134] sm:$0xf]
        %v1007 = vld [vmem:[%s397 + $0x138] sm:$0xf]
        %v1008 = vld [vmem:[%s397 + $0x13c] sm:$0xf]
        %v1009 = vld [vmem:[%s397 + $0x140] sm:$0xf]
        %v1010 = vld [vmem:[%s397 + $0x144] sm:$0xf]
        %v1011 = vld [vmem:[%s397 + $0x148] sm:$0xf]
        %v1012 = vld [vmem:[%s397 + $0x14c] sm:$0xf]
        %v1013 = vld [vmem:[%s397 + $0x150] sm:$0xf]
        %v1014 = vld [vmem:[%s397 + $0x154] sm:$0xf]
        %v1015 = vld [vmem:[%s397 + $0x158] sm:$0xf]
        %v1016 = vld [vmem:[%s397 + $0x15c] sm:$0xf]
        %v1017 = vld [vmem:[%s397 + $0x160] sm:$0xf]
        %v1018 = vld [vmem:[%s397 + $0x164] sm:$0xf]
        %v1019 = vld [vmem:[%s397 + $0x168] sm:$0xf]
        %v1020 = vld [vmem:[%s397 + $0x16c] sm:$0xf]
        %v1021 = vld [vmem:[%s397 + $0x170] sm:$0xf]
        %v1022 = vld [vmem:[%s397 + $0x174] sm:$0xf]
        %v1023 = vld [vmem:[%s397 + $0x178] sm:$0xf]
        %v1024 = vld [vmem:[%s397 + $0x17c] sm:$0xf]
        %v1025 = vld [vmem:[%s397 + $0x180] sm:$0xf]
        %v1026 = vld [vmem:[%s397 + $0x184] sm:$0xf]
        %v1027 = vld [vmem:[%s397 + $0x188] sm:$0xf]
        %v1028 = vld [vmem:[%s397 + $0x18c] sm:$0xf]
        %v1029 = vld [vmem:[%s397 + $0x190] sm:$0xf]
        %v1030 = vld [vmem:[%s397 + $0x194] sm:$0xf]
        %v1031 = vld [vmem:[%s397 + $0x198] sm:$0xf]
        %v1032 = vld [vmem:[%s397 + $0x19c] sm:$0xf]
        %v1033 = vld [vmem:[%s397 + $0x1a0] sm:$0xf]
        %v1034 = vld [vmem:[%s397 + $0x1a4] sm:$0xf]
        %v1035 = vld [vmem:[%s397 + $0x1a8] sm:$0xf]
        %v1036 = vld [vmem:[%s397 + $0x1ac] sm:$0xf]
        %v1037 = vld [vmem:[%s397 + $0x1b0] sm:$0xf]
        %v1038 = vld [vmem:[%s397 + $0x1b4] sm:$0xf]
        %v1039 = vld [vmem:[%s397 + $0x1b8] sm:$0xf]
        %v1040 = vld [vmem:[%s397 + $0x1bc] sm:$0xf]
        %v1041 = vld [vmem:[%s397 + $0x1c0] sm:$0xf]
        %v1042 = vld [vmem:[%s397 + $0x1c4] sm:$0xf]
        %v1043 = vld [vmem:[%s397 + $0x1c8] sm:$0xf]
        %v1044 = vld [vmem:[%s397 + $0x1cc] sm:$0xf]
        %v1045 = vld [vmem:[%s397 + $0x1d0] sm:$0xf]
        %v1046 = vld [vmem:[%s397 + $0x1d4] sm:$0xf]
        %v1047 = vld [vmem:[%s397 + $0x1d8] sm:$0xf]
        %v1048 = vld [vmem:[%s397 + $0x1dc] sm:$0xf]
        %v1049 = vld [vmem:[%s397 + $0x1e0] sm:$0xf]
        %v1050 = vld [vmem:[%s397 + $0x1e4] sm:$0xf]
        %v1051 = vld [vmem:[%s397 + $0x1e8] sm:$0xf]
        %v1052 = vld [vmem:[%s397 + $0x1ec] sm:$0xf]
        %v1053 = vld [vmem:[%s397 + $0x1f0] sm:$0xf]
        %v1054 = vld [vmem:[%s397 + $0x1f4] sm:$0xf]
        %v1055 = vld [vmem:[%s397 + $0x1f8] sm:$0xf]
        %v1056 = vld [vmem:[%s397 + $0x1fc] sm:$0xf]
        %v1185 = vunpack.c.l.b16 %v929
        %v1186 = vunpack.c.l.b16 %v930
        %v1187 = vunpack.c.l.b16 %v931
        %v1188 = vunpack.c.l.b16 %v932
        %v1189 = vunpack.c.l.b16 %v933
        %v1190 = vunpack.c.l.b16 %v934
        %v1191 = vunpack.c.l.b16 %v935
        %v1192 = vunpack.c.l.b16 %v936
        %v1193 = vunpack.c.l.b16 %v937
        %v1194 = vunpack.c.l.b16 %v938
        %v1195 = vunpack.c.l.b16 %v939
        %v1196 = vunpack.c.l.b16 %v940
        %v1197 = vunpack.c.l.b16 %v941
        %v1198 = vunpack.c.l.b16 %v942
        %v1199 = vunpack.c.l.b16 %v943
        %v1200 = vunpack.c.l.b16 %v944
        %v1201 = vunpack.c.l.b16 %v945
        %v1202 = vunpack.c.l.b16 %v946
        %v1203 = vunpack.c.l.b16 %v947
        %v1204 = vunpack.c.l.b16 %v948
        %v1205 = vunpack.c.l.b16 %v949
        %v1206 = vunpack.c.l.b16 %v950
        %v1207 = vunpack.c.l.b16 %v951
        %v1208 = vunpack.c.l.b16 %v952
        %v1209 = vunpack.c.l.b16 %v953
        %v1210 = vunpack.c.l.b16 %v954
        %v1211 = vunpack.c.l.b16 %v955
        %v1212 = vunpack.c.l.b16 %v956
        %v1213 = vunpack.c.l.b16 %v957
        %v1214 = vunpack.c.l.b16 %v958
        %v1215 = vunpack.c.l.b16 %v959
        %v1216 = vunpack.c.l.b16 %v960
        %v1217 = vunpack.c.l.b16 %v961
        %v1218 = vunpack.c.l.b16 %v962
        %v1219 = vunpack.c.l.b16 %v963
        %v1220 = vunpack.c.l.b16 %v964
        %v1221 = vunpack.c.l.b16 %v965
        %v1222 = vunpack.c.l.b16 %v966
        %v1223 = vunpack.c.l.b16 %v967
        %v1224 = vunpack.c.l.b16 %v968
        %v1225 = vunpack.c.l.b16 %v969
        %v1226 = vunpack.c.l.b16 %v970
        %v1227 = vunpack.c.l.b16 %v971
        %v1228 = vunpack.c.l.b16 %v972
        %v1229 = vunpack.c.l.b16 %v973
        %v1230 = vunpack.c.l.b16 %v974
        %v1231 = vunpack.c.l.b16 %v975
        %v1232 = vunpack.c.l.b16 %v976
        %v1233 = vunpack.c.l.b16 %v977
        %v1234 = vunpack.c.l.b16 %v978
        %v1235 = vunpack.c.l.b16 %v979
        %v1236 = vunpack.c.l.b16 %v980
        %v1237 = vunpack.c.l.b16 %v981
        %v1238 = vunpack.c.l.b16 %v982
        %v1239 = vunpack.c.l.b16 %v983
        %v1240 = vunpack.c.l.b16 %v984
        %v1241 = vunpack.c.l.b16 %v985
        %v1242 = vunpack.c.l.b16 %v986
        %v1243 = vunpack.c.l.b16 %v987
        %v1244 = vunpack.c.l.b16 %v988
        %v1245 = vunpack.c.l.b16 %v989
        %v1246 = vunpack.c.l.b16 %v990
        %v1247 = vunpack.c.l.b16 %v991
        %v1248 = vunpack.c.l.b16 %v992
        %v1249 = vunpack.c.l.b16 %v993
        %v1250 = vunpack.c.l.b16 %v994
        %v1251 = vunpack.c.l.b16 %v995
        %v1252 = vunpack.c.l.b16 %v996
        %v1253 = vunpack.c.l.b16 %v997
        %v1254 = vunpack.c.l.b16 %v998
        %v1255 = vunpack.c.l.b16 %v999
        %v1256 = vunpack.c.l.b16 %v1000
        %v1257 = vunpack.c.l.b16 %v1001
        %v1258 = vunpack.c.l.b16 %v1002
        %v1259 = vunpack.c.l.b16 %v1003
        %v1260 = vunpack.c.l.b16 %v1004
        %v1261 = vunpack.c.l.b16 %v1005
        %v1262 = vunpack.c.l.b16 %v1006
        %v1263 = vunpack.c.l.b16 %v1007
        %v1264 = vunpack.c.l.b16 %v1008
        %v1265 = vunpack.c.l.b16 %v1009
        %v1266 = vunpack.c.l.b16 %v1010
        %v1267 = vunpack.c.l.b16 %v1011
        %v1268 = vunpack.c.l.b16 %v1012
        %v1269 = vunpack.c.l.b16 %v1013
        %v1270 = vunpack.c.l.b16 %v1014
        %v1271 = vunpack.c.l.b16 %v1015
        %v1272 = vunpack.c.l.b16 %v1016
        %v1273 = vunpack.c.l.b16 %v1017
        %v1274 = vunpack.c.l.b16 %v1018
        %v1275 = vunpack.c.l.b16 %v1019
        %v1276 = vunpack.c.l.b16 %v1020
        %v1277 = vunpack.c.l.b16 %v1021
        %v1278 = vunpack.c.l.b16 %v1022
        %v1279 = vunpack.c.l.b16 %v1023
        %v1280 = vunpack.c.l.b16 %v1024
        %v1281 = vunpack.c.l.b16 %v1025
        %v1282 = vunpack.c.l.b16 %v1026
        %v1283 = vunpack.c.l.b16 %v1027
        %v1284 = vunpack.c.l.b16 %v1028
        %v1285 = vunpack.c.l.b16 %v1029
        %v1286 = vunpack.c.l.b16 %v1030
        %v1287 = vunpack.c.l.b16 %v1031
        %v1288 = vunpack.c.l.b16 %v1032
        %v1289 = vunpack.c.l.b16 %v1033
        %v1290 = vunpack.c.l.b16 %v1034
        %v1291 = vunpack.c.l.b16 %v1035
        %v1292 = vunpack.c.l.b16 %v1036
        %v1293 = vunpack.c.l.b16 %v1037
        %v1294 = vunpack.c.l.b16 %v1038
        %v1295 = vunpack.c.l.b16 %v1039
        %v1296 = vunpack.c.l.b16 %v1040
        %v1297 = vunpack.c.l.b16 %v1041
        %v1298 = vunpack.c.l.b16 %v1042
        %v1299 = vunpack.c.l.b16 %v1043
        %v1300 = vunpack.c.l.b16 %v1044
        %v1301 = vunpack.c.l.b16 %v1045
        %v1302 = vunpack.c.l.b16 %v1046
        %v1303 = vunpack.c.l.b16 %v1047
        %v1304 = vunpack.c.l.b16 %v1048
        %v1305 = vunpack.c.l.b16 %v1049
        %v1306 = vunpack.c.l.b16 %v1050
        %v1307 = vunpack.c.l.b16 %v1051
        %v1308 = vunpack.c.l.b16 %v1052
        %v1309 = vunpack.c.l.b16 %v1053
        %v1310 = vunpack.c.l.b16 %v1054
        %v1311 = vunpack.c.l.b16 %v1055
        %v1312 = vunpack.c.l.b16 %v1056
        %v1313 = vpack.c.b16 %v1186, %v1185
        %v1314 = vpack.c.b16 %v1188, %v1187
        %v1315 = vpack.c.b16 %v1190, %v1189
        %v1316 = vpack.c.b16 %v1192, %v1191
        %v1317 = vpack.c.b16 %v1194, %v1193
        %v1318 = vpack.c.b16 %v1196, %v1195
        %v1319 = vpack.c.b16 %v1198, %v1197
        %v1320 = vpack.c.b16 %v1200, %v1199
        %v1321 = vpack.c.b16 %v1202, %v1201
        %v1322 = vpack.c.b16 %v1204, %v1203
        %v1323 = vpack.c.b16 %v1206, %v1205
        %v1324 = vpack.c.b16 %v1208, %v1207
        %v1325 = vpack.c.b16 %v1210, %v1209
        %v1326 = vpack.c.b16 %v1212, %v1211
        %v1327 = vpack.c.b16 %v1214, %v1213
        %v1328 = vpack.c.b16 %v1216, %v1215
        %v1329 = vpack.c.b16 %v1218, %v1217
        %v1330 = vpack.c.b16 %v1220, %v1219
        %v1331 = vpack.c.b16 %v1222, %v1221
        %v1332 = vpack.c.b16 %v1224, %v1223
        %v1333 = vpack.c.b16 %v1226, %v1225
        %v1334 = vpack.c.b16 %v1228, %v1227
        %v1335 = vpack.c.b16 %v1230, %v1229
        %v1336 = vpack.c.b16 %v1232, %v1231
        %v1337 = vpack.c.b16 %v1234, %v1233
        %v1338 = vpack.c.b16 %v1236, %v1235
        %v1339 = vpack.c.b16 %v1238, %v1237
        %v1340 = vpack.c.b16 %v1240, %v1239
        %v1341 = vpack.c.b16 %v1242, %v1241
        %v1342 = vpack.c.b16 %v1244, %v1243
        %v1343 = vpack.c.b16 %v1246, %v1245
        %v1344 = vpack.c.b16 %v1248, %v1247
        %v1345 = vpack.c.b16 %v1250, %v1249
        %v1346 = vpack.c.b16 %v1252, %v1251
        %v1347 = vpack.c.b16 %v1254, %v1253
        %v1348 = vpack.c.b16 %v1256, %v1255
        %v1349 = vpack.c.b16 %v1258, %v1257
        %v1350 = vpack.c.b16 %v1260, %v1259
        %v1351 = vpack.c.b16 %v1262, %v1261
        %v1352 = vpack.c.b16 %v1264, %v1263
        %v1353 = vpack.c.b16 %v1266, %v1265
        %v1354 = vpack.c.b16 %v1268, %v1267
        %v1355 = vpack.c.b16 %v1270, %v1269
        %v1356 = vpack.c.b16 %v1272, %v1271
        %v1357 = vpack.c.b16 %v1274, %v1273
        %v1358 = vpack.c.b16 %v1276, %v1275
        %v1359 = vpack.c.b16 %v1278, %v1277
        %v1360 = vpack.c.b16 %v1280, %v1279
        %v1361 = vpack.c.b16 %v1282, %v1281
        %v1362 = vpack.c.b16 %v1284, %v1283
        %v1363 = vpack.c.b16 %v1286, %v1285
        %v1364 = vpack.c.b16 %v1288, %v1287
        %v1365 = vpack.c.b16 %v1290, %v1289
        %v1366 = vpack.c.b16 %v1292, %v1291
        %v1367 = vpack.c.b16 %v1294, %v1293
        %v1368 = vpack.c.b16 %v1296, %v1295
        %v1369 = vpack.c.b16 %v1298, %v1297
        %v1370 = vpack.c.b16 %v1300, %v1299
        %v1371 = vpack.c.b16 %v1302, %v1301
        %v1372 = vpack.c.b16 %v1304, %v1303
        %v1373 = vpack.c.b16 %v1306, %v1305
        %v1374 = vpack.c.b16 %v1308, %v1307
        %v1375 = vpack.c.b16 %v1310, %v1309
        %v1376 = vpack.c.b16 %v1312, %v1311
        %1441 = vmatprep.subr.bf16.mxu0 0
        %1442 = vmatpush1.bf16.msra.mxu0 %v1313
        %1443 = vmatprep.subr.bf16.mxu0 0
        %1444 = vmatpush1.bf16.msra.mxu0 %v1314
        %1445 = vmatprep.subr.bf16.mxu0 0
        %1446 = vmatpush1.bf16.msra.mxu0 %v1315
        %1447 = vmatprep.subr.bf16.mxu0 0
        %1448 = vmatpush1.bf16.msra.mxu0 %v1316
        %1449 = vmatprep.subr.bf16.mxu0 0
        %1450 = vmatpush1.bf16.msra.mxu0 %v1317
        %1451 = vmatprep.subr.bf16.mxu0 0
        %1452 = vmatpush1.bf16.msra.mxu0 %v1318
        %1453 = vmatprep.subr.bf16.mxu0 0
        %1454 = vmatpush1.bf16.msra.mxu0 %v1319
        %1455 = vmatprep.subr.bf16.mxu0 0
        %1456 = vmatpush1.bf16.msra.mxu0 %v1320
        %1457 = vmatprep.subr.bf16.mxu0 0
        %1458 = vmatpush1.bf16.msra.mxu0 %v1321
        %1459 = vmatprep.subr.bf16.mxu0 0
        %1460 = vmatpush1.bf16.msra.mxu0 %v1322
        %1461 = vmatprep.subr.bf16.mxu0 0
        %1462 = vmatpush1.bf16.msra.mxu0 %v1323
        %1463 = vmatprep.subr.bf16.mxu0 0
        %1464 = vmatpush1.bf16.msra.mxu0 %v1324
        %1465 = vmatprep.subr.bf16.mxu0 0
        %1466 = vmatpush1.bf16.msra.mxu0 %v1325
        %1467 = vmatprep.subr.bf16.mxu0 0
        %1468 = vmatpush1.bf16.msra.mxu0 %v1326
        %1469 = vmatprep.subr.bf16.mxu0 0
        %1470 = vmatpush1.bf16.msra.mxu0 %v1327
        %1471 = vmatprep.subr.bf16.mxu0 0
        %1472 = vmatpush1.bf16.msra.mxu0 %v1328
        %1473 = vmatprep.mubr.bf16.mxu0 %v674
        %1474 = vmatmul.mubr.bf16.gmra.mrb[0].mxu0 %v673
        %v1475 = vpop.f32.mrb[0].mxu0
        %v1476 = vadd.f32 0.0, %v1475
        %v1477 = vpop.f32.mrb[0].mxu0
        %v1478 = vpop.f32.mrb[0].mxu0
        %v1479 = vadd.f32 0.0, %v1478
        %v1480 = vpop.f32.mrb[0].mxu0
        %1481 = vmatprep.mubr.bf16.mxu0 %v682
        %1482 = vmatmul.mubr.bf16.gmra.mrb[0].mxu0 %v681
        %v1483 = vpop.f32.mrb[0].mxu0
        %v1484 = vadd.f32 0.0, %v1483
        %v1485 = vpop.f32.mrb[0].mxu0
        %v1486 = vpop.f32.mrb[0].mxu0
        %v1487 = vadd.f32 0.0, %v1486
        %v1488 = vpop.f32.mrb[0].mxu0
        %1489 = vmatprep.mubr.bf16.mxu0 %v690
        %1490 = vmatmul.mubr.bf16.gmra.mrb[0].mxu0 %v689
        %v1491 = vpop.f32.mrb[0].mxu0
        %v1492 = vadd.f32 0.0, %v1491
        %v1493 = vpop.f32.mrb[0].mxu0
        %v1494 = vpop.f32.mrb[0].mxu0
        %v1495 = vadd.f32 0.0, %v1494
        %v1496 = vpop.f32.mrb[0].mxu0
        %1497 = vmatprep.mubr.bf16.mxu0 %v698
        %1498 = vmatmul.mubr.bf16.gmra.mrb[0].mxu0 %v697
        %v1499 = vpop.f32.mrb[0].mxu0
        %v1500 = vadd.f32 0.0, %v1499
        %v1501 = vpop.f32.mrb[0].mxu0
        %v1502 = vpop.f32.mrb[0].mxu0
        %v1503 = vadd.f32 0.0, %v1502
        %v1504 = vpop.f32.mrb[0].mxu0
        %1505 = vmatprep.mubr.bf16.mxu0 %v706
        %1506 = vmatmul.mubr.bf16.gmra.mrb[0].mxu0 %v705
        %v1507 = vpop.f32.mrb[0].mxu0
        %v1508 = vadd.f32 0.0, %v1507
        %v1509 = vpop.f32.mrb[0].mxu0
        %v1510 = vpop.f32.mrb[0].mxu0
        %v1511 = vadd.f32 0.0, %v1510
        %v1512 = vpop.f32.mrb[0].mxu0
        %1513 = vmatprep.mubr.bf16.mxu0 %v714
        %1514 = vmatmul.mubr.bf16.gmra.mrb[0].mxu0 %v713
        %v1515 = vpop.f32.mrb[0].mxu0
        %v1516 = vadd.f32 0.0, %v1515
        %v1517 = vpop.f32.mrb[0].mxu0
        %v1518 = vpop.f32.mrb[0].mxu0
        %v1519 = vadd.f32 0.0, %v1518
        %v1520 = vpop.f32.mrb[0].mxu0
        %1521 = vmatprep.mubr.bf16.mxu0 %v722
        %1522 = vmatmul.mubr.bf16.gmra.mrb[0].mxu0 %v721
        %v1523 = vpop.f32.mrb[0].mxu0
        %v1524 = vadd.f32 0.0, %v1523
        %v1525 = vpop.f32.mrb[0].mxu0
        %v1526 = vpop.f32.mrb[0].mxu0
        %v1527 = vadd.f32 0.0, %v1526
        %v1528 = vpop.f32.mrb[0].mxu0
        %1529 = vmatprep.mubr.bf16.mxu0 %v730
        %1530 = vmatmul.mubr.bf16.gmra.mrb[0].mxu0 %v729
        %v1531 = vpop.f32.mrb[0].mxu0
        %v1532 = vadd.f32 0.0, %v1531
        %v1533 = vpop.f32.mrb[0].mxu0
        %v1534 = vpop.f32.mrb[0].mxu0
        %v1535 = vadd.f32 0.0, %v1534
        %v1536 = vpop.f32.mrb[0].mxu0
        %1537 = vmatprep.mubr.bf16.mxu0 %v738
        %1538 = vmatmul.mubr.bf16.gmra.mrb[0].mxu0 %v737
        %v1539 = vpop.f32.mrb[0].mxu0
        %v1540 = vadd.f32 0.0, %v1539
        %v1541 = vpop.f32.mrb[0].mxu0
        %v1542 = vpop.f32.mrb[0].mxu0
        %v1543 = vadd.f32 0.0, %v1542
        %v1544 = vpop.f32.mrb[0].mxu0
        %1545 = vmatprep.mubr.bf16.mxu0 %v746
        %1546 = vmatmul.mubr.bf16.gmra.mrb[0].mxu0 %v745
        %v1547 = vpop.f32.mrb[0].mxu0
        %v1548 = vadd.f32 0.0, %v1547
        %v1549 = vpop.f32.mrb[0].mxu0
        %v1550 = vpop.f32.mrb[0].mxu0
        %v1551 = vadd.f32 0.0, %v1550
        %v1552 = vpop.f32.mrb[0].mxu0
        %1553 = vmatprep.mubr.bf16.mxu0 %v754
        %1554 = vmatmul.mubr.bf16.gmra.mrb[0].mxu0 %v753
        %v1555 = vpop.f32.mrb[0].mxu0
        %v1556 = vadd.f32 0.0, %v1555
        %v1557 = vpop.f32.mrb[0].mxu0
        %v1558 = vpop.f32.mrb[0].mxu0
        %v1559 = vadd.f32 0.0, %v1558
        %v1560 = vpop.f32.mrb[0].mxu0
        %1561 = vmatprep.mubr.bf16.mxu0 %v762
        %1562 = vmatmul.mubr.bf16.gmra.mrb[0].mxu0 %v761
        %v1563 = vpop.f32.mrb[0].mxu0
        %v1564 = vadd.f32 0.0, %v1563
        %v1565 = vpop.f32.mrb[0].mxu0
        %v1566 = vpop.f32.mrb[0].mxu0
        %v1567 = vadd.f32 0.0, %v1566
        %v1568 = vpop.f32.mrb[0].mxu0
        %1569 = vmatprep.mubr.bf16.mxu0 %v770
        %1570 = vmatmul.mubr.bf16.gmra.mrb[0].mxu0 %v769
        %v1571 = vpop.f32.mrb[0].mxu0
        %v1572 = vadd.f32 0.0, %v1571
        %v1573 = vpop.f32.mrb[0].mxu0
        %v1574 = vpop.f32.mrb[0].mxu0
        %v1575 = vadd.f32 0.0, %v1574
        %v1576 = vpop.f32.mrb[0].mxu0
        %1577 = vmatprep.mubr.bf16.mxu0 %v778
        %1578 = vmatmul.mubr.bf16.gmra.mrb[0].mxu0 %v777
        %v1579 = vpop.f32.mrb[0].mxu0
        %v1580 = vadd.f32 0.0, %v1579
        %v1581 = vpop.f32.mrb[0].mxu0
        %v1582 = vpop.f32.mrb[0].mxu0
        %v1583 = vadd.f32 0.0, %v1582
        %v1584 = vpop.f32.mrb[0].mxu0
        %1585 = vmatprep.mubr.bf16.mxu0 %v786
        %1586 = vmatmul.mubr.bf16.gmra.mrb[0].mxu0 %v785
        %v1587 = vpop.f32.mrb[0].mxu0
        %v1588 = vadd.f32 0.0, %v1587
        %v1589 = vpop.f32.mrb[0].mxu0
        %v1590 = vpop.f32.mrb[0].mxu0
        %v1591 = vadd.f32 0.0, %v1590
        %v1592 = vpop.f32.mrb[0].mxu0
        %1593 = vmatprep.mubr.bf16.mxu0 %v794
        %1594 = vmatmul.mubr.bf16.gmra.mrb[0].mxu0 %v793
        %v1595 = vpop.f32.mrb[0].mxu0
        %v1596 = vadd.f32 0.0, %v1595
        %v1597 = vpop.f32.mrb[0].mxu0
        %v1598 = vpop.f32.mrb[0].mxu0
        %v1599 = vadd.f32 0.0, %v1598
        %v1600 = vpop.f32.mrb[0].mxu0
        %1601 = vmatprep.mubr.bf16.mxu0 %v802
        %1602 = vmatmul.mubr.bf16.gmra.mrb[0].mxu0 %v801
        %v1603 = vpop.f32.mrb[0].mxu0
        %v1604 = vadd.f32 0.0, %v1603
        %v1605 = vpop.f32.mrb[0].mxu0
        %v1606 = vpop.f32.mrb[0].mxu0
        %v1607 = vadd.f32 0.0, %v1606
        %v1608 = vpop.f32.mrb[0].mxu0
        %1609 = vmatprep.mubr.bf16.mxu0 %v810
        %1610 = vmatmul.mubr.bf16.gmra.mrb[0].mxu0 %v809
        %v1611 = vpop.f32.mrb[0].mxu0
        %v1612 = vadd.f32 0.0, %v1611
        %v1613 = vpop.f32.mrb[0].mxu0
        %v1614 = vpop.f32.mrb[0].mxu0
        %v1615 = vadd.f32 0.0, %v1614
        %v1616 = vpop.f32.mrb[0].mxu0
        %1617 = vmatprep.mubr.bf16.mxu0 %v818
        %1618 = vmatmul.mubr.bf16.gmra.mrb[0].mxu0 %v817
        %v1619 = vpop.f32.mrb[0].mxu0
        %v1620 = vadd.f32 0.0, %v1619
        %v1621 = vpop.f32.mrb[0].mxu0
        %v1622 = vpop.f32.mrb[0].mxu0
        %v1623 = vadd.f32 0.0, %v1622
        %v1624 = vpop.f32.mrb[0].mxu0
        %1625 = vmatprep.mubr.bf16.mxu0 %v826
        %1626 = vmatmul.mubr.bf16.gmra.mrb[0].mxu0 %v825
        %v1627 = vpop.f32.mrb[0].mxu0
        %v1628 = vadd.f32 0.0, %v1627
        %v1629 = vpop.f32.mrb[0].mxu0
        %v1630 = vpop.f32.mrb[0].mxu0
        %v1631 = vadd.f32 0.0, %v1630
        %v1632 = vpop.f32.mrb[0].mxu0
        %1633 = vmatprep.mubr.bf16.mxu0 %v834
        %1634 = vmatmul.mubr.bf16.gmra.mrb[0].mxu0 %v833
        %v1635 = vpop.f32.mrb[0].mxu0
        %v1636 = vadd.f32 0.0, %v1635
        %v1637 = vpop.f32.mrb[0].mxu0
        %v1638 = vpop.f32.mrb[0].mxu0
        %v1639 = vadd.f32 0.0, %v1638
        %v1640 = vpop.f32.mrb[0].mxu0
        %1641 = vmatprep.mubr.bf16.mxu0 %v842
        %1642 = vmatmul.mubr.bf16.gmra.mrb[0].mxu0 %v841
        %v1643 = vpop.f32.mrb[0].mxu0
        %v1644 = vadd.f32 0.0, %v1643
        %v1645 = vpop.f32.mrb[0].mxu0
        %v1646 = vpop.f32.mrb[0].mxu0
        %v1647 = vadd.f32 0.0, %v1646
        %v1648 = vpop.f32.mrb[0].mxu0
        %1649 = vmatprep.mubr.bf16.mxu0 %v850
        %1650 = vmatmul.mubr.bf16.gmra.mrb[0].mxu0 %v849
        %v1651 = vpop.f32.mrb[0].mxu0
        %v1652 = vadd.f32 0.0, %v1651
        %v1653 = vpop.f32.mrb[0].mxu0
        %v1654 = vpop.f32.mrb[0].mxu0
        %v1655 = vadd.f32 0.0, %v1654
        %v1656 = vpop.f32.mrb[0].mxu0
        %1657 = vmatprep.mubr.bf16.mxu0 %v858
        %1658 = vmatmul.mubr.bf16.gmra.mrb[0].mxu0 %v857
        %v1659 = vpop.f32.mrb[0].mxu0
        %v1660 = vadd.f32 0.0, %v1659
        %v1661 = vpop.f32.mrb[0].mxu0
        %v1662 = vpop.f32.mrb[0].mxu0
        %v1663 = vadd.f32 0.0, %v1662
        %v1664 = vpop.f32.mrb[0].mxu0
        %1665 = vmatprep.mubr.bf16.mxu0 %v866
        %1666 = vmatmul.mubr.bf16.gmra.mrb[0].mxu0 %v865
        %v1667 = vpop.f32.mrb[0].mxu0
        %v1668 = vadd.f32 0.0, %v1667
        %v1669 = vpop.f32.mrb[0].mxu0
        %v1670 = vpop.f32.mrb[0].mxu0
        %v1671 = vadd.f32 0.0, %v1670
        %v1672 = vpop.f32.mrb[0].mxu0
        %1673 = vmatprep.mubr.bf16.mxu0 %v874
        %1674 = vmatmul.mubr.bf16.gmra.mrb[0].mxu0 %v873
        %v1675 = vpop.f32.mrb[0].mxu0
        %v1676 = vadd.f32 0.0, %v1675
        %v1677 = vpop.f32.mrb[0].mxu0
        %v1678 = vpop.f32.mrb[0].mxu0
        %v1679 = vadd.f32 0.0, %v1678
        %v1680 = vpop.f32.mrb[0].mxu0
        %1681 = vmatprep.mubr.bf16.mxu0 %v882
        %1682 = vmatmul.mubr.bf16.gmra.mrb[0].mxu0 %v881
        %v1683 = vpop.f32.mrb[0].mxu0
        %v1684 = vadd.f32 0.0, %v1683
        %v1685 = vpop.f32.mrb[0].mxu0
        %v1686 = vpop.f32.mrb[0].mxu0
        %v1687 = vadd.f32 0.0, %v1686
        %v1688 = vpop.f32.mrb[0].mxu0
        %1689 = vmatprep.mubr.bf16.mxu0 %v890
        %1690 = vmatmul.mubr.bf16.gmra.mrb[0].mxu0 %v889
        %v1691 = vpop.f32.mrb[0].mxu0
        %v1692 = vadd.f32 0.0, %v1691
        %v1693 = vpop.f32.mrb[0].mxu0
        %v1694 = vpop.f32.mrb[0].mxu0
        %v1695 = vadd.f32 0.0, %v1694
        %v1696 = vpop.f32.mrb[0].mxu0
        %1697 = vmatprep.mubr.bf16.mxu0 %v898
        %1698 = vmatmul.mubr.bf16.gmra.mrb[0].mxu0 %v897
        %v1699 = vpop.f32.mrb[0].mxu0
        %v1700 = vadd.f32 0.0, %v1699
        %v1701 = vpop.f32.mrb[0].mxu0
        %v1702 = vpop.f32.mrb[0].mxu0
        %v1703 = vadd.f32 0.0, %v1702
        %v1704 = vpop.f32.mrb[0].mxu0
        %1705 = vmatprep.mubr.bf16.mxu0 %v906
        %1706 = vmatmul.mubr.bf16.gmra.mrb[0].mxu0 %v905
        %v1707 = vpop.f32.mrb[0].mxu0
        %v1708 = vadd.f32 0.0, %v1707
        %v1709 = vpop.f32.mrb[0].mxu0
        %v1710 = vpop.f32.mrb[0].mxu0
        %v1711 = vadd.f32 0.0, %v1710
        %v1712 = vpop.f32.mrb[0].mxu0
        %1713 = vmatprep.mubr.bf16.mxu0 %v914
        %1714 = vmatmul.mubr.bf16.gmra.mrb[0].mxu0 %v913
        %v1715 = vpop.f32.mrb[0].mxu0
        %v1716 = vadd.f32 0.0, %v1715
        %v1717 = vpop.f32.mrb[0].mxu0
        %v1718 = vpop.f32.mrb[0].mxu0
        %v1719 = vadd.f32 0.0, %v1718
        %v1720 = vpop.f32.mrb[0].mxu0
        %1721 = vmatprep.mubr.bf16.mxu0 %v922
        %1722 = vmatmul.mubr.bf16.gmra.mrb[0].mxu0 %v921
        %v1723 = vpop.f32.mrb[0].mxu0
        %v1724 = vadd.f32 0.0, %v1723
        %v1725 = vpop.f32.mrb[0].mxu0
        %v1726 = vpop.f32.mrb[0].mxu0
        %v1727 = vadd.f32 0.0, %v1726
        %v1728 = vpop.f32.mrb[0].mxu0
        %1729 = vdwg.mxu0
        %1730 = vmatprep.subr.bf16.mxu0 0
        %1731 = vmatpush1.bf16.msra.mxu0 %v1329
        %1732 = vmatprep.subr.bf16.mxu0 0
        %1733 = vmatpush1.bf16.msra.mxu0 %v1330
        %1734 = vmatprep.subr.bf16.mxu0 0
        %1735 = vmatpush1.bf16.msra.mxu0 %v1331
        %1736 = vmatprep.subr.bf16.mxu0 0
        %1737 = vmatpush1.bf16.msra.mxu0 %v1332
        %1738 = vmatprep.subr.bf16.mxu0 0
        %1739 = vmatpush1.bf16.msra.mxu0 %v1333
        %1740 = vmatprep.subr.bf16.mxu0 0
        %1741 = vmatpush1.bf16.msra.mxu0 %v1334
        %1742 = vmatprep.subr.bf16.mxu0 0
        %1743 = vmatpush1.bf16.msra.mxu0 %v1335
        %1744 = vmatprep.subr.bf16.mxu0 0
        %1745 = vmatpush1.bf16.msra.mxu0 %v1336
        %1746 = vmatprep.subr.bf16.mxu0 0
        %1747 = vmatpush1.bf16.msra.mxu0 %v1337
        %1748 = vmatprep.subr.bf16.mxu0 0
        %1749 = vmatpush1.bf16.msra.mxu0 %v1338
        %1750 = vmatprep.subr.bf16.mxu0 0
        %1751 = vmatpush1.bf16.msra.mxu0 %v1339
        %1752 = vmatprep.subr.bf16.mxu0 0
        %1753 = vmatpush1.bf16.msra.mxu0 %v1340
        %1754 = vmatprep.subr.bf16.mxu0 0
        %1755 = vmatpush1.bf16.msra.mxu0 %v1341
        %1756 = vmatprep.subr.bf16.mxu0 0
        %1757 = vmatpush1.bf16.msra.mxu0 %v1342
        %1758 = vmatprep.subr.bf16.mxu0 0
        %1759 = vmatpush1.bf16.msra.mxu0 %v1343
        %1760 = vmatprep.subr.bf16.mxu0 0
        %1761 = vmatpush1.bf16.msra.mxu0 %v1344
        %1762 = vmatprep.mubr.bf16.mxu0 %v676
        %1763 = vmatmul.mubr.bf16.gmra.mrb[0].mxu0 %v675
        %v1764 = vpop.f32.mrb[0].mxu0
        %v1765 = vadd.f32 %v1476, %v1764
        %v1766 = vpop.f32.mrb[0].mxu0
        %v1767 = vpop.f32.mrb[0].mxu0
        %v1768 = vadd.f32 %v1479, %v1767
        %v1769 = vpop.f32.mrb[0].mxu0
        %1770 = vmatprep.mubr.bf16.mxu0 %v684
        %1771 = vmatmul.mubr.bf16.gmra.mrb[0].mxu0 %v683
        %v1772 = vpop.f32.mrb[0].mxu0
        %v1773 = vadd.f32 %v1484, %v1772
        %v1774 = vpop.f32.mrb[0].mxu0
        %v1775 = vpop.f32.mrb[0].mxu0
        %v1776 = vadd.f32 %v1487, %v1775
        %v1777 = vpop.f32.mrb[0].mxu0
        %1778 = vmatprep.mubr.bf16.mxu0 %v692
        %1779 = vmatmul.mubr.bf16.gmra.mrb[0].mxu0 %v691
        %v1780 = vpop.f32.mrb[0].mxu0
        %v1781 = vadd.f32 %v1492, %v1780
        %v1782 = vpop.f32.mrb[0].mxu0
        %v1783 = vpop.f32.mrb[0].mxu0
        %v1784 = vadd.f32 %v1495, %v1783
        %v1785 = vpop.f32.mrb[0].mxu0
        %1786 = vmatprep.mubr.bf16.mxu0 %v700
        %1787 = vmatmul.mubr.bf16.gmra.mrb[0].mxu0 %v699
        %v1788 = vpop.f32.mrb[0].mxu0
        %v1789 = vadd.f32 %v1500, %v1788
        %v1790 = vpop.f32.mrb[0].mxu0
        %v1791 = vpop.f32.mrb[0].mxu0
        %v1792 = vadd.f32 %v1503, %v1791
        %v1793 = vpop.f32.mrb[0].mxu0
        %1794 = vmatprep.mubr.bf16.mxu0 %v708
        %1795 = vmatmul.mubr.bf16.gmra.mrb[0].mxu0 %v707
        %v1796 = vpop.f32.mrb[0].mxu0
        %v1797 = vadd.f32 %v1508, %v1796
        %v1798 = vpop.f32.mrb[0].mxu0
        %v1799 = vpop.f32.mrb[0].mxu0
        %v1800 = vadd.f32 %v1511, %v1799
        %v1801 = vpop.f32.mrb[0].mxu0
        %1802 = vmatprep.mubr.bf16.mxu0 %v716
        %1803 = vmatmul.mubr.bf16.gmra.mrb[0].mxu0 %v715
        %v1804 = vpop.f32.mrb[0].mxu0
        %v1805 = vadd.f32 %v1516, %v1804
        %v1806 = vpop.f32.mrb[0].mxu0
        %v1807 = vpop.f32.mrb[0].mxu0
        %v1808 = vadd.f32 %v1519, %v1807
        %v1809 = vpop.f32.mrb[0].mxu0
        %1810 = vmatprep.mubr.bf16.mxu0 %v724
        %1811 = vmatmul.mubr.bf16.gmra.mrb[0].mxu0 %v723
        %v1812 = vpop.f32.mrb[0].mxu0
        %v1813 = vadd.f32 %v1524, %v1812
        %v1814 = vpop.f32.mrb[0].mxu0
        %v1815 = vpop.f32.mrb[0].mxu0
        %v1816 = vadd.f32 %v1527, %v1815
        %v1817 = vpop.f32.mrb[0].mxu0
        %1818 = vmatprep.mubr.bf16.mxu0 %v732
        %1819 = vmatmul.mubr.bf16.gmra.mrb[0].mxu0 %v731
        %v1820 = vpop.f32.mrb[0].mxu0
        %v1821 = vadd.f32 %v1532, %v1820
        %v1822 = vpop.f32.mrb[0].mxu0
        %v1823 = vpop.f32.mrb[0].mxu0
        %v1824 = vadd.f32 %v1535, %v1823
        %v1825 = vpop.f32.mrb[0].mxu0
        %1826 = vmatprep.mubr.bf16.mxu0 %v740
        %1827 = vmatmul.mubr.bf16.gmra.mrb[0].mxu0 %v739
        %v1828 = vpop.f32.mrb[0].mxu0
        %v1829 = vadd.f32 %v1540, %v1828
        %v1830 = vpop.f32.mrb[0].mxu0
        %v1831 = vpop.f32.mrb[0].mxu0
        %v1832 = vadd.f32 %v1543, %v1831
        %v1833 = vpop.f32.mrb[0].mxu0
        %1834 = vmatprep.mubr.bf16.mxu0 %v748
        %1835 = vmatmul.mubr.bf16.gmra.mrb[0].mxu0 %v747
        %v1836 = vpop.f32.mrb[0].mxu0
        %v1837 = vadd.f32 %v1548, %v1836
        %v1838 = vpop.f32.mrb[0].mxu0
        %v1839 = vpop.f32.mrb[0].mxu0
        %v1840 = vadd.f32 %v1551, %v1839
        %v1841 = vpop.f32.mrb[0].mxu0
        %1842 = vmatprep.mubr.bf16.mxu0 %v756
        %1843 = vmatmul.mubr.bf16.gmra.mrb[0].mxu0 %v755
        %v1844 = vpop.f32.mrb[0].mxu0
        %v1845 = vadd.f32 %v1556, %v1844
        %v1846 = vpop.f32.mrb[0].mxu0
        %v1847 = vpop.f32.mrb[0].mxu0
        %v1848 = vadd.f32 %v1559, %v1847
        %v1849 = vpop.f32.mrb[0].mxu0
        %1850 = vmatprep.mubr.bf16.mxu0 %v764
        %1851 = vmatmul.mubr.bf16.gmra.mrb[0].mxu0 %v763
        %v1852 = vpop.f32.mrb[0].mxu0
        %v1853 = vadd.f32 %v1564, %v1852
        %v1854 = vpop.f32.mrb[0].mxu0
        %v1855 = vpop.f32.mrb[0].mxu0
        %v1856 = vadd.f32 %v1567, %v1855
        %v1857 = vpop.f32.mrb[0].mxu0
        %1858 = vmatprep.mubr.bf16.mxu0 %v772
        %1859 = vmatmul.mubr.bf16.gmra.mrb[0].mxu0 %v771
        %v1860 = vpop.f32.mrb[0].mxu0
        %v1861 = vadd.f32 %v1572, %v1860
        %v1862 = vpop.f32.mrb[0].mxu0
        %v1863 = vpop.f32.mrb[0].mxu0
        %v1864 = vadd.f32 %v1575, %v1863
        %v1865 = vpop.f32.mrb[0].mxu0
        %1866 = vmatprep.mubr.bf16.mxu0 %v780
        %1867 = vmatmul.mubr.bf16.gmra.mrb[0].mxu0 %v779
        %v1868 = vpop.f32.mrb[0].mxu0
        %v1869 = vadd.f32 %v1580, %v1868
        %v1870 = vpop.f32.mrb[0].mxu0
        %v1871 = vpop.f32.mrb[0].mxu0
        %v1872 = vadd.f32 %v1583, %v1871
        %v1873 = vpop.f32.mrb[0].mxu0
        %1874 = vmatprep.mubr.bf16.mxu0 %v788
        %1875 = vmatmul.mubr.bf16.gmra.mrb[0].mxu0 %v787
        %v1876 = vpop.f32.mrb[0].mxu0
        %v1877 = vadd.f32 %v1588, %v1876
        %v1878 = vpop.f32.mrb[0].mxu0
        %v1879 = vpop.f32.mrb[0].mxu0
        %v1880 = vadd.f32 %v1591, %v1879
        %v1881 = vpop.f32.mrb[0].mxu0
        %1882 = vmatprep.mubr.bf16.mxu0 %v796
        %1883 = vmatmul.mubr.bf16.gmra.mrb[0].mxu0 %v795
        %v1884 = vpop.f32.mrb[0].mxu0
        %v1885 = vadd.f32 %v1596, %v1884
        %v1886 = vpop.f32.mrb[0].mxu0
        %v1887 = vpop.f32.mrb[0].mxu0
        %v1888 = vadd.f32 %v1599, %v1887
        %v1889 = vpop.f32.mrb[0].mxu0
        %1890 = vmatprep.mubr.bf16.mxu0 %v804
        %1891 = vmatmul.mubr.bf16.gmra.mrb[0].mxu0 %v803
        %v1892 = vpop.f32.mrb[0].mxu0
        %v1893 = vadd.f32 %v1604, %v1892
        %v1894 = vpop.f32.mrb[0].mxu0
        %v1895 = vpop.f32.mrb[0].mxu0
        %v1896 = vadd.f32 %v1607, %v1895
        %v1897 = vpop.f32.mrb[0].mxu0
        %1898 = vmatprep.mubr.bf16.mxu0 %v812
        %1899 = vmatmul.mubr.bf16.gmra.mrb[0].mxu0 %v811
        %v1900 = vpop.f32.mrb[0].mxu0
        %v1901 = vadd.f32 %v1612, %v1900
        %v1902 = vpop.f32.mrb[0].mxu0
        %v1903 = vpop.f32.mrb[0].mxu0
        %v1904 = vadd.f32 %v1615, %v1903
        %v1905 = vpop.f32.mrb[0].mxu0
        %1906 = vmatprep.mubr.bf16.mxu0 %v820
        %1907 = vmatmul.mubr.bf16.gmra.mrb[0].mxu0 %v819
        %v1908 = vpop.f32.mrb[0].mxu0
        %v1909 = vadd.f32 %v1620, %v1908
        %v1910 = vpop.f32.mrb[0].mxu0
        %v1911 = vpop.f32.mrb[0].mxu0
        %v1912 = vadd.f32 %v1623, %v1911
        %v1913 = vpop.f32.mrb[0].mxu0
        %1914 = vmatprep.mubr.bf16.mxu0 %v828
        %1915 = vmatmul.mubr.bf16.gmra.mrb[0].mxu0 %v827
        %v1916 = vpop.f32.mrb[0].mxu0
        %v1917 = vadd.f32 %v1628, %v1916
        %v1918 = vpop.f32.mrb[0].mxu0
        %v1919 = vpop.f32.mrb[0].mxu0
        %v1920 = vadd.f32 %v1631, %v1919
        %v1921 = vpop.f32.mrb[0].mxu0
        %1922 = vmatprep.mubr.bf16.mxu0 %v836
        %1923 = vmatmul.mubr.bf16.gmra.mrb[0].mxu0 %v835
        %v1924 = vpop.f32.mrb[0].mxu0
        %v1925 = vadd.f32 %v1636, %v1924
        %v1926 = vpop.f32.mrb[0].mxu0
        %v1927 = vpop.f32.mrb[0].mxu0
        %v1928 = vadd.f32 %v1639, %v1927
        %v1929 = vpop.f32.mrb[0].mxu0
        %1930 = vmatprep.mubr.bf16.mxu0 %v844
        %1931 = vmatmul.mubr.bf16.gmra.mrb[0].mxu0 %v843
        %v1932 = vpop.f32.mrb[0].mxu0
        %v1933 = vadd.f32 %v1644, %v1932
        %v1934 = vpop.f32.mrb[0].mxu0
        %v1935 = vpop.f32.mrb[0].mxu0
        %v1936 = vadd.f32 %v1647, %v1935
        %v1937 = vpop.f32.mrb[0].mxu0
        %1938 = vmatprep.mubr.bf16.mxu0 %v852
        %1939 = vmatmul.mubr.bf16.gmra.mrb[0].mxu0 %v851
        %v1940 = vpop.f32.mrb[0].mxu0
        %v1941 = vadd.f32 %v1652, %v1940
        %v1942 = vpop.f32.mrb[0].mxu0
        %v1943 = vpop.f32.mrb[0].mxu0
        %v1944 = vadd.f32 %v1655, %v1943
        %v1945 = vpop.f32.mrb[0].mxu0
        %1946 = vmatprep.mubr.bf16.mxu0 %v860
        %1947 = vmatmul.mubr.bf16.gmra.mrb[0].mxu0 %v859
        %v1948 = vpop.f32.mrb[0].mxu0
        %v1949 = vadd.f32 %v1660, %v1948
        %v1950 = vpop.f32.mrb[0].mxu0
        %v1951 = vpop.f32.mrb[0].mxu0
        %v1952 = vadd.f32 %v1663, %v1951
        %v1953 = vpop.f32.mrb[0].mxu0
        %1954 = vmatprep.mubr.bf16.mxu0 %v868
        %1955 = vmatmul.mubr.bf16.gmra.mrb[0].mxu0 %v867
        %v1956 = vpop.f32.mrb[0].mxu0
        %v1957 = vadd.f32 %v1668, %v1956
        %v1958 = vpop.f32.mrb[0].mxu0
        %v1959 = vpop.f32.mrb[0].mxu0
        %v1960 = vadd.f32 %v1671, %v1959
        %v1961 = vpop.f32.mrb[0].mxu0
        %1962 = vmatprep.mubr.bf16.mxu0 %v876
        %1963 = vmatmul.mubr.bf16.gmra.mrb[0].mxu0 %v875
        %v1964 = vpop.f32.mrb[0].mxu0
        %v1965 = vadd.f32 %v1676, %v1964
        %v1966 = vpop.f32.mrb[0].mxu0
        %v1967 = vpop.f32.mrb[0].mxu0
        %v1968 = vadd.f32 %v1679, %v1967
        %v1969 = vpop.f32.mrb[0].mxu0
        %1970 = vmatprep.mubr.bf16.mxu0 %v884
        %1971 = vmatmul.mubr.bf16.gmra.mrb[0].mxu0 %v883
        %v1972 = vpop.f32.mrb[0].mxu0
        %v1973 = vadd.f32 %v1684, %v1972
        %v1974 = vpop.f32.mrb[0].mxu0
        %v1975 = vpop.f32.mrb[0].mxu0
        %v1976 = vadd.f32 %v1687, %v1975
        %v1977 = vpop.f32.mrb[0].mxu0
        %1978 = vmatprep.mubr.bf16.mxu0 %v892
        %1979 = vmatmul.mubr.bf16.gmra.mrb[0].mxu0 %v891
        %v1980 = vpop.f32.mrb[0].mxu0
        %v1981 = vadd.f32 %v1692, %v1980
        %v1982 = vpop.f32.mrb[0].mxu0
        %v1983 = vpop.f32.mrb[0].mxu0
        %v1984 = vadd.f32 %v1695, %v1983
        %v1985 = vpop.f32.mrb[0].mxu0
        %1986 = vmatprep.mubr.bf16.mxu0 %v900
        %1987 = vmatmul.mubr.bf16.gmra.mrb[0].mxu0 %v899
        %v1988 = vpop.f32.mrb[0].mxu0
        %v1989 = vadd.f32 %v1700, %v1988
        %v1990 = vpop.f32.mrb[0].mxu0
        %v1991 = vpop.f32.mrb[0].mxu0
        %v1992 = vadd.f32 %v1703, %v1991
        %v1993 = vpop.f32.mrb[0].mxu0
        %1994 = vmatprep.mubr.bf16.mxu0 %v908
        %1995 = vmatmul.mubr.bf16.gmra.mrb[0].mxu0 %v907
        %v1996 = vpop.f32.mrb[0].mxu0
        %v1997 = vadd.f32 %v1708, %v1996
        %v1998 = vpop.f32.mrb[0].mxu0
        %v1999 = vpop.f32.mrb[0].mxu0
        %v2000 = vadd.f32 %v1711, %v1999
        %v2001 = vpop.f32.mrb[0].mxu0
        %2002 = vmatprep.mubr.bf16.mxu0 %v916
        %2003 = vmatmul.mubr.bf16.gmra.mrb[0].mxu0 %v915
        %v2004 = vpop.f32.mrb[0].mxu0
        %v2005 = vadd.f32 %v1716, %v2004
        %v2006 = vpop.f32.mrb[0].mxu0
        %v2007 = vpop.f32.mrb[0].mxu0
        %v2008 = vadd.f32 %v1719, %v2007
        %v2009 = vpop.f32.mrb[0].mxu0
        %2010 = vmatprep.mubr.bf16.mxu0 %v924
        %2011 = vmatmul.mubr.bf16.gmra.mrb[0].mxu0 %v923
        %v2012 = vpop.f32.mrb[0].mxu0
        %v2013 = vadd.f32 %v1724, %v2012
        %v2014 = vpop.f32.mrb[0].mxu0
        %v2015 = vpop.f32.mrb[0].mxu0
        %v2016 = vadd.f32 %v1727, %v2015
        %v2017 = vpop.f32.mrb[0].mxu0
        %2018 = vdwg.mxu0
        %2019 = vmatprep.subr.bf16.mxu0 0
        %2020 = vmatpush1.bf16.msra.mxu0 %v1345
        %2021 = vmatprep.subr.bf16.mxu0 0
        %2022 = vmatpush1.bf16.msra.mxu0 %v1346
        %2023 = vmatprep.subr.bf16.mxu0 0
        %2024 = vmatpush1.bf16.msra.mxu0 %v1347
        %2025 = vmatprep.subr.bf16.mxu0 0
        %2026 = vmatpush1.bf16.msra.mxu0 %v1348
        %2027 = vmatprep.subr.bf16.mxu0 0
        %2028 = vmatpush1.bf16.msra.mxu0 %v1349
        %2029 = vmatprep.subr.bf16.mxu0 0
        %2030 = vmatpush1.bf16.msra.mxu0 %v1350
        %2031 = vmatprep.subr.bf16.mxu0 0
        %2032 = vmatpush1.bf16.msra.mxu0 %v1351
        %2033 = vmatprep.subr.bf16.mxu0 0
        %2034 = vmatpush1.bf16.msra.mxu0 %v1352
        %2035 = vmatprep.subr.bf16.mxu0 0
        %2036 = vmatpush1.bf16.msra.mxu0 %v1353
        %2037 = vmatprep.subr.bf16.mxu0 0
        %2038 = vmatpush1.bf16.msra.mxu0 %v1354
        %2039 = vmatprep.subr.bf16.mxu0 0
        %2040 = vmatpush1.bf16.msra.mxu0 %v1355
        %2041 = vmatprep.subr.bf16.mxu0 0
        %2042 = vmatpush1.bf16.msra.mxu0 %v1356
        %2043 = vmatprep.subr.bf16.mxu0 0
        %2044 = vmatpush1.bf16.msra.mxu0 %v1357
        %2045 = vmatprep.subr.bf16.mxu0 0
        %2046 = vmatpush1.bf16.msra.mxu0 %v1358
        %2047 = vmatprep.subr.bf16.mxu0 0
        %2048 = vmatpush1.bf16.msra.mxu0 %v1359
        %2049 = vmatprep.subr.bf16.mxu0 0
        %2050 = vmatpush1.bf16.msra.mxu0 %v1360
        %2051 = vmatprep.mubr.bf16.mxu0 %v678
        %2052 = vmatmul.mubr.bf16.gmra.mrb[0].mxu0 %v677
        %v2053 = vpop.f32.mrb[0].mxu0
        %v2054 = vadd.f32 %v1765, %v2053
        %v2055 = vpop.f32.mrb[0].mxu0
        %v2056 = vpop.f32.mrb[0].mxu0
        %v2057 = vadd.f32 %v1768, %v2056
        %v2058 = vpop.f32.mrb[0].mxu0
        %2059 = vmatprep.mubr.bf16.mxu0 %v686
        %2060 = vmatmul.mubr.bf16.gmra.mrb[0].mxu0 %v685
        %v2061 = vpop.f32.mrb[0].mxu0
        %v2062 = vadd.f32 %v1773, %v2061
        %v2063 = vpop.f32.mrb[0].mxu0
        %v2064 = vpop.f32.mrb[0].mxu0
        %v2065 = vadd.f32 %v1776, %v2064
        %v2066 = vpop.f32.mrb[0].mxu0
        %2067 = vmatprep.mubr.bf16.mxu0 %v694
        %2068 = vmatmul.mubr.bf16.gmra.mrb[0].mxu0 %v693
        %v2069 = vpop.f32.mrb[0].mxu0
        %v2070 = vadd.f32 %v1781, %v2069
        %v2071 = vpop.f32.mrb[0].mxu0
        %v2072 = vpop.f32.mrb[0].mxu0
        %v2073 = vadd.f32 %v1784, %v2072
        %v2074 = vpop.f32.mrb[0].mxu0
        %2075 = vmatprep.mubr.bf16.mxu0 %v702
        %2076 = vmatmul.mubr.bf16.gmra.mrb[0].mxu0 %v701
        %v2077 = vpop.f32.mrb[0].mxu0
        %v2078 = vadd.f32 %v1789, %v2077
        %v2079 = vpop.f32.mrb[0].mxu0
        %v2080 = vpop.f32.mrb[0].mxu0
        %v2081 = vadd.f32 %v1792, %v2080
        %v2082 = vpop.f32.mrb[0].mxu0
        %2083 = vmatprep.mubr.bf16.mxu0 %v710
        %2084 = vmatmul.mubr.bf16.gmra.mrb[0].mxu0 %v709
        %v2085 = vpop.f32.mrb[0].mxu0
        %v2086 = vadd.f32 %v1797, %v2085
        %v2087 = vpop.f32.mrb[0].mxu0
        %v2088 = vpop.f32.mrb[0].mxu0
        %v2089 = vadd.f32 %v1800, %v2088
        %v2090 = vpop.f32.mrb[0].mxu0
        %2091 = vmatprep.mubr.bf16.mxu0 %v718
        %2092 = vmatmul.mubr.bf16.gmra.mrb[0].mxu0 %v717
        %v2093 = vpop.f32.mrb[0].mxu0
        %v2094 = vadd.f32 %v1805, %v2093
        %v2095 = vpop.f32.mrb[0].mxu0
        %v2096 = vpop.f32.mrb[0].mxu0
        %v2097 = vadd.f32 %v1808, %v2096
        %v2098 = vpop.f32.mrb[0].mxu0
        %2099 = vmatprep.mubr.bf16.mxu0 %v726
        %2100 = vmatmul.mubr.bf16.gmra.mrb[0].mxu0 %v725
        %v2101 = vpop.f32.mrb[0].mxu0
        %v2102 = vadd.f32 %v1813, %v2101
        %v2103 = vpop.f32.mrb[0].mxu0
        %v2104 = vpop.f32.mrb[0].mxu0
        %v2105 = vadd.f32 %v1816, %v2104
        %v2106 = vpop.f32.mrb[0].mxu0
        %2107 = vmatprep.mubr.bf16.mxu0 %v734
        %2108 = vmatmul.mubr.bf16.gmra.mrb[0].mxu0 %v733
        %v2109 = vpop.f32.mrb[0].mxu0
        %v2110 = vadd.f32 %v1821, %v2109
        %v2111 = vpop.f32.mrb[0].mxu0
        %v2112 = vpop.f32.mrb[0].mxu0
        %v2113 = vadd.f32 %v1824, %v2112
        %v2114 = vpop.f32.mrb[0].mxu0
        %2115 = vmatprep.mubr.bf16.mxu0 %v742
        %2116 = vmatmul.mubr.bf16.gmra.mrb[0].mxu0 %v741
        %v2117 = vpop.f32.mrb[0].mxu0
        %v2118 = vadd.f32 %v1829, %v2117
        %v2119 = vpop.f32.mrb[0].mxu0
        %v2120 = vpop.f32.mrb[0].mxu0
        %v2121 = vadd.f32 %v1832, %v2120
        %v2122 = vpop.f32.mrb[0].mxu0
        %2123 = vmatprep.mubr.bf16.mxu0 %v750
        %2124 = vmatmul.mubr.bf16.gmra.mrb[0].mxu0 %v749
        %v2125 = vpop.f32.mrb[0].mxu0
        %v2126 = vadd.f32 %v1837, %v2125
        %v2127 = vpop.f32.mrb[0].mxu0
        %v2128 = vpop.f32.mrb[0].mxu0
        %v2129 = vadd.f32 %v1840, %v2128
        %v2130 = vpop.f32.mrb[0].mxu0
        %2131 = vmatprep.mubr.bf16.mxu0 %v758
        %2132 = vmatmul.mubr.bf16.gmra.mrb[0].mxu0 %v757
        %v2133 = vpop.f32.mrb[0].mxu0
        %v2134 = vadd.f32 %v1845, %v2133
        %v2135 = vpop.f32.mrb[0].mxu0
        %v2136 = vpop.f32.mrb[0].mxu0
        %v2137 = vadd.f32 %v1848, %v2136
        %v2138 = vpop.f32.mrb[0].mxu0
        %2139 = vmatprep.mubr.bf16.mxu0 %v766
        %2140 = vmatmul.mubr.bf16.gmra.mrb[0].mxu0 %v765
        %v2141 = vpop.f32.mrb[0].mxu0
        %v2142 = vadd.f32 %v1853, %v2141
        %v2143 = vpop.f32.mrb[0].mxu0
        %v2144 = vpop.f32.mrb[0].mxu0
        %v2145 = vadd.f32 %v1856, %v2144
        %v2146 = vpop.f32.mrb[0].mxu0
        %2147 = vmatprep.mubr.bf16.mxu0 %v774
        %2148 = vmatmul.mubr.bf16.gmra.mrb[0].mxu0 %v773
        %v2149 = vpop.f32.mrb[0].mxu0
        %v2150 = vadd.f32 %v1861, %v2149
        %v2151 = vpop.f32.mrb[0].mxu0
        %v2152 = vpop.f32.mrb[0].mxu0
        %v2153 = vadd.f32 %v1864, %v2152
        %v2154 = vpop.f32.mrb[0].mxu0
        %2155 = vmatprep.mubr.bf16.mxu0 %v782
        %2156 = vmatmul.mubr.bf16.gmra.mrb[0].mxu0 %v781
        %v2157 = vpop.f32.mrb[0].mxu0
        %v2158 = vadd.f32 %v1869, %v2157
        %v2159 = vpop.f32.mrb[0].mxu0
        %v2160 = vpop.f32.mrb[0].mxu0
        %v2161 = vadd.f32 %v1872, %v2160
        %v2162 = vpop.f32.mrb[0].mxu0
        %2163 = vmatprep.mubr.bf16.mxu0 %v790
        %2164 = vmatmul.mubr.bf16.gmra.mrb[0].mxu0 %v789
        %v2165 = vpop.f32.mrb[0].mxu0
        %v2166 = vadd.f32 %v1877, %v2165
        %v2167 = vpop.f32.mrb[0].mxu0
        %v2168 = vpop.f32.mrb[0].mxu0
        %v2169 = vadd.f32 %v1880, %v2168
        %v2170 = vpop.f32.mrb[0].mxu0
        %2171 = vmatprep.mubr.bf16.mxu0 %v798
        %2172 = vmatmul.mubr.bf16.gmra.mrb[0].mxu0 %v797
        %v2173 = vpop.f32.mrb[0].mxu0
        %v2174 = vadd.f32 %v1885, %v2173
        %v2175 = vpop.f32.mrb[0].mxu0
        %v2176 = vpop.f32.mrb[0].mxu0
        %v2177 = vadd.f32 %v1888, %v2176
        %v2178 = vpop.f32.mrb[0].mxu0
        %2179 = vmatprep.mubr.bf16.mxu0 %v806
        %2180 = vmatmul.mubr.bf16.gmra.mrb[0].mxu0 %v805
        %v2181 = vpop.f32.mrb[0].mxu0
        %v2182 = vadd.f32 %v1893, %v2181
        %v2183 = vpop.f32.mrb[0].mxu0
        %v2184 = vpop.f32.mrb[0].mxu0
        %v2185 = vadd.f32 %v1896, %v2184
        %v2186 = vpop.f32.mrb[0].mxu0
        %2187 = vmatprep.mubr.bf16.mxu0 %v814
        %2188 = vmatmul.mubr.bf16.gmra.mrb[0].mxu0 %v813
        %v2189 = vpop.f32.mrb[0].mxu0
        %v2190 = vadd.f32 %v1901, %v2189
        %v2191 = vpop.f32.mrb[0].mxu0
        %v2192 = vpop.f32.mrb[0].mxu0
        %v2193 = vadd.f32 %v1904, %v2192
        %v2194 = vpop.f32.mrb[0].mxu0
        %2195 = vmatprep.mubr.bf16.mxu0 %v822
        %2196 = vmatmul.mubr.bf16.gmra.mrb[0].mxu0 %v821
        %v2197 = vpop.f32.mrb[0].mxu0
        %v2198 = vadd.f32 %v1909, %v2197
        %v2199 = vpop.f32.mrb[0].mxu0
        %v2200 = vpop.f32.mrb[0].mxu0
        %v2201 = vadd.f32 %v1912, %v2200
        %v2202 = vpop.f32.mrb[0].mxu0
        %2203 = vmatprep.mubr.bf16.mxu0 %v830
        %2204 = vmatmul.mubr.bf16.gmra.mrb[0].mxu0 %v829
        %v2205 = vpop.f32.mrb[0].mxu0
        %v2206 = vadd.f32 %v1917, %v2205
        %v2207 = vpop.f32.mrb[0].mxu0
        %v2208 = vpop.f32.mrb[0].mxu0
        %v2209 = vadd.f32 %v1920, %v2208
        %v2210 = vpop.f32.mrb[0].mxu0
        %2211 = vmatprep.mubr.bf16.mxu0 %v838
        %2212 = vmatmul.mubr.bf16.gmra.mrb[0].mxu0 %v837
        %v2213 = vpop.f32.mrb[0].mxu0
        %v2214 = vadd.f32 %v1925, %v2213
        %v2215 = vpop.f32.mrb[0].mxu0
        %v2216 = vpop.f32.mrb[0].mxu0
        %v2217 = vadd.f32 %v1928, %v2216
        %v2218 = vpop.f32.mrb[0].mxu0
        %2219 = vmatprep.mubr.bf16.mxu0 %v846
        %2220 = vmatmul.mubr.bf16.gmra.mrb[0].mxu0 %v845
        %v2221 = vpop.f32.mrb[0].mxu0
        %v2222 = vadd.f32 %v1933, %v2221
        %v2223 = vpop.f32.mrb[0].mxu0
        %v2224 = vpop.f32.mrb[0].mxu0
        %v2225 = vadd.f32 %v1936, %v2224
        %v2226 = vpop.f32.mrb[0].mxu0
        %2227 = vmatprep.mubr.bf16.mxu0 %v854
        %2228 = vmatmul.mubr.bf16.gmra.mrb[0].mxu0 %v853
        %v2229 = vpop.f32.mrb[0].mxu0
        %v2230 = vadd.f32 %v1941, %v2229
        %v2231 = vpop.f32.mrb[0].mxu0
        %v2232 = vpop.f32.mrb[0].mxu0
        %v2233 = vadd.f32 %v1944, %v2232
        %v2234 = vpop.f32.mrb[0].mxu0
        %2235 = vmatprep.mubr.bf16.mxu0 %v862
        %2236 = vmatmul.mubr.bf16.gmra.mrb[0].mxu0 %v861
        %v2237 = vpop.f32.mrb[0].mxu0
        %v2238 = vadd.f32 %v1949, %v2237
        %v2239 = vpop.f32.mrb[0].mxu0
        %v2240 = vpop.f32.mrb[0].mxu0
        %v2241 = vadd.f32 %v1952, %v2240
        %v2242 = vpop.f32.mrb[0].mxu0
        %2243 = vmatprep.mubr.bf16.mxu0 %v870
        %2244 = vmatmul.mubr.bf16.gmra.mrb[0].mxu0 %v869
        %v2245 = vpop.f32.mrb[0].mxu0
        %v2246 = vadd.f32 %v1957, %v2245
        %v2247 = vpop.f32.mrb[0].mxu0
        %v2248 = vpop.f32.mrb[0].mxu0
        %v2249 = vadd.f32 %v1960, %v2248
        %v2250 = vpop.f32.mrb[0].mxu0
        %2251 = vmatprep.mubr.bf16.mxu0 %v878
        %2252 = vmatmul.mubr.bf16.gmra.mrb[0].mxu0 %v877
        %v2253 = vpop.f32.mrb[0].mxu0
        %v2254 = vadd.f32 %v1965, %v2253
        %v2255 = vpop.f32.mrb[0].mxu0
        %v2256 = vpop.f32.mrb[0].mxu0
        %v2257 = vadd.f32 %v1968, %v2256
        %v2258 = vpop.f32.mrb[0].mxu0
        %2259 = vmatprep.mubr.bf16.mxu0 %v886
        %2260 = vmatmul.mubr.bf16.gmra.mrb[0].mxu0 %v885
        %v2261 = vpop.f32.mrb[0].mxu0
        %v2262 = vadd.f32 %v1973, %v2261
        %v2263 = vpop.f32.mrb[0].mxu0
        %v2264 = vpop.f32.mrb[0].mxu0
        %v2265 = vadd.f32 %v1976, %v2264
        %v2266 = vpop.f32.mrb[0].mxu0
        %2267 = vmatprep.mubr.bf16.mxu0 %v894
        %2268 = vmatmul.mubr.bf16.gmra.mrb[0].mxu0 %v893
        %v2269 = vpop.f32.mrb[0].mxu0
        %v2270 = vadd.f32 %v1981, %v2269
        %v2271 = vpop.f32.mrb[0].mxu0
        %v2272 = vpop.f32.mrb[0].mxu0
        %v2273 = vadd.f32 %v1984, %v2272
        %v2274 = vpop.f32.mrb[0].mxu0
        %2275 = vmatprep.mubr.bf16.mxu0 %v902
        %2276 = vmatmul.mubr.bf16.gmra.mrb[0].mxu0 %v901
        %v2277 = vpop.f32.mrb[0].mxu0
        %v2278 = vadd.f32 %v1989, %v2277
        %v2279 = vpop.f32.mrb[0].mxu0
        %v2280 = vpop.f32.mrb[0].mxu0
        %v2281 = vadd.f32 %v1992, %v2280
        %v2282 = vpop.f32.mrb[0].mxu0
        %2283 = vmatprep.mubr.bf16.mxu0 %v910
        %2284 = vmatmul.mubr.bf16.gmra.mrb[0].mxu0 %v909
        %v2285 = vpop.f32.mrb[0].mxu0
        %v2286 = vadd.f32 %v1997, %v2285
        %v2287 = vpop.f32.mrb[0].mxu0
        %v2288 = vpop.f32.mrb[0].mxu0
        %v2289 = vadd.f32 %v2000, %v2288
        %v2290 = vpop.f32.mrb[0].mxu0
        %2291 = vmatprep.mubr.bf16.mxu0 %v918
        %2292 = vmatmul.mubr.bf16.gmra.mrb[0].mxu0 %v917
        %v2293 = vpop.f32.mrb[0].mxu0
        %v2294 = vadd.f32 %v2005, %v2293
        %v2295 = vpop.f32.mrb[0].mxu0
        %v2296 = vpop.f32.mrb[0].mxu0
        %v2297 = vadd.f32 %v2008, %v2296
        %v2298 = vpop.f32.mrb[0].mxu0
        %2299 = vmatprep.mubr.bf16.mxu0 %v926
        %2300 = vmatmul.mubr.bf16.gmra.mrb[0].mxu0 %v925
        %v2301 = vpop.f32.mrb[0].mxu0
        %v2302 = vadd.f32 %v2013, %v2301
        %v2303 = vpop.f32.mrb[0].mxu0
        %v2304 = vpop.f32.mrb[0].mxu0
        %v2305 = vadd.f32 %v2016, %v2304
        %v2306 = vpop.f32.mrb[0].mxu0
        %2307 = vdwg.mxu0
        %2308 = vmatprep.subr.bf16.mxu0 0
        %2309 = vmatpush1.bf16.msra.mxu0 %v1361
        %2310 = vmatprep.subr.bf16.mxu0 0
        %2311 = vmatpush1.bf16.msra.mxu0 %v1362
        %2312 = vmatprep.subr.bf16.mxu0 0
        %2313 = vmatpush1.bf16.msra.mxu0 %v1363
        %2314 = vmatprep.subr.bf16.mxu0 0
        %2315 = vmatpush1.bf16.msra.mxu0 %v1364
        %2316 = vmatprep.subr.bf16.mxu0 0
        %2317 = vmatpush1.bf16.msra.mxu0 %v1365
        %2318 = vmatprep.subr.bf16.mxu0 0
        %2319 = vmatpush1.bf16.msra.mxu0 %v1366
        %2320 = vmatprep.subr.bf16.mxu0 0
        %2321 = vmatpush1.bf16.msra.mxu0 %v1367
        %2322 = vmatprep.subr.bf16.mxu0 0
        %2323 = vmatpush1.bf16.msra.mxu0 %v1368
        %2324 = vmatprep.subr.bf16.mxu0 0
        %2325 = vmatpush1.bf16.msra.mxu0 %v1369
        %2326 = vmatprep.subr.bf16.mxu0 0
        %2327 = vmatpush1.bf16.msra.mxu0 %v1370
        %2328 = vmatprep.subr.bf16.mxu0 0
        %2329 = vmatpush1.bf16.msra.mxu0 %v1371
        %2330 = vmatprep.subr.bf16.mxu0 0
        %2331 = vmatpush1.bf16.msra.mxu0 %v1372
        %2332 = vmatprep.subr.bf16.mxu0 0
        %2333 = vmatpush1.bf16.msra.mxu0 %v1373
        %2334 = vmatprep.subr.bf16.mxu0 0
        %2335 = vmatpush1.bf16.msra.mxu0 %v1374
        %2336 = vmatprep.subr.bf16.mxu0 0
        %2337 = vmatpush1.bf16.msra.mxu0 %v1375
        %2338 = vmatprep.subr.bf16.mxu0 0
        %2339 = vmatpush1.bf16.msra.mxu0 %v1376
        %2340 = vmatprep.mubr.bf16.mxu0 %v680
        %2341 = vmatmul.mubr.bf16.gmra.mrb[0].mxu0 %v679
        %v2342 = vpop.f32.mrb[0].mxu0
        %v2343 = vadd.f32 %v2054, %v2342
        %v2344 = vpop.f32.mrb[0].mxu0
        %v2345 = vpop.f32.mrb[0].mxu0
        %v2346 = vadd.f32 %v2057, %v2345
        %v2347 = vpop.f32.mrb[0].mxu0
        %2348 = vmatprep.mubr.bf16.mxu0 %v688
        %2349 = vmatmul.mubr.bf16.gmra.mrb[0].mxu0 %v687
        %v2350 = vpop.f32.mrb[0].mxu0
        %v2351 = vadd.f32 %v2062, %v2350
        %v2352 = vpop.f32.mrb[0].mxu0
        %v2353 = vpop.f32.mrb[0].mxu0
        %v2354 = vadd.f32 %v2065, %v2353
        %v2355 = vpop.f32.mrb[0].mxu0
        %2356 = vmatprep.mubr.bf16.mxu0 %v696
        %2357 = vmatmul.mubr.bf16.gmra.mrb[0].mxu0 %v695
        %v2358 = vpop.f32.mrb[0].mxu0
        %v2359 = vadd.f32 %v2070, %v2358
        %v2360 = vpop.f32.mrb[0].mxu0
        %v2361 = vpop.f32.mrb[0].mxu0
        %v2362 = vadd.f32 %v2073, %v2361
        %v2363 = vpop.f32.mrb[0].mxu0
        %2364 = vmatprep.mubr.bf16.mxu0 %v704
        %2365 = vmatmul.mubr.bf16.gmra.mrb[0].mxu0 %v703
        %v2366 = vpop.f32.mrb[0].mxu0
        %v2367 = vadd.f32 %v2078, %v2366
        %v2368 = vpop.f32.mrb[0].mxu0
        %v2369 = vpop.f32.mrb[0].mxu0
        %v2370 = vadd.f32 %v2081, %v2369
        %v2371 = vpop.f32.mrb[0].mxu0
        %2372 = vmatprep.mubr.bf16.mxu0 %v712
        %2373 = vmatmul.mubr.bf16.gmra.mrb[0].mxu0 %v711
        %v2374 = vpop.f32.mrb[0].mxu0
        %v2375 = vadd.f32 %v2086, %v2374
        %v2376 = vpop.f32.mrb[0].mxu0
        %v2377 = vpop.f32.mrb[0].mxu0
        %v2378 = vadd.f32 %v2089, %v2377
        %v2379 = vpop.f32.mrb[0].mxu0
        %2380 = vmatprep.mubr.bf16.mxu0 %v720
        %2381 = vmatmul.mubr.bf16.gmra.mrb[0].mxu0 %v719
        %v2382 = vpop.f32.mrb[0].mxu0
        %v2383 = vadd.f32 %v2094, %v2382
        %v2384 = vpop.f32.mrb[0].mxu0
        %v2385 = vpop.f32.mrb[0].mxu0
        %v2386 = vadd.f32 %v2097, %v2385
        %v2387 = vpop.f32.mrb[0].mxu0
        %2388 = vmatprep.mubr.bf16.mxu0 %v728
        %2389 = vmatmul.mubr.bf16.gmra.mrb[0].mxu0 %v727
        %v2390 = vpop.f32.mrb[0].mxu0
        %v2391 = vadd.f32 %v2102, %v2390
        %v2392 = vpop.f32.mrb[0].mxu0
        %v2393 = vpop.f32.mrb[0].mxu0
        %v2394 = vadd.f32 %v2105, %v2393
        %v2395 = vpop.f32.mrb[0].mxu0
        %2396 = vmatprep.mubr.bf16.mxu0 %v736
        %2397 = vmatmul.mubr.bf16.gmra.mrb[0].mxu0 %v735
        %v2398 = vpop.f32.mrb[0].mxu0
        %v2399 = vadd.f32 %v2110, %v2398
        %v2400 = vpop.f32.mrb[0].mxu0
        %v2401 = vpop.f32.mrb[0].mxu0
        %v2402 = vadd.f32 %v2113, %v2401
        %v2403 = vpop.f32.mrb[0].mxu0
        %2404 = vmatprep.mubr.bf16.mxu0 %v744
        %2405 = vmatmul.mubr.bf16.gmra.mrb[0].mxu0 %v743
        %v2406 = vpop.f32.mrb[0].mxu0
        %v2407 = vadd.f32 %v2118, %v2406
        %v2408 = vpop.f32.mrb[0].mxu0
        %v2409 = vpop.f32.mrb[0].mxu0
        %v2410 = vadd.f32 %v2121, %v2409
        %v2411 = vpop.f32.mrb[0].mxu0
        %2412 = vmatprep.mubr.bf16.mxu0 %v752
        %2413 = vmatmul.mubr.bf16.gmra.mrb[0].mxu0 %v751
        %v2414 = vpop.f32.mrb[0].mxu0
        %v2415 = vadd.f32 %v2126, %v2414
        %v2416 = vpop.f32.mrb[0].mxu0
        %v2417 = vpop.f32.mrb[0].mxu0
        %v2418 = vadd.f32 %v2129, %v2417
        %v2419 = vpop.f32.mrb[0].mxu0
        %2420 = vmatprep.mubr.bf16.mxu0 %v760
        %2421 = vmatmul.mubr.bf16.gmra.mrb[0].mxu0 %v759
        %v2422 = vpop.f32.mrb[0].mxu0
        %v2423 = vadd.f32 %v2134, %v2422
        %v2424 = vpop.f32.mrb[0].mxu0
        %v2425 = vpop.f32.mrb[0].mxu0
        %v2426 = vadd.f32 %v2137, %v2425
        %v2427 = vpop.f32.mrb[0].mxu0
        %2428 = vmatprep.mubr.bf16.mxu0 %v768
        %2429 = vmatmul.mubr.bf16.gmra.mrb[0].mxu0 %v767
        %v2430 = vpop.f32.mrb[0].mxu0
        %v2431 = vadd.f32 %v2142, %v2430
        %v2432 = vpop.f32.mrb[0].mxu0
        %v2433 = vpop.f32.mrb[0].mxu0
        %v2434 = vadd.f32 %v2145, %v2433
        %v2435 = vpop.f32.mrb[0].mxu0
        %2436 = vmatprep.mubr.bf16.mxu0 %v776
        %2437 = vmatmul.mubr.bf16.gmra.mrb[0].mxu0 %v775
        %v2438 = vpop.f32.mrb[0].mxu0
        %v2439 = vadd.f32 %v2150, %v2438
        %v2440 = vpop.f32.mrb[0].mxu0
        %v2441 = vpop.f32.mrb[0].mxu0
        %v2442 = vadd.f32 %v2153, %v2441
        %v2443 = vpop.f32.mrb[0].mxu0
        %2444 = vmatprep.mubr.bf16.mxu0 %v784
        %2445 = vmatmul.mubr.bf16.gmra.mrb[0].mxu0 %v783
        %v2446 = vpop.f32.mrb[0].mxu0
        %v2447 = vadd.f32 %v2158, %v2446
        %v2448 = vpop.f32.mrb[0].mxu0
        %v2449 = vpop.f32.mrb[0].mxu0
        %v2450 = vadd.f32 %v2161, %v2449
        %v2451 = vpop.f32.mrb[0].mxu0
        %2452 = vmatprep.mubr.bf16.mxu0 %v792
        %2453 = vmatmul.mubr.bf16.gmra.mrb[0].mxu0 %v791
        %v2454 = vpop.f32.mrb[0].mxu0
        %v2455 = vadd.f32 %v2166, %v2454
        %v2456 = vpop.f32.mrb[0].mxu0
        %v2457 = vpop.f32.mrb[0].mxu0
        %v2458 = vadd.f32 %v2169, %v2457
        %v2459 = vpop.f32.mrb[0].mxu0
        %2460 = vmatprep.mubr.bf16.mxu0 %v800
        %2461 = vmatmul.mubr.bf16.gmra.mrb[0].mxu0 %v799
        %v2462 = vpop.f32.mrb[0].mxu0
        %v2463 = vadd.f32 %v2174, %v2462
        %v2464 = vpop.f32.mrb[0].mxu0
        %v2465 = vpop.f32.mrb[0].mxu0
        %v2466 = vadd.f32 %v2177, %v2465
        %v2467 = vpop.f32.mrb[0].mxu0
        %2468 = vmatprep.mubr.bf16.mxu0 %v808
        %2469 = vmatmul.mubr.bf16.gmra.mrb[0].mxu0 %v807
        %v2470 = vpop.f32.mrb[0].mxu0
        %v2471 = vadd.f32 %v2182, %v2470
        %v2472 = vpop.f32.mrb[0].mxu0
        %v2473 = vpop.f32.mrb[0].mxu0
        %v2474 = vadd.f32 %v2185, %v2473
        %v2475 = vpop.f32.mrb[0].mxu0
        %2476 = vmatprep.mubr.bf16.mxu0 %v816
        %2477 = vmatmul.mubr.bf16.gmra.mrb[0].mxu0 %v815
        %v2478 = vpop.f32.mrb[0].mxu0
        %v2479 = vadd.f32 %v2190, %v2478
        %v2480 = vpop.f32.mrb[0].mxu0
        %v2481 = vpop.f32.mrb[0].mxu0
        %v2482 = vadd.f32 %v2193, %v2481
        %v2483 = vpop.f32.mrb[0].mxu0
        %2484 = vmatprep.mubr.bf16.mxu0 %v824
        %2485 = vmatmul.mubr.bf16.gmra.mrb[0].mxu0 %v823
        %v2486 = vpop.f32.mrb[0].mxu0
        %v2487 = vadd.f32 %v2198, %v2486
        %v2488 = vpop.f32.mrb[0].mxu0
        %v2489 = vpop.f32.mrb[0].mxu0
        %v2490 = vadd.f32 %v2201, %v2489
        %v2491 = vpop.f32.mrb[0].mxu0
        %2492 = vmatprep.mubr.bf16.mxu0 %v832
        %2493 = vmatmul.mubr.bf16.gmra.mrb[0].mxu0 %v831
        %v2494 = vpop.f32.mrb[0].mxu0
        %v2495 = vadd.f32 %v2206, %v2494
        %v2496 = vpop.f32.mrb[0].mxu0
        %v2497 = vpop.f32.mrb[0].mxu0
        %v2498 = vadd.f32 %v2209, %v2497
        %v2499 = vpop.f32.mrb[0].mxu0
        %2500 = vmatprep.mubr.bf16.mxu0 %v840
        %2501 = vmatmul.mubr.bf16.gmra.mrb[0].mxu0 %v839
        %v2502 = vpop.f32.mrb[0].mxu0
        %v2503 = vadd.f32 %v2214, %v2502
        %v2504 = vpop.f32.mrb[0].mxu0
        %v2505 = vpop.f32.mrb[0].mxu0
        %v2506 = vadd.f32 %v2217, %v2505
        %v2507 = vpop.f32.mrb[0].mxu0
        %2508 = vmatprep.mubr.bf16.mxu0 %v848
        %2509 = vmatmul.mubr.bf16.gmra.mrb[0].mxu0 %v847
        %v2510 = vpop.f32.mrb[0].mxu0
        %v2511 = vadd.f32 %v2222, %v2510
        %v2512 = vpop.f32.mrb[0].mxu0
        %v2513 = vpop.f32.mrb[0].mxu0
        %v2514 = vadd.f32 %v2225, %v2513
        %v2515 = vpop.f32.mrb[0].mxu0
        %2516 = vmatprep.mubr.bf16.mxu0 %v856
        %2517 = vmatmul.mubr.bf16.gmra.mrb[0].mxu0 %v855
        %v2518 = vpop.f32.mrb[0].mxu0
        %v2519 = vadd.f32 %v2230, %v2518
        %v2520 = vpop.f32.mrb[0].mxu0
        %v2521 = vpop.f32.mrb[0].mxu0
        %v2522 = vadd.f32 %v2233, %v2521
        %v2523 = vpop.f32.mrb[0].mxu0
        %2524 = vmatprep.mubr.bf16.mxu0 %v864
        %2525 = vmatmul.mubr.bf16.gmra.mrb[0].mxu0 %v863
        %v2526 = vpop.f32.mrb[0].mxu0
        %v2527 = vadd.f32 %v2238, %v2526
        %v2528 = vpop.f32.mrb[0].mxu0
        %v2529 = vpop.f32.mrb[0].mxu0
        %v2530 = vadd.f32 %v2241, %v2529
        %v2531 = vpop.f32.mrb[0].mxu0
        %2532 = vmatprep.mubr.bf16.mxu0 %v872
        %2533 = vmatmul.mubr.bf16.gmra.mrb[0].mxu0 %v871
        %v2534 = vpop.f32.mrb[0].mxu0
        %v2535 = vadd.f32 %v2246, %v2534
        %v2536 = vpop.f32.mrb[0].mxu0
        %v2537 = vpop.f32.mrb[0].mxu0
        %v2538 = vadd.f32 %v2249, %v2537
        %v2539 = vpop.f32.mrb[0].mxu0
        %2540 = vmatprep.mubr.bf16.mxu0 %v880
        %2541 = vmatmul.mubr.bf16.gmra.mrb[0].mxu0 %v879
        %v2542 = vpop.f32.mrb[0].mxu0
        %v2543 = vadd.f32 %v2254, %v2542
        %v2544 = vpop.f32.mrb[0].mxu0
        %v2545 = vpop.f32.mrb[0].mxu0
        %v2546 = vadd.f32 %v2257, %v2545
        %v2547 = vpop.f32.mrb[0].mxu0
        %2548 = vmatprep.mubr.bf16.mxu0 %v888
        %2549 = vmatmul.mubr.bf16.gmra.mrb[0].mxu0 %v887
        %v2550 = vpop.f32.mrb[0].mxu0
        %v2551 = vadd.f32 %v2262, %v2550
        %v2552 = vpop.f32.mrb[0].mxu0
        %v2553 = vpop.f32.mrb[0].mxu0
        %v2554 = vadd.f32 %v2265, %v2553
        %v2555 = vpop.f32.mrb[0].mxu0
        %2556 = vmatprep.mubr.bf16.mxu0 %v896
        %2557 = vmatmul.mubr.bf16.gmra.mrb[0].mxu0 %v895
        %v2558 = vpop.f32.mrb[0].mxu0
        %v2559 = vadd.f32 %v2270, %v2558
        %v2560 = vpop.f32.mrb[0].mxu0
        %v2561 = vpop.f32.mrb[0].mxu0
        %v2562 = vadd.f32 %v2273, %v2561
        %v2563 = vpop.f32.mrb[0].mxu0
        %2564 = vmatprep.mubr.bf16.mxu0 %v904
        %2565 = vmatmul.mubr.bf16.gmra.mrb[0].mxu0 %v903
        %v2566 = vpop.f32.mrb[0].mxu0
        %v2567 = vadd.f32 %v2278, %v2566
        %v2568 = vpop.f32.mrb[0].mxu0
        %v2569 = vpop.f32.mrb[0].mxu0
        %v2570 = vadd.f32 %v2281, %v2569
        %v2571 = vpop.f32.mrb[0].mxu0
        %2572 = vmatprep.mubr.bf16.mxu0 %v912
        %2573 = vmatmul.mubr.bf16.gmra.mrb[0].mxu0 %v911
        %v2574 = vpop.f32.mrb[0].mxu0
        %v2575 = vadd.f32 %v2286, %v2574
        %v2576 = vpop.f32.mrb[0].mxu0
        %v2577 = vpop.f32.mrb[0].mxu0
        %v2578 = vadd.f32 %v2289, %v2577
        %v2579 = vpop.f32.mrb[0].mxu0
        %2580 = vmatprep.mubr.bf16.mxu0 %v920
        %2581 = vmatmul.mubr.bf16.gmra.mrb[0].mxu0 %v919
        %v2582 = vpop.f32.mrb[0].mxu0
        %v2583 = vadd.f32 %v2294, %v2582
        %v2584 = vpop.f32.mrb[0].mxu0
        %v2585 = vpop.f32.mrb[0].mxu0
        %v2586 = vadd.f32 %v2297, %v2585
        %v2587 = vpop.f32.mrb[0].mxu0
        %2588 = vmatprep.mubr.bf16.mxu0 %v928
        %2589 = vmatmul.mubr.bf16.gmra.mrb[0].mxu0 %v927
        %v2590 = vpop.f32.mrb[0].mxu0
        %v2591 = vadd.f32 %v2302, %v2590
        %v2592 = vpop.f32.mrb[0].mxu0
        %v2593 = vpop.f32.mrb[0].mxu0
        %v2594 = vadd.f32 %v2305, %v2593
        %v2595 = vpop.f32.mrb[0].mxu0
        %2596 = vdwg.mxu0
        %v2597 = vadd.f32 %v481, %v2343
        %v2598 = vadd.f32 %v482, %v2346
        %v2599 = vadd.f32 %v483, %v2351
        %v2600 = vadd.f32 %v484, %v2354
        %v2601 = vadd.f32 %v485, %v2359
        %v2602 = vadd.f32 %v486, %v2362
        %v2603 = vadd.f32 %v487, %v2367
        %v2604 = vadd.f32 %v488, %v2370
        %v2605 = vadd.f32 %v489, %v2375
        %v2606 = vadd.f32 %v490, %v2378
        %v2607 = vadd.f32 %v491, %v2383
        %v2608 = vadd.f32 %v492, %v2386
        %v2609 = vadd.f32 %v493, %v2391
        %v2610 = vadd.f32 %v494, %v2394
        %v2611 = vadd.f32 %v495, %v2399
        %v2612 = vadd.f32 %v496, %v2402
        %v2613 = vadd.f32 %v497, %v2407
        %v2614 = vadd.f32 %v498, %v2410
        %v2615 = vadd.f32 %v499, %v2415
        %v2616 = vadd.f32 %v500, %v2418
        %v2617 = vadd.f32 %v501, %v2423
        %v2618 = vadd.f32 %v502, %v2426
        %v2619 = vadd.f32 %v503, %v2431
        %v2620 = vadd.f32 %v504, %v2434
        %v2621 = vadd.f32 %v505, %v2439
        %v2622 = vadd.f32 %v506, %v2442
        %v2623 = vadd.f32 %v507, %v2447
        %v2624 = vadd.f32 %v508, %v2450
        %v2625 = vadd.f32 %v509, %v2455
        %v2626 = vadd.f32 %v510, %v2458
        %v2627 = vadd.f32 %v511, %v2463
        %v2628 = vadd.f32 %v512, %v2466
        %v2629 = vadd.f32 %v513, %v2471
        %v2630 = vadd.f32 %v514, %v2474
        %v2631 = vadd.f32 %v515, %v2479
        %v2632 = vadd.f32 %v516, %v2482
        %v2633 = vadd.f32 %v517, %v2487
        %v2634 = vadd.f32 %v518, %v2490
        %v2635 = vadd.f32 %v519, %v2495
        %v2636 = vadd.f32 %v520, %v2498
        %v2637 = vadd.f32 %v521, %v2503
        %v2638 = vadd.f32 %v522, %v2506
        %v2639 = vadd.f32 %v523, %v2511
        %v2640 = vadd.f32 %v524, %v2514
        %v2641 = vadd.f32 %v525, %v2519
        %v2642 = vadd.f32 %v526, %v2522
        %v2643 = vadd.f32 %v527, %v2527
        %v2644 = vadd.f32 %v528, %v2530
        %v2645 = vadd.f32 %v529, %v2535
        %v2646 = vadd.f32 %v530, %v2538
        %v2647 = vadd.f32 %v531, %v2543
        %v2648 = vadd.f32 %v532, %v2546
        %v2649 = vadd.f32 %v533, %v2551
        %v2650 = vadd.f32 %v534, %v2554
        %v2651 = vadd.f32 %v535, %v2559
        %v2652 = vadd.f32 %v536, %v2562
        %v2653 = vadd.f32 %v537, %v2567
        %v2654 = vadd.f32 %v538, %v2570
        %v2655 = vadd.f32 %v539, %v2575
        %v2656 = vadd.f32 %v540, %v2578
        %v2657 = vadd.f32 %v541, %v2583
        %v2658 = vadd.f32 %v542, %v2586
        %v2659 = vadd.f32 %v543, %v2591
        %v2660 = vadd.f32 %v544, %v2594
        %2661 = vst [vmem:[#allocation2] sm:$0xff] %v2597
        %2662 = vst [vmem:[#allocation2 + $0x8] sm:$0xff] %v2598
        %2663 = vst [vmem:[#allocation2 + $0x10] sm:$0xff] %v2599
        %2664 = vst [vmem:[#allocation2 + $0x18] sm:$0xff] %v2600
        %2665 = vst [vmem:[#allocation2 + $0x20] sm:$0xff] %v2601
        %2666 = vst [vmem:[#allocation2 + $0x28] sm:$0xff] %v2602
        %2667 = vst [vmem:[#allocation2 + $0x30] sm:$0xff] %v2603
        %2668 = vst [vmem:[#allocation2 + $0x38] sm:$0xff] %v2604
        %2669 = vst [vmem:[#allocation2 + $0x40] sm:$0xff] %v2605
        %2670 = vst [vmem:[#allocation2 + $0x48] sm:$0xff] %v2606
        %2671 = vst [vmem:[#allocation2 + $0x50] sm:$0xff] %v2607
        %2672 = vst [vmem:[#allocation2 + $0x58] sm:$0xff] %v2608
        %2673 = vst [vmem:[#allocation2 + $0x60] sm:$0xff] %v2609
        %2674 = vst [vmem:[#allocation2 + $0x68] sm:$0xff] %v2610
        %2675 = vst [vmem:[#allocation2 + $0x70] sm:$0xff] %v2611
        %2676 = vst [vmem:[#allocation2 + $0x78] sm:$0xff] %v2612
        %2677 = vst [vmem:[#allocation2 + $0x80] sm:$0xff] %v2613
        %2678 = vst [vmem:[#allocation2 + $0x88] sm:$0xff] %v2614
        %2679 = vst [vmem:[#allocation2 + $0x90] sm:$0xff] %v2615
        %2680 = vst [vmem:[#allocation2 + $0x98] sm:$0xff] %v2616
        %2681 = vst [vmem:[#allocation2 + $0xa0] sm:$0xff] %v2617
        %2682 = vst [vmem:[#allocation2 + $0xa8] sm:$0xff] %v2618
        %2683 = vst [vmem:[#allocation2 + $0xb0] sm:$0xff] %v2619
        %2684 = vst [vmem:[#allocation2 + $0xb8] sm:$0xff] %v2620
        %2685 = vst [vmem:[#allocation2 + $0xc0] sm:$0xff] %v2621
        %2686 = vst [vmem:[#allocation2 + $0xc8] sm:$0xff] %v2622
        %2687 = vst [vmem:[#allocation2 + $0xd0] sm:$0xff] %v2623
        %2688 = vst [vmem:[#allocation2 + $0xd8] sm:$0xff] %v2624
        %2689 = vst [vmem:[#allocation2 + $0xe0] sm:$0xff] %v2625
        %2690 = vst [vmem:[#allocation2 + $0xe8] sm:$0xff] %v2626
        %2691 = vst [vmem:[#allocation2 + $0xf0] sm:$0xff] %v2627
        %2692 = vst [vmem:[#allocation2 + $0xf8] sm:$0xff] %v2628
        %2693 = vst [vmem:[#allocation2 + $0x100] sm:$0xff] %v2629
        %2694 = vst [vmem:[#allocation2 + $0x108] sm:$0xff] %v2630
        %2695 = vst [vmem:[#allocation2 + $0x110] sm:$0xff] %v2631
        %2696 = vst [vmem:[#allocation2 + $0x118] sm:$0xff] %v2632
        %2697 = vst [vmem:[#allocation2 + $0x120] sm:$0xff] %v2633
        %2698 = vst [vmem:[#allocation2 + $0x128] sm:$0xff] %v2634
        %2699 = vst [vmem:[#allocation2 + $0x130] sm:$0xff] %v2635
        %2700 = vst [vmem:[#allocation2 + $0x138] sm:$0xff] %v2636
        %2701 = vst [vmem:[#allocation2 + $0x140] sm:$0xff] %v2637
        %2702 = vst [vmem:[#allocation2 + $0x148] sm:$0xff] %v2638
        %2703 = vst [vmem:[#allocation2 + $0x150] sm:$0xff] %v2639
        %2704 = vst [vmem:[#allocation2 + $0x158] sm:$0xff] %v2640
        %2705 = vst [vmem:[#allocation2 + $0x160] sm:$0xff] %v2641
        %2706 = vst [vmem:[#allocation2 + $0x168] sm:$0xff] %v2642
        %2707 = vst [vmem:[#allocation2 + $0x170] sm:$0xff] %v2643
        %2708 = vst [vmem:[#allocation2 + $0x178] sm:$0xff] %v2644
        %2709 = vst [vmem:[#allocation2 + $0x180] sm:$0xff] %v2645
        %2710 = vst [vmem:[#allocation2 + $0x188] sm:$0xff] %v2646
        %2711 = vst [vmem:[#allocation2 + $0x190] sm:$0xff] %v2647
        %2712 = vst [vmem:[#allocation2 + $0x198] sm:$0xff] %v2648
        %2713 = vst [vmem:[#allocation2 + $0x1a0] sm:$0xff] %v2649
        %2714 = vst [vmem:[#allocation2 + $0x1a8] sm:$0xff] %v2650
        %2715 = vst [vmem:[#allocation2 + $0x1b0] sm:$0xff] %v2651
        %2716 = vst [vmem:[#allocation2 + $0x1b8] sm:$0xff] %v2652
        %2717 = vst [vmem:[#allocation2 + $0x1c0] sm:$0xff] %v2653
        %2718 = vst [vmem:[#allocation2 + $0x1c8] sm:$0xff] %v2654
        %2719 = vst [vmem:[#allocation2 + $0x1d0] sm:$0xff] %v2655
        %2720 = vst [vmem:[#allocation2 + $0x1d8] sm:$0xff] %v2656
        %2721 = vst [vmem:[#allocation2 + $0x1e0] sm:$0xff] %v2657
        %2722 = vst [vmem:[#allocation2 + $0x1e8] sm:$0xff] %v2658
        %2723 = vst [vmem:[#allocation2 + $0x1f0] sm:$0xff] %v2659
        %2724 = vst [vmem:[#allocation2 + $0x1f8] sm:$0xff] %v2660
        // Predicated region
        $region65: #{tpu_custom_call.1} parent=47 // pred_check
          %p2725 = pneg %p413
        $region66: #{tpu_custom_call.1} parent=47 // pred_check_branch
          %2727 = sbr.rel (%p2725) target = $region68
        $region67: #{tpu_custom_call.1} parent=47 // pred_region
          %v2728 = vld [vmem:[#allocation2] sm:$0xff]
          %v2729 = vld [vmem:[#allocation2 + $0x8] sm:$0xff]
          %v2730 = vld [vmem:[#allocation2 + $0x10] sm:$0xff]
          %v2731 = vld [vmem:[#allocation2 + $0x18] sm:$0xff]
          %v2732 = vld [vmem:[#allocation2 + $0x20] sm:$0xff]
          %v2733 = vld [vmem:[#allocation2 + $0x28] sm:$0xff]
          %v2734 = vld [vmem:[#allocation2 + $0x30] sm:$0xff]
          %v2735 = vld [vmem:[#allocation2 + $0x38] sm:$0xff]
          %v2736 = vld [vmem:[#allocation2 + $0x40] sm:$0xff]
          %v2737 = vld [vmem:[#allocation2 + $0x48] sm:$0xff]
          %v2738 = vld [vmem:[#allocation2 + $0x50] sm:$0xff]
          %v2739 = vld [vmem:[#allocation2 + $0x58] sm:$0xff]
          %v2740 = vld [vmem:[#allocation2 + $0x60] sm:$0xff]
          %v2741 = vld [vmem:[#allocation2 + $0x68] sm:$0xff]
          %v2742 = vld [vmem:[#allocation2 + $0x70] sm:$0xff]
          %v2743 = vld [vmem:[#allocation2 + $0x78] sm:$0xff]
          %v2744 = vld [vmem:[#allocation2 + $0x80] sm:$0xff]
          %v2745 = vld [vmem:[#allocation2 + $0x88] sm:$0xff]
          %v2746 = vld [vmem:[#allocation2 + $0x90] sm:$0xff]
          %v2747 = vld [vmem:[#allocation2 + $0x98] sm:$0xff]
          %v2748 = vld [vmem:[#allocation2 + $0xa0] sm:$0xff]
          %v2749 = vld [vmem:[#allocation2 + $0xa8] sm:$0xff]
          %v2750 = vld [vmem:[#allocation2 + $0xb0] sm:$0xff]
          %v2751 = vld [vmem:[#allocation2 + $0xb8] sm:$0xff]
          %v2752 = vld [vmem:[#allocation2 + $0xc0] sm:$0xff]
          %v2753 = vld [vmem:[#allocation2 + $0xc8] sm:$0xff]
          %v2754 = vld [vmem:[#allocation2 + $0xd0] sm:$0xff]
          %v2755 = vld [vmem:[#allocation2 + $0xd8] sm:$0xff]
          %v2756 = vld [vmem:[#allocation2 + $0xe0] sm:$0xff]
          %v2757 = vld [vmem:[#allocation2 + $0xe8] sm:$0xff]
          %v2758 = vld [vmem:[#allocation2 + $0xf0] sm:$0xff]
          %v2759 = vld [vmem:[#allocation2 + $0xf8] sm:$0xff]
          %v2760 = vld [vmem:[#allocation2 + $0x100] sm:$0xff]
          %v2761 = vld [vmem:[#allocation2 + $0x108] sm:$0xff]
          %v2762 = vld [vmem:[#allocation2 + $0x110] sm:$0xff]
          %v2763 = vld [vmem:[#allocation2 + $0x118] sm:$0xff]
          %v2764 = vld [vmem:[#allocation2 + $0x120] sm:$0xff]
          %v2765 = vld [vmem:[#allocation2 + $0x128] sm:$0xff]
          %v2766 = vld [vmem:[#allocation2 + $0x130] sm:$0xff]
          %v2767 = vld [vmem:[#allocation2 + $0x138] sm:$0xff]
          %v2768 = vld [vmem:[#allocation2 + $0x140] sm:$0xff]
          %v2769 = vld [vmem:[#allocation2 + $0x148] sm:$0xff]
          %v2770 = vld [vmem:[#allocation2 + $0x150] sm:$0xff]
          %v2771 = vld [vmem:[#allocation2 + $0x158] sm:$0xff]
          %v2772 = vld [vmem:[#allocation2 + $0x160] sm:$0xff]
          %v2773 = vld [vmem:[#allocation2 + $0x168] sm:$0xff]
          %v2774 = vld [vmem:[#allocation2 + $0x170] sm:$0xff]
          %v2775 = vld [vmem:[#allocation2 + $0x178] sm:$0xff]
          %v2776 = vld [vmem:[#allocation2 + $0x180] sm:$0xff]
          %v2777 = vld [vmem:[#allocation2 + $0x188] sm:$0xff]
          %v2778 = vld [vmem:[#allocation2 + $0x190] sm:$0xff]
          %v2779 = vld [vmem:[#allocation2 + $0x198] sm:$0xff]
          %v2780 = vld [vmem:[#allocation2 + $0x1a0] sm:$0xff]
          %v2781 = vld [vmem:[#allocation2 + $0x1a8] sm:$0xff]
          %v2782 = vld [vmem:[#allocation2 + $0x1b0] sm:$0xff]
          %v2783 = vld [vmem:[#allocation2 + $0x1b8] sm:$0xff]
          %v2784 = vld [vmem:[#allocation2 + $0x1c0] sm:$0xff]
          %v2785 = vld [vmem:[#allocation2 + $0x1c8] sm:$0xff]
          %v2786 = vld [vmem:[#allocation2 + $0x1d0] sm:$0xff]
          %v2787 = vld [vmem:[#allocation2 + $0x1d8] sm:$0xff]
          %v2788 = vld [vmem:[#allocation2 + $0x1e0] sm:$0xff]
          %v2789 = vld [vmem:[#allocation2 + $0x1e8] sm:$0xff]
          %v2790 = vld [vmem:[#allocation2 + $0x1f0] sm:$0xff]
          %v2791 = vld [vmem:[#allocation2 + $0x1f8] sm:$0xff]
          %v2792 = vld [vmem:[%s409] sm:$0xff]
          %v2793 = vld [vmem:[%s409 + $0x8] sm:$0xff]
          %v2794 = vld [vmem:[%s409 + $0x10] sm:$0xff]
          %v2795 = vld [vmem:[%s409 + $0x18] sm:$0xff]
          %v2796 = vld [vmem:[%s409 + $0x20] sm:$0xff]
          %v2797 = vld [vmem:[%s409 + $0x28] sm:$0xff]
          %v2798 = vld [vmem:[%s409 + $0x30] sm:$0xff]
          %v2799 = vld [vmem:[%s409 + $0x38] sm:$0xff]
          %v2800 = vld [vmem:[%s409 + $0x40] sm:$0xff]
          %v2801 = vld [vmem:[%s409 + $0x48] sm:$0xff]
          %v2802 = vld [vmem:[%s409 + $0x50] sm:$0xff]
          %v2803 = vld [vmem:[%s409 + $0x58] sm:$0xff]
          %v2804 = vld [vmem:[%s409 + $0x60] sm:$0xff]
          %v2805 = vld [vmem:[%s409 + $0x68] sm:$0xff]
          %v2806 = vld [vmem:[%s409 + $0x70] sm:$0xff]
          %v2807 = vld [vmem:[%s409 + $0x78] sm:$0xff]
          %v2808 = vld [vmem:[%s409 + $0x80] sm:$0xff]
          %v2809 = vld [vmem:[%s409 + $0x88] sm:$0xff]
          %v2810 = vld [vmem:[%s409 + $0x90] sm:$0xff]
          %v2811 = vld [vmem:[%s409 + $0x98] sm:$0xff]
          %v2812 = vld [vmem:[%s409 + $0xa0] sm:$0xff]
          %v2813 = vld [vmem:[%s409 + $0xa8] sm:$0xff]
          %v2814 = vld [vmem:[%s409 + $0xb0] sm:$0xff]
          %v2815 = vld [vmem:[%s409 + $0xb8] sm:$0xff]
          %v2816 = vld [vmem:[%s409 + $0xc0] sm:$0xff]
          %v2817 = vld [vmem:[%s409 + $0xc8] sm:$0xff]
          %v2818 = vld [vmem:[%s409 + $0xd0] sm:$0xff]
          %v2819 = vld [vmem:[%s409 + $0xd8] sm:$0xff]
          %v2820 = vld [vmem:[%s409 + $0xe0] sm:$0xff]
          %v2821 = vld [vmem:[%s409 + $0xe8] sm:$0xff]
          %v2822 = vld [vmem:[%s409 + $0xf0] sm:$0xff]
          %v2823 = vld [vmem:[%s409 + $0xf8] sm:$0xff]
          %v2824 = vld [vmem:[%s409 + $0x100] sm:$0xff]
          %v2825 = vld [vmem:[%s409 + $0x108] sm:$0xff]
          %v2826 = vld [vmem:[%s409 + $0x110] sm:$0xff]
          %v2827 = vld [vmem:[%s409 + $0x118] sm:$0xff]
          %v2828 = vld [vmem:[%s409 + $0x120] sm:$0xff]
          %v2829 = vld [vmem:[%s409 + $0x128] sm:$0xff]
          %v2830 = vld [vmem:[%s409 + $0x130] sm:$0xff]
          %v2831 = vld [vmem:[%s409 + $0x138] sm:$0xff]
          %v2832 = vld [vmem:[%s409 + $0x140] sm:$0xff]
          %v2833 = vld [vmem:[%s409 + $0x148] sm:$0xff]
          %v2834 = vld [vmem:[%s409 + $0x150] sm:$0xff]
          %v2835 = vld [vmem:[%s409 + $0x158] sm:$0xff]
          %v2836 = vld [vmem:[%s409 + $0x160] sm:$0xff]
          %v2837 = vld [vmem:[%s409 + $0x168] sm:$0xff]
          %v2838 = vld [vmem:[%s409 + $0x170] sm:$0xff]
          %v2839 = vld [vmem:[%s409 + $0x178] sm:$0xff]
          %v2840 = vld [vmem:[%s409 + $0x180] sm:$0xff]
          %v2841 = vld [vmem:[%s409 + $0x188] sm:$0xff]
          %v2842 = vld [vmem:[%s409 + $0x190] sm:$0xff]
          %v2843 = vld [vmem:[%s409 + $0x198] sm:$0xff]
          %v2844 = vld [vmem:[%s409 + $0x1a0] sm:$0xff]
          %v2845 = vld [vmem:[%s409 + $0x1a8] sm:$0xff]
          %v2846 = vld [vmem:[%s409 + $0x1b0] sm:$0xff]
          %v2847 = vld [vmem:[%s409 + $0x1b8] sm:$0xff]
          %v2848 = vld [vmem:[%s409 + $0x1c0] sm:$0xff]
          %v2849 = vld [vmem:[%s409 + $0x1c8] sm:$0xff]
          %v2850 = vld [vmem:[%s409 + $0x1d0] sm:$0xff]
          %v2851 = vld [vmem:[%s409 + $0x1d8] sm:$0xff]
          %v2852 = vld [vmem:[%s409 + $0x1e0] sm:$0xff]
          %v2853 = vld [vmem:[%s409 + $0x1e8] sm:$0xff]
          %v2854 = vld [vmem:[%s409 + $0x1f0] sm:$0xff]
          %v2855 = vld [vmem:[%s409 + $0x1f8] sm:$0xff]
          %2857 = vset.pattern.permute.xlu0 0
          %2858 = vperm.xlu0 %2857, %v2792
          %v2859 = vpop.permute.xlu0 %2858
          %2862 = vset.pattern.permute.xlu0 0
          %2863 = vperm.xlu0 %2862, %v2793
          %v2864 = vpop.permute.xlu0 %2863
          %2867 = vset.pattern.permute.xlu0 0
          %2868 = vperm.xlu0 %2867, %v2794
          %v2869 = vpop.permute.xlu0 %2868
          %2872 = vset.pattern.permute.xlu0 0
          %2873 = vperm.xlu0 %2872, %v2795
          %v2874 = vpop.permute.xlu0 %2873
          %2877 = vset.pattern.permute.xlu0 0
          %2878 = vperm.xlu0 %2877, %v2796
          %v2879 = vpop.permute.xlu0 %2878
          %2882 = vset.pattern.permute.xlu0 0
          %2883 = vperm.xlu0 %2882, %v2797
          %v2884 = vpop.permute.xlu0 %2883
          %2887 = vset.pattern.permute.xlu0 0
          %2888 = vperm.xlu0 %2887, %v2798
          %v2889 = vpop.permute.xlu0 %2888
          %2892 = vset.pattern.permute.xlu0 0
          %2893 = vperm.xlu0 %2892, %v2799
          %v2894 = vpop.permute.xlu0 %2893
          %2897 = vset.pattern.permute.xlu0 0
          %2898 = vperm.xlu0 %2897, %v2800
          %v2899 = vpop.permute.xlu0 %2898
          %2902 = vset.pattern.permute.xlu0 0
          %2903 = vperm.xlu0 %2902, %v2801
          %v2904 = vpop.permute.xlu0 %2903
          %2907 = vset.pattern.permute.xlu0 0
          %2908 = vperm.xlu0 %2907, %v2802
          %v2909 = vpop.permute.xlu0 %2908
          %2912 = vset.pattern.permute.xlu0 0
          %2913 = vperm.xlu0 %2912, %v2803
          %v2914 = vpop.permute.xlu0 %2913
          %2917 = vset.pattern.permute.xlu0 0
          %2918 = vperm.xlu0 %2917, %v2804
          %v2919 = vpop.permute.xlu0 %2918
          %2922 = vset.pattern.permute.xlu0 0
          %2923 = vperm.xlu0 %2922, %v2805
          %v2924 = vpop.permute.xlu0 %2923
          %2927 = vset.pattern.permute.xlu0 0
          %2928 = vperm.xlu0 %2927, %v2806
          %v2929 = vpop.permute.xlu0 %2928
          %2932 = vset.pattern.permute.xlu0 0
          %2933 = vperm.xlu0 %2932, %v2807
          %v2934 = vpop.permute.xlu0 %2933
          %2937 = vset.pattern.permute.xlu0 0
          %2938 = vperm.xlu0 %2937, %v2808
          %v2939 = vpop.permute.xlu0 %2938
          %2942 = vset.pattern.permute.xlu0 0
          %2943 = vperm.xlu0 %2942, %v2809
          %v2944 = vpop.permute.xlu0 %2943
          %2947 = vset.pattern.permute.xlu0 0
          %2948 = vperm.xlu0 %2947, %v2810
          %v2949 = vpop.permute.xlu0 %2948
          %2952 = vset.pattern.permute.xlu0 0
          %2953 = vperm.xlu0 %2952, %v2811
          %v2954 = vpop.permute.xlu0 %2953
          %2957 = vset.pattern.permute.xlu0 0
          %2958 = vperm.xlu0 %2957, %v2812
          %v2959 = vpop.permute.xlu0 %2958
          %2962 = vset.pattern.permute.xlu0 0
          %2963 = vperm.xlu0 %2962, %v2813
          %v2964 = vpop.permute.xlu0 %2963
          %2967 = vset.pattern.permute.xlu0 0
          %2968 = vperm.xlu0 %2967, %v2814
          %v2969 = vpop.permute.xlu0 %2968
          %2972 = vset.pattern.permute.xlu0 0
          %2973 = vperm.xlu0 %2972, %v2815
          %v2974 = vpop.permute.xlu0 %2973
          %2977 = vset.pattern.permute.xlu0 0
          %2978 = vperm.xlu0 %2977, %v2816
          %v2979 = vpop.permute.xlu0 %2978
          %2982 = vset.pattern.permute.xlu0 0
          %2983 = vperm.xlu0 %2982, %v2817
          %v2984 = vpop.permute.xlu0 %2983
          %2987 = vset.pattern.permute.xlu0 0
          %2988 = vperm.xlu0 %2987, %v2818
          %v2989 = vpop.permute.xlu0 %2988
          %2992 = vset.pattern.permute.xlu0 0
          %2993 = vperm.xlu0 %2992, %v2819
          %v2994 = vpop.permute.xlu0 %2993
          %2997 = vset.pattern.permute.xlu0 0
          %2998 = vperm.xlu0 %2997, %v2820
          %v2999 = vpop.permute.xlu0 %2998
          %3002 = vset.pattern.permute.xlu0 0
          %3003 = vperm.xlu0 %3002, %v2821
          %v3004 = vpop.permute.xlu0 %3003
          %3007 = vset.pattern.permute.xlu0 0
          %3008 = vperm.xlu0 %3007, %v2822
          %v3009 = vpop.permute.xlu0 %3008
          %3012 = vset.pattern.permute.xlu0 0
          %3013 = vperm.xlu0 %3012, %v2823
          %v3014 = vpop.permute.xlu0 %3013
          %3017 = vset.pattern.permute.xlu0 0
          %3018 = vperm.xlu0 %3017, %v2824
          %v3019 = vpop.permute.xlu0 %3018
          %3022 = vset.pattern.permute.xlu0 0
          %3023 = vperm.xlu0 %3022, %v2825
          %v3024 = vpop.permute.xlu0 %3023
          %3027 = vset.pattern.permute.xlu0 0
          %3028 = vperm.xlu0 %3027, %v2826
          %v3029 = vpop.permute.xlu0 %3028
          %3032 = vset.pattern.permute.xlu0 0
          %3033 = vperm.xlu0 %3032, %v2827
          %v3034 = vpop.permute.xlu0 %3033
          %3037 = vset.pattern.permute.xlu0 0
          %3038 = vperm.xlu0 %3037, %v2828
          %v3039 = vpop.permute.xlu0 %3038
          %3042 = vset.pattern.permute.xlu0 0
          %3043 = vperm.xlu0 %3042, %v2829
          %v3044 = vpop.permute.xlu0 %3043
          %3047 = vset.pattern.permute.xlu0 0
          %3048 = vperm.xlu0 %3047, %v2830
          %v3049 = vpop.permute.xlu0 %3048
          %3052 = vset.pattern.permute.xlu0 0
          %3053 = vperm.xlu0 %3052, %v2831
          %v3054 = vpop.permute.xlu0 %3053
          %3057 = vset.pattern.permute.xlu0 0
          %3058 = vperm.xlu0 %3057, %v2832
          %v3059 = vpop.permute.xlu0 %3058
          %3062 = vset.pattern.permute.xlu0 0
          %3063 = vperm.xlu0 %3062, %v2833
          %v3064 = vpop.permute.xlu0 %3063
          %3067 = vset.pattern.permute.xlu0 0
          %3068 = vperm.xlu0 %3067, %v2834
          %v3069 = vpop.permute.xlu0 %3068
          %3072 = vset.pattern.permute.xlu0 0
          %3073 = vperm.xlu0 %3072, %v2835
          %v3074 = vpop.permute.xlu0 %3073
          %3077 = vset.pattern.permute.xlu0 0
          %3078 = vperm.xlu0 %3077, %v2836
          %v3079 = vpop.permute.xlu0 %3078
          %3082 = vset.pattern.permute.xlu0 0
          %3083 = vperm.xlu0 %3082, %v2837
          %v3084 = vpop.permute.xlu0 %3083
          %3087 = vset.pattern.permute.xlu0 0
          %3088 = vperm.xlu0 %3087, %v2838
          %v3089 = vpop.permute.xlu0 %3088
          %3092 = vset.pattern.permute.xlu0 0
          %3093 = vperm.xlu0 %3092, %v2839
          %v3094 = vpop.permute.xlu0 %3093
          %3097 = vset.pattern.permute.xlu0 0
          %3098 = vperm.xlu0 %3097, %v2840
          %v3099 = vpop.permute.xlu0 %3098
          %3102 = vset.pattern.permute.xlu0 0
          %3103 = vperm.xlu0 %3102, %v2841
          %v3104 = vpop.permute.xlu0 %3103
          %3107 = vset.pattern.permute.xlu0 0
          %3108 = vperm.xlu0 %3107, %v2842
          %v3109 = vpop.permute.xlu0 %3108
          %3112 = vset.pattern.permute.xlu0 0
          %3113 = vperm.xlu0 %3112, %v2843
          %v3114 = vpop.permute.xlu0 %3113
          %3117 = vset.pattern.permute.xlu0 0
          %3118 = vperm.xlu0 %3117, %v2844
          %v3119 = vpop.permute.xlu0 %3118
          %3122 = vset.pattern.permute.xlu0 0
          %3123 = vperm.xlu0 %3122, %v2845
          %v3124 = vpop.permute.xlu0 %3123
          %3127 = vset.pattern.permute.xlu0 0
          %3128 = vperm.xlu0 %3127, %v2846
          %v3129 = vpop.permute.xlu0 %3128
          %3132 = vset.pattern.permute.xlu0 0
          %3133 = vperm.xlu0 %3132, %v2847
          %v3134 = vpop.permute.xlu0 %3133
          %3137 = vset.pattern.permute.xlu0 0
          %3138 = vperm.xlu0 %3137, %v2848
          %v3139 = vpop.permute.xlu0 %3138
          %3142 = vset.pattern.permute.xlu0 0
          %3143 = vperm.xlu0 %3142, %v2849
          %v3144 = vpop.permute.xlu0 %3143
          %3147 = vset.pattern.permute.xlu0 0
          %3148 = vperm.xlu0 %3147, %v2850
          %v3149 = vpop.permute.xlu0 %3148
          %3152 = vset.pattern.permute.xlu0 0
          %3153 = vperm.xlu0 %3152, %v2851
          %v3154 = vpop.permute.xlu0 %3153
          %3157 = vset.pattern.permute.xlu0 0
          %3158 = vperm.xlu0 %3157, %v2852
          %v3159 = vpop.permute.xlu0 %3158
          %3162 = vset.pattern.permute.xlu0 0
          %3163 = vperm.xlu0 %3162, %v2853
          %v3164 = vpop.permute.xlu0 %3163
          %3167 = vset.pattern.permute.xlu0 0
          %3168 = vperm.xlu0 %3167, %v2854
          %v3169 = vpop.permute.xlu0 %3168
          %3172 = vset.pattern.permute.xlu0 0
          %3173 = vperm.xlu0 %3172, %v2855
          %v3174 = vpop.permute.xlu0 %3173
          %v3176 = vmul.f32 %v2728, %v2859
          %v3177 = vmul.f32 %v2729, %v2864
          %v3178 = vmul.f32 %v2730, %v2869
          %v3179 = vmul.f32 %v2731, %v2874
          %v3180 = vmul.f32 %v2732, %v2879
          %v3181 = vmul.f32 %v2733, %v2884
          %v3182 = vmul.f32 %v2734, %v2889
          %v3183 = vmul.f32 %v2735, %v2894
          %v3184 = vmul.f32 %v2736, %v2899
          %v3185 = vmul.f32 %v2737, %v2904
          %v3186 = vmul.f32 %v2738, %v2909
          %v3187 = vmul.f32 %v2739, %v2914
          %v3188 = vmul.f32 %v2740, %v2919
          %v3189 = vmul.f32 %v2741, %v2924
          %v3190 = vmul.f32 %v2742, %v2929
          %v3191 = vmul.f32 %v2743, %v2934
          %v3192 = vmul.f32 %v2744, %v2939
          %v3193 = vmul.f32 %v2745, %v2944
          %v3194 = vmul.f32 %v2746, %v2949
          %v3195 = vmul.f32 %v2747, %v2954
          %v3196 = vmul.f32 %v2748, %v2959
          %v3197 = vmul.f32 %v2749, %v2964
          %v3198 = vmul.f32 %v2750, %v2969
          %v3199 = vmul.f32 %v2751, %v2974
          %v3200 = vmul.f32 %v2752, %v2979
          %v3201 = vmul.f32 %v2753, %v2984
          %v3202 = vmul.f32 %v2754, %v2989
          %v3203 = vmul.f32 %v2755, %v2994
          %v3204 = vmul.f32 %v2756, %v2999
          %v3205 = vmul.f32 %v2757, %v3004
          %v3206 = vmul.f32 %v2758, %v3009
          %v3207 = vmul.f32 %v2759, %v3014
          %v3208 = vmul.f32 %v2760, %v3019
          %v3209 = vmul.f32 %v2761, %v3024
          %v3210 = vmul.f32 %v2762, %v3029
          %v3211 = vmul.f32 %v2763, %v3034
          %v3212 = vmul.f32 %v2764, %v3039
          %v3213 = vmul.f32 %v2765, %v3044
          %v3214 = vmul.f32 %v2766, %v3049
          %v3215 = vmul.f32 %v2767, %v3054
          %v3216 = vmul.f32 %v2768, %v3059
          %v3217 = vmul.f32 %v2769, %v3064
          %v3218 = vmul.f32 %v2770, %v3069
          %v3219 = vmul.f32 %v2771, %v3074
          %v3220 = vmul.f32 %v2772, %v3079
          %v3221 = vmul.f32 %v2773, %v3084
          %v3222 = vmul.f32 %v2774, %v3089
          %v3223 = vmul.f32 %v2775, %v3094
          %v3224 = vmul.f32 %v2776, %v3099
          %v3225 = vmul.f32 %v2777, %v3104
          %v3226 = vmul.f32 %v2778, %v3109
          %v3227 = vmul.f32 %v2779, %v3114
          %v3228 = vmul.f32 %v2780, %v3119
          %v3229 = vmul.f32 %v2781, %v3124
          %v3230 = vmul.f32 %v2782, %v3129
          %v3231 = vmul.f32 %v2783, %v3134
          %v3232 = vmul.f32 %v2784, %v3139
          %v3233 = vmul.f32 %v2785, %v3144
          %v3234 = vmul.f32 %v2786, %v3149
          %v3235 = vmul.f32 %v2787, %v3154
          %v3236 = vmul.f32 %v2788, %v3159
          %v3237 = vmul.f32 %v2789, %v3164
          %v3238 = vmul.f32 %v2790, %v3169
          %v3239 = vmul.f32 %v2791, %v3174
          %v3240 = vpack.c.bf16 %v3177, %v3176
          %v3241 = vpack.c.bf16 %v3179, %v3178
          %v3242 = vpack.c.bf16 %v3181, %v3180
          %v3243 = vpack.c.bf16 %v3183, %v3182
          %v3244 = vpack.c.bf16 %v3185, %v3184
          %v3245 = vpack.c.bf16 %v3187, %v3186
          %v3246 = vpack.c.bf16 %v3189, %v3188
          %v3247 = vpack.c.bf16 %v3191, %v3190
          %v3248 = vpack.c.bf16 %v3193, %v3192
          %v3249 = vpack.c.bf16 %v3195, %v3194
          %v3250 = vpack.c.bf16 %v3197, %v3196
          %v3251 = vpack.c.bf16 %v3199, %v3198
          %v3252 = vpack.c.bf16 %v3201, %v3200
          %v3253 = vpack.c.bf16 %v3203, %v3202
          %v3254 = vpack.c.bf16 %v3205, %v3204
          %v3255 = vpack.c.bf16 %v3207, %v3206
          %v3256 = vpack.c.bf16 %v3209, %v3208
          %v3257 = vpack.c.bf16 %v3211, %v3210
          %v3258 = vpack.c.bf16 %v3213, %v3212
          %v3259 = vpack.c.bf16 %v3215, %v3214
          %v3260 = vpack.c.bf16 %v3217, %v3216
          %v3261 = vpack.c.bf16 %v3219, %v3218
          %v3262 = vpack.c.bf16 %v3221, %v3220
          %v3263 = vpack.c.bf16 %v3223, %v3222
          %v3264 = vpack.c.bf16 %v3225, %v3224
          %v3265 = vpack.c.bf16 %v3227, %v3226
          %v3266 = vpack.c.bf16 %v3229, %v3228
          %v3267 = vpack.c.bf16 %v3231, %v3230
          %v3268 = vpack.c.bf16 %v3233, %v3232
          %v3269 = vpack.c.bf16 %v3235, %v3234
          %v3270 = vpack.c.bf16 %v3237, %v3236
          %v3271 = vpack.c.bf16 %v3239, %v3238
          %v3272 = vld [vmem:[#allocation6] sm:$0xf]
          %v3273 = vld [vmem:[#allocation6 + $0x4] sm:$0xf]
          %v3274 = vld [vmem:[#allocation6 + $0x8] sm:$0xf]
          %v3275 = vld [vmem:[#allocation6 + $0xc] sm:$0xf]
          %v3276 = vld [vmem:[#allocation6 + $0x10] sm:$0xf]
          %v3277 = vld [vmem:[#allocation6 + $0x14] sm:$0xf]
          %v3278 = vld [vmem:[#allocation6 + $0x18] sm:$0xf]
          %v3279 = vld [vmem:[#allocation6 + $0x1c] sm:$0xf]
          %v3280 = vld [vmem:[#allocation6 + $0x20] sm:$0xf]
          %v3281 = vld [vmem:[#allocation6 + $0x24] sm:$0xf]
          %v3282 = vld [vmem:[#allocation6 + $0x28] sm:$0xf]
          %v3283 = vld [vmem:[#allocation6 + $0x2c] sm:$0xf]
          %v3284 = vld [vmem:[#allocation6 + $0x30] sm:$0xf]
          %v3285 = vld [vmem:[#allocation6 + $0x34] sm:$0xf]
          %v3286 = vld [vmem:[#allocation6 + $0x38] sm:$0xf]
          %v3287 = vld [vmem:[#allocation6 + $0x3c] sm:$0xf]
          %v3288 = vld [vmem:[%s403] sm:$0xf]
          %v3289 = vld [vmem:[%s403 + $0x4] sm:$0xf]
          %v3290 = vld [vmem:[%s403 + $0x8] sm:$0xf]
          %v3291 = vld [vmem:[%s403 + $0xc] sm:$0xf]
          %v3292 = vld [vmem:[%s403 + $0x10] sm:$0xf]
          %v3293 = vld [vmem:[%s403 + $0x14] sm:$0xf]
          %v3294 = vld [vmem:[%s403 + $0x18] sm:$0xf]
          %v3295 = vld [vmem:[%s403 + $0x1c] sm:$0xf]
          %v3296 = vld [vmem:[%s403 + $0x20] sm:$0xf]
          %v3297 = vld [vmem:[%s403 + $0x24] sm:$0xf]
          %v3298 = vld [vmem:[%s403 + $0x28] sm:$0xf]
          %v3299 = vld [vmem:[%s403 + $0x2c] sm:$0xf]
          %v3300 = vld [vmem:[%s403 + $0x30] sm:$0xf]
          %v3301 = vld [vmem:[%s403 + $0x34] sm:$0xf]
          %v3302 = vld [vmem:[%s403 + $0x38] sm:$0xf]
          %v3303 = vld [vmem:[%s403 + $0x3c] sm:$0xf]
          %v3304 = vld [vmem:[%s403 + $0x40] sm:$0xf]
          %v3305 = vld [vmem:[%s403 + $0x44] sm:$0xf]
          %v3306 = vld [vmem:[%s403 + $0x48] sm:$0xf]
          %v3307 = vld [vmem:[%s403 + $0x4c] sm:$0xf]
          %v3308 = vld [vmem:[%s403 + $0x50] sm:$0xf]
          %v3309 = vld [vmem:[%s403 + $0x54] sm:$0xf]
          %v3310 = vld [vmem:[%s403 + $0x58] sm:$0xf]
          %v3311 = vld [vmem:[%s403 + $0x5c] sm:$0xf]
          %v3312 = vld [vmem:[%s403 + $0x60] sm:$0xf]
          %v3313 = vld [vmem:[%s403 + $0x64] sm:$0xf]
          %v3314 = vld [vmem:[%s403 + $0x68] sm:$0xf]
          %v3315 = vld [vmem:[%s403 + $0x6c] sm:$0xf]
          %v3316 = vld [vmem:[%s403 + $0x70] sm:$0xf]
          %v3317 = vld [vmem:[%s403 + $0x74] sm:$0xf]
          %v3318 = vld [vmem:[%s403 + $0x78] sm:$0xf]
          %v3319 = vld [vmem:[%s403 + $0x7c] sm:$0xf]
          %v3320 = vld [vmem:[%s403 + $0x80] sm:$0xf]
          %v3321 = vld [vmem:[%s403 + $0x84] sm:$0xf]
          %v3322 = vld [vmem:[%s403 + $0x88] sm:$0xf]
          %v3323 = vld [vmem:[%s403 + $0x8c] sm:$0xf]
          %v3324 = vld [vmem:[%s403 + $0x90] sm:$0xf]
          %v3325 = vld [vmem:[%s403 + $0x94] sm:$0xf]
          %v3326 = vld [vmem:[%s403 + $0x98] sm:$0xf]
          %v3327 = vld [vmem:[%s403 + $0x9c] sm:$0xf]
          %v3328 = vld [vmem:[%s403 + $0xa0] sm:$0xf]
          %v3329 = vld [vmem:[%s403 + $0xa4] sm:$0xf]
          %v3330 = vld [vmem:[%s403 + $0xa8] sm:$0xf]
          %v3331 = vld [vmem:[%s403 + $0xac] sm:$0xf]
          %v3332 = vld [vmem:[%s403 + $0xb0] sm:$0xf]
          %v3333 = vld [vmem:[%s403 + $0xb4] sm:$0xf]
          %v3334 = vld [vmem:[%s403 + $0xb8] sm:$0xf]
          %v3335 = vld [vmem:[%s403 + $0xbc] sm:$0xf]
          %v3336 = vld [vmem:[%s403 + $0xc0] sm:$0xf]
          %v3337 = vld [vmem:[%s403 + $0xc4] sm:$0xf]
          %v3338 = vld [vmem:[%s403 + $0xc8] sm:$0xf]
          %v3339 = vld [vmem:[%s403 + $0xcc] sm:$0xf]
          %v3340 = vld [vmem:[%s403 + $0xd0] sm:$0xf]
          %v3341 = vld [vmem:[%s403 + $0xd4] sm:$0xf]
          %v3342 = vld [vmem:[%s403 + $0xd8] sm:$0xf]
          %v3343 = vld [vmem:[%s403 + $0xdc] sm:$0xf]
          %v3344 = vld [vmem:[%s403 + $0xe0] sm:$0xf]
          %v3345 = vld [vmem:[%s403 + $0xe4] sm:$0xf]
          %v3346 = vld [vmem:[%s403 + $0xe8] sm:$0xf]
          %v3347 = vld [vmem:[%s403 + $0xec] sm:$0xf]
          %v3348 = vld [vmem:[%s403 + $0xf0] sm:$0xf]
          %v3349 = vld [vmem:[%s403 + $0xf4] sm:$0xf]
          %v3350 = vld [vmem:[%s403 + $0xf8] sm:$0xf]
          %v3351 = vld [vmem:[%s403 + $0xfc] sm:$0xf]
          %v3352 = vld [vmem:[#allocation8] sm:$0xf]
          %v3353 = vld [vmem:[#allocation8 + $0x4] sm:$0xf]
          %v3354 = vld [vmem:[#allocation8 + $0x8] sm:$0xf]
          %v3355 = vld [vmem:[#allocation8 + $0xc] sm:$0xf]
          %v3356 = vld [vmem:[#allocation8 + $0x10] sm:$0xf]
          %v3357 = vld [vmem:[#allocation8 + $0x14] sm:$0xf]
          %v3358 = vld [vmem:[#allocation8 + $0x18] sm:$0xf]
          %v3359 = vld [vmem:[#allocation8 + $0x1c] sm:$0xf]
          %v3360 = vld [vmem:[#allocation8 + $0x20] sm:$0xf]
          %v3361 = vld [vmem:[#allocation8 + $0x24] sm:$0xf]
          %v3362 = vld [vmem:[#allocation8 + $0x28] sm:$0xf]
          %v3363 = vld [vmem:[#allocation8 + $0x2c] sm:$0xf]
          %v3364 = vld [vmem:[#allocation8 + $0x30] sm:$0xf]
          %v3365 = vld [vmem:[#allocation8 + $0x34] sm:$0xf]
          %v3366 = vld [vmem:[#allocation8 + $0x38] sm:$0xf]
          %v3367 = vld [vmem:[#allocation8 + $0x3c] sm:$0xf]
          %v3432 = vunpack.c.l.b16 %v3288
          %v3433 = vunpack.c.l.b16 %v3289
          %v3434 = vunpack.c.l.b16 %v3290
          %v3435 = vunpack.c.l.b16 %v3291
          %v3436 = vunpack.c.l.b16 %v3292
          %v3437 = vunpack.c.l.b16 %v3293
          %v3438 = vunpack.c.l.b16 %v3294
          %v3439 = vunpack.c.l.b16 %v3295
          %v3440 = vunpack.c.l.b16 %v3296
          %v3441 = vunpack.c.l.b16 %v3297
          %v3442 = vunpack.c.l.b16 %v3298
          %v3443 = vunpack.c.l.b16 %v3299
          %v3444 = vunpack.c.l.b16 %v3300
          %v3445 = vunpack.c.l.b16 %v3301
          %v3446 = vunpack.c.l.b16 %v3302
          %v3447 = vunpack.c.l.b16 %v3303
          %v3448 = vunpack.c.l.b16 %v3304
          %v3449 = vunpack.c.l.b16 %v3305
          %v3450 = vunpack.c.l.b16 %v3306
          %v3451 = vunpack.c.l.b16 %v3307
          %v3452 = vunpack.c.l.b16 %v3308
          %v3453 = vunpack.c.l.b16 %v3309
          %v3454 = vunpack.c.l.b16 %v3310
          %v3455 = vunpack.c.l.b16 %v3311
          %v3456 = vunpack.c.l.b16 %v3312
          %v3457 = vunpack.c.l.b16 %v3313
          %v3458 = vunpack.c.l.b16 %v3314
          %v3459 = vunpack.c.l.b16 %v3315
          %v3460 = vunpack.c.l.b16 %v3316
          %v3461 = vunpack.c.l.b16 %v3317
          %v3462 = vunpack.c.l.b16 %v3318
          %v3463 = vunpack.c.l.b16 %v3319
          %v3464 = vunpack.c.l.b16 %v3320
          %v3465 = vunpack.c.l.b16 %v3321
          %v3466 = vunpack.c.l.b16 %v3322
          %v3467 = vunpack.c.l.b16 %v3323
          %v3468 = vunpack.c.l.b16 %v3324
          %v3469 = vunpack.c.l.b16 %v3325
          %v3470 = vunpack.c.l.b16 %v3326
          %v3471 = vunpack.c.l.b16 %v3327
          %v3472 = vunpack.c.l.b16 %v3328
          %v3473 = vunpack.c.l.b16 %v3329
          %v3474 = vunpack.c.l.b16 %v3330
          %v3475 = vunpack.c.l.b16 %v3331
          %v3476 = vunpack.c.l.b16 %v3332
          %v3477 = vunpack.c.l.b16 %v3333
          %v3478 = vunpack.c.l.b16 %v3334
          %v3479 = vunpack.c.l.b16 %v3335
          %v3480 = vunpack.c.l.b16 %v3336
          %v3481 = vunpack.c.l.b16 %v3337
          %v3482 = vunpack.c.l.b16 %v3338
          %v3483 = vunpack.c.l.b16 %v3339
          %v3484 = vunpack.c.l.b16 %v3340
          %v3485 = vunpack.c.l.b16 %v3341
          %v3486 = vunpack.c.l.b16 %v3342
          %v3487 = vunpack.c.l.b16 %v3343
          %v3488 = vunpack.c.l.b16 %v3344
          %v3489 = vunpack.c.l.b16 %v3345
          %v3490 = vunpack.c.l.b16 %v3346
          %v3491 = vunpack.c.l.b16 %v3347
          %v3492 = vunpack.c.l.b16 %v3348
          %v3493 = vunpack.c.l.b16 %v3349
          %v3494 = vunpack.c.l.b16 %v3350
          %v3495 = vunpack.c.l.b16 %v3351
          %v3496 = vpack.c.b16 %v3433, %v3432
          %v3497 = vpack.c.b16 %v3435, %v3434
          %v3498 = vpack.c.b16 %v3437, %v3436
          %v3499 = vpack.c.b16 %v3439, %v3438
          %v3500 = vpack.c.b16 %v3441, %v3440
          %v3501 = vpack.c.b16 %v3443, %v3442
          %v3502 = vpack.c.b16 %v3445, %v3444
          %v3503 = vpack.c.b16 %v3447, %v3446
          %v3504 = vpack.c.b16 %v3449, %v3448
          %v3505 = vpack.c.b16 %v3451, %v3450
          %v3506 = vpack.c.b16 %v3453, %v3452
          %v3507 = vpack.c.b16 %v3455, %v3454
          %v3508 = vpack.c.b16 %v3457, %v3456
          %v3509 = vpack.c.b16 %v3459, %v3458
          %v3510 = vpack.c.b16 %v3461, %v3460
          %v3511 = vpack.c.b16 %v3463, %v3462
          %v3512 = vpack.c.b16 %v3465, %v3464
          %v3513 = vpack.c.b16 %v3467, %v3466
          %v3514 = vpack.c.b16 %v3469, %v3468
          %v3515 = vpack.c.b16 %v3471, %v3470
          %v3516 = vpack.c.b16 %v3473, %v3472
          %v3517 = vpack.c.b16 %v3475, %v3474
          %v3518 = vpack.c.b16 %v3477, %v3476
          %v3519 = vpack.c.b16 %v3479, %v3478
          %v3520 = vpack.c.b16 %v3481, %v3480
          %v3521 = vpack.c.b16 %v3483, %v3482
          %v3522 = vpack.c.b16 %v3485, %v3484
          %v3523 = vpack.c.b16 %v3487, %v3486
          %v3524 = vpack.c.b16 %v3489, %v3488
          %v3525 = vpack.c.b16 %v3491, %v3490
          %v3526 = vpack.c.b16 %v3493, %v3492
          %v3527 = vpack.c.b16 %v3495, %v3494
          %v3576 = vunpack.c.l.b16 %v3352
          %v3577 = vunpack.c.l.b16 %v3353
          %v3578 = vunpack.c.l.b16 %v3354
          %v3579 = vunpack.c.l.b16 %v3355
          %v3580 = vunpack.c.l.b16 %v3356
          %v3581 = vunpack.c.l.b16 %v3357
          %v3582 = vunpack.c.l.b16 %v3358
          %v3583 = vunpack.c.l.b16 %v3359
          %v3584 = vunpack.c.l.b16 %v3360
          %v3585 = vunpack.c.l.b16 %v3361
          %v3586 = vunpack.c.l.b16 %v3362
          %v3587 = vunpack.c.l.b16 %v3363
          %v3588 = vunpack.c.l.b16 %v3364
          %v3589 = vunpack.c.l.b16 %v3365
          %v3590 = vunpack.c.l.b16 %v3366
          %v3591 = vunpack.c.l.b16 %v3367
          %v3592 = vpack.c.b16 %v3577, %v3576
          %v3593 = vpack.c.b16 %v3579, %v3578
          %v3594 = vpack.c.b16 %v3581, %v3580
          %v3595 = vpack.c.b16 %v3583, %v3582
          %v3596 = vpack.c.b16 %v3585, %v3584
          %v3597 = vpack.c.b16 %v3587, %v3586
          %v3598 = vpack.c.b16 %v3589, %v3588
          %v3599 = vpack.c.b16 %v3591, %v3590
          %3608 = vmatprep.subr.bf16.mxu0 0
          %3609 = vmatpush1.bf16.msra.mxu0 %v3592
          %3610 = vmatprep.subr.bf16.mxu0 0
          %3611 = vmatpush1.bf16.msra.mxu0 %v3593
          %3612 = vmatprep.subr.bf16.mxu0 0
          %3613 = vmatpush1.bf16.msra.mxu0 %v3594
          %3614 = vmatprep.subr.bf16.mxu0 0
          %3615 = vmatpush1.bf16.msra.mxu0 %v3595
          %3616 = vmatprep.subr.bf16.mxu0 0
          %3617 = vmatpush1.bf16.msra.mxu0 %v3596
          %3618 = vmatprep.subr.bf16.mxu0 0
          %3619 = vmatpush1.bf16.msra.mxu0 %v3597
          %3620 = vmatprep.subr.bf16.mxu0 0
          %3621 = vmatpush1.bf16.msra.mxu0 %v3598
          %3622 = vmatprep.subr.bf16.mxu0 0
          %3623 = vmatpush1.bf16.msra.mxu0 %v3599
          %3624 = vmatprep.subr.bf16.mxu0 0
          %3625 = vmatpush1.bf16.msra.mxu0 0
          %3626 = vmatprep.subr.bf16.mxu0 0
          %3627 = vmatpush1.bf16.msra.mxu0 0
          %3628 = vmatprep.subr.bf16.mxu0 0
          %3629 = vmatpush1.bf16.msra.mxu0 0
          %3630 = vmatprep.subr.bf16.mxu0 0
          %3631 = vmatpush1.bf16.msra.mxu0 0
          %3632 = vmatprep.subr.bf16.mxu0 0
          %3633 = vmatpush1.bf16.msra.mxu0 0
          %3634 = vmatprep.subr.bf16.mxu0 0
          %3635 = vmatpush1.bf16.msra.mxu0 0
          %3636 = vmatprep.subr.bf16.mxu0 0
          %3637 = vmatpush1.bf16.msra.mxu0 0
          %3638 = vmatprep.subr.bf16.mxu0 0
          %3639 = vmatpush1.bf16.msra.mxu0 0
          %3640 = vmatprep.mubr.bf16.mxu0 0
          %3641 = vmatmul.mubr.bf16.gmra.mrb[0].mxu0 %v3496
          %v3642 = vpop.f32.mrb[0].mxu0
          %v3643 = vadd.f32 0.0, %v3642
          %v3644 = vpop.f32.mrb[0].mxu0
          %v3645 = vpop.f32.mrb[0].mxu0
          %v3646 = vadd.f32 0.0, %v3645
          %v3647 = vpop.f32.mrb[0].mxu0
          %3648 = vmatprep.mubr.bf16.mxu0 0
          %3649 = vmatmul.mubr.bf16.gmra.mrb[0].mxu0 %v3497
          %v3650 = vpop.f32.mrb[0].mxu0
          %v3651 = vadd.f32 0.0, %v3650
          %v3652 = vpop.f32.mrb[0].mxu0
          %v3653 = vpop.f32.mrb[0].mxu0
          %v3654 = vadd.f32 0.0, %v3653
          %v3655 = vpop.f32.mrb[0].mxu0
          %3656 = vmatprep.mubr.bf16.mxu0 0
          %3657 = vmatmul.mubr.bf16.gmra.mrb[0].mxu0 %v3498
          %v3658 = vpop.f32.mrb[0].mxu0
          %v3659 = vadd.f32 0.0, %v3658
          %v3660 = vpop.f32.mrb[0].mxu0
          %v3661 = vpop.f32.mrb[0].mxu0
          %v3662 = vadd.f32 0.0, %v3661
          %v3663 = vpop.f32.mrb[0].mxu0
          %3664 = vmatprep.mubr.bf16.mxu0 0
          %3665 = vmatmul.mubr.bf16.gmra.mrb[0].mxu0 %v3499
          %v3666 = vpop.f32.mrb[0].mxu0
          %v3667 = vadd.f32 0.0, %v3666
          %v3668 = vpop.f32.mrb[0].mxu0
          %v3669 = vpop.f32.mrb[0].mxu0
          %v3670 = vadd.f32 0.0, %v3669
          %v3671 = vpop.f32.mrb[0].mxu0
          %3672 = vmatprep.mubr.bf16.mxu0 0
          %3673 = vmatmul.mubr.bf16.gmra.mrb[0].mxu0 %v3500
          %v3674 = vpop.f32.mrb[0].mxu0
          %v3675 = vadd.f32 0.0, %v3674
          %v3676 = vpop.f32.mrb[0].mxu0
          %v3677 = vpop.f32.mrb[0].mxu0
          %v3678 = vadd.f32 0.0, %v3677
          %v3679 = vpop.f32.mrb[0].mxu0
          %3680 = vmatprep.mubr.bf16.mxu0 0
          %3681 = vmatmul.mubr.bf16.gmra.mrb[0].mxu0 %v3501
          %v3682 = vpop.f32.mrb[0].mxu0
          %v3683 = vadd.f32 0.0, %v3682
          %v3684 = vpop.f32.mrb[0].mxu0
          %v3685 = vpop.f32.mrb[0].mxu0
          %v3686 = vadd.f32 0.0, %v3685
          %v3687 = vpop.f32.mrb[0].mxu0
          %3688 = vmatprep.mubr.bf16.mxu0 0
          %3689 = vmatmul.mubr.bf16.gmra.mrb[0].mxu0 %v3502
          %v3690 = vpop.f32.mrb[0].mxu0
          %v3691 = vadd.f32 0.0, %v3690
          %v3692 = vpop.f32.mrb[0].mxu0
          %v3693 = vpop.f32.mrb[0].mxu0
          %v3694 = vadd.f32 0.0, %v3693
          %v3695 = vpop.f32.mrb[0].mxu0
          %3696 = vmatprep.mubr.bf16.mxu0 0
          %3697 = vmatmul.mubr.bf16.gmra.mrb[0].mxu0 %v3503
          %v3698 = vpop.f32.mrb[0].mxu0
          %v3699 = vadd.f32 0.0, %v3698
          %v3700 = vpop.f32.mrb[0].mxu0
          %v3701 = vpop.f32.mrb[0].mxu0
          %v3702 = vadd.f32 0.0, %v3701
          %v3703 = vpop.f32.mrb[0].mxu0
          %3704 = vmatprep.mubr.bf16.mxu0 0
          %3705 = vmatmul.mubr.bf16.gmra.mrb[0].mxu0 %v3504
          %v3706 = vpop.f32.mrb[0].mxu0
          %v3707 = vadd.f32 0.0, %v3706
          %v3708 = vpop.f32.mrb[0].mxu0
          %v3709 = vpop.f32.mrb[0].mxu0
          %v3710 = vadd.f32 0.0, %v3709
          %v3711 = vpop.f32.mrb[0].mxu0
          %3712 = vmatprep.mubr.bf16.mxu0 0
          %3713 = vmatmul.mubr.bf16.gmra.mrb[0].mxu0 %v3505
          %v3714 = vpop.f32.mrb[0].mxu0
          %v3715 = vadd.f32 0.0, %v3714
          %v3716 = vpop.f32.mrb[0].mxu0
          %v3717 = vpop.f32.mrb[0].mxu0
          %v3718 = vadd.f32 0.0, %v3717
          %v3719 = vpop.f32.mrb[0].mxu0
          %3720 = vmatprep.mubr.bf16.mxu0 0
          %3721 = vmatmul.mubr.bf16.gmra.mrb[0].mxu0 %v3506
          %v3722 = vpop.f32.mrb[0].mxu0
          %v3723 = vadd.f32 0.0, %v3722
          %v3724 = vpop.f32.mrb[0].mxu0
          %v3725 = vpop.f32.mrb[0].mxu0
          %v3726 = vadd.f32 0.0, %v3725
          %v3727 = vpop.f32.mrb[0].mxu0
          %3728 = vmatprep.mubr.bf16.mxu0 0
          %3729 = vmatmul.mubr.bf16.gmra.mrb[0].mxu0 %v3507
          %v3730 = vpop.f32.mrb[0].mxu0
          %v3731 = vadd.f32 0.0, %v3730
          %v3732 = vpop.f32.mrb[0].mxu0
          %v3733 = vpop.f32.mrb[0].mxu0
          %v3734 = vadd.f32 0.0, %v3733
          %v3735 = vpop.f32.mrb[0].mxu0
          %3736 = vmatprep.mubr.bf16.mxu0 0
          %3737 = vmatmul.mubr.bf16.gmra.mrb[0].mxu0 %v3508
          %v3738 = vpop.f32.mrb[0].mxu0
          %v3739 = vadd.f32 0.0, %v3738
          %v3740 = vpop.f32.mrb[0].mxu0
          %v3741 = vpop.f32.mrb[0].mxu0
          %v3742 = vadd.f32 0.0, %v3741
          %v3743 = vpop.f32.mrb[0].mxu0
          %3744 = vmatprep.mubr.bf16.mxu0 0
          %3745 = vmatmul.mubr.bf16.gmra.mrb[0].mxu0 %v3509
          %v3746 = vpop.f32.mrb[0].mxu0
          %v3747 = vadd.f32 0.0, %v3746
          %v3748 = vpop.f32.mrb[0].mxu0
          %v3749 = vpop.f32.mrb[0].mxu0
          %v3750 = vadd.f32 0.0, %v3749
          %v3751 = vpop.f32.mrb[0].mxu0
          %3752 = vmatprep.mubr.bf16.mxu0 0
          %3753 = vmatmul.mubr.bf16.gmra.mrb[0].mxu0 %v3510
          %v3754 = vpop.f32.mrb[0].mxu0
          %v3755 = vadd.f32 0.0, %v3754
          %v3756 = vpop.f32.mrb[0].mxu0
          %v3757 = vpop.f32.mrb[0].mxu0
          %v3758 = vadd.f32 0.0, %v3757
          %v3759 = vpop.f32.mrb[0].mxu0
          %3760 = vmatprep.mubr.bf16.mxu0 0
          %3761 = vmatmul.mubr.bf16.gmra.mrb[0].mxu0 %v3511
          %v3762 = vpop.f32.mrb[0].mxu0
          %v3763 = vadd.f32 0.0, %v3762
          %v3764 = vpop.f32.mrb[0].mxu0
          %v3765 = vpop.f32.mrb[0].mxu0
          %v3766 = vadd.f32 0.0, %v3765
          %v3767 = vpop.f32.mrb[0].mxu0
          %3768 = vmatprep.mubr.bf16.mxu0 0
          %3769 = vmatmul.mubr.bf16.gmra.mrb[0].mxu0 %v3512
          %v3770 = vpop.f32.mrb[0].mxu0
          %v3771 = vadd.f32 0.0, %v3770
          %v3772 = vpop.f32.mrb[0].mxu0
          %v3773 = vpop.f32.mrb[0].mxu0
          %v3774 = vadd.f32 0.0, %v3773
          %v3775 = vpop.f32.mrb[0].mxu0
          %3776 = vmatprep.mubr.bf16.mxu0 0
          %3777 = vmatmul.mubr.bf16.gmra.mrb[0].mxu0 %v3513
          %v3778 = vpop.f32.mrb[0].mxu0
          %v3779 = vadd.f32 0.0, %v3778
          %v3780 = vpop.f32.mrb[0].mxu0
          %v3781 = vpop.f32.mrb[0].mxu0
          %v3782 = vadd.f32 0.0, %v3781
          %v3783 = vpop.f32.mrb[0].mxu0
          %3784 = vmatprep.mubr.bf16.mxu0 0
          %3785 = vmatmul.mubr.bf16.gmra.mrb[0].mxu0 %v3514
          %v3786 = vpop.f32.mrb[0].mxu0
          %v3787 = vadd.f32 0.0, %v3786
          %v3788 = vpop.f32.mrb[0].mxu0
          %v3789 = vpop.f32.mrb[0].mxu0
          %v3790 = vadd.f32 0.0, %v3789
          %v3791 = vpop.f32.mrb[0].mxu0
          %3792 = vmatprep.mubr.bf16.mxu0 0
          %3793 = vmatmul.mubr.bf16.gmra.mrb[0].mxu0 %v3515
          %v3794 = vpop.f32.mrb[0].mxu0
          %v3795 = vadd.f32 0.0, %v3794
          %v3796 = vpop.f32.mrb[0].mxu0
          %v3797 = vpop.f32.mrb[0].mxu0
          %v3798 = vadd.f32 0.0, %v3797
          %v3799 = vpop.f32.mrb[0].mxu0
          %3800 = vmatprep.mubr.bf16.mxu0 0
          %3801 = vmatmul.mubr.bf16.gmra.mrb[0].mxu0 %v3516
          %v3802 = vpop.f32.mrb[0].mxu0
          %v3803 = vadd.f32 0.0, %v3802
          %v3804 = vpop.f32.mrb[0].mxu0
          %v3805 = vpop.f32.mrb[0].mxu0
          %v3806 = vadd.f32 0.0, %v3805
          %v3807 = vpop.f32.mrb[0].mxu0
          %3808 = vmatprep.mubr.bf16.mxu0 0
          %3809 = vmatmul.mubr.bf16.gmra.mrb[0].mxu0 %v3517
          %v3810 = vpop.f32.mrb[0].mxu0
          %v3811 = vadd.f32 0.0, %v3810
          %v3812 = vpop.f32.mrb[0].mxu0
          %v3813 = vpop.f32.mrb[0].mxu0
          %v3814 = vadd.f32 0.0, %v3813
          %v3815 = vpop.f32.mrb[0].mxu0
          %3816 = vmatprep.mubr.bf16.mxu0 0
          %3817 = vmatmul.mubr.bf16.gmra.mrb[0].mxu0 %v3518
          %v3818 = vpop.f32.mrb[0].mxu0
          %v3819 = vadd.f32 0.0, %v3818
          %v3820 = vpop.f32.mrb[0].mxu0
          %v3821 = vpop.f32.mrb[0].mxu0
          %v3822 = vadd.f32 0.0, %v3821
          %v3823 = vpop.f32.mrb[0].mxu0
          %3824 = vmatprep.mubr.bf16.mxu0 0
          %3825 = vmatmul.mubr.bf16.gmra.mrb[0].mxu0 %v3519
          %v3826 = vpop.f32.mrb[0].mxu0
          %v3827 = vadd.f32 0.0, %v3826
          %v3828 = vpop.f32.mrb[0].mxu0
          %v3829 = vpop.f32.mrb[0].mxu0
          %v3830 = vadd.f32 0.0, %v3829
          %v3831 = vpop.f32.mrb[0].mxu0
          %3832 = vmatprep.mubr.bf16.mxu0 0
          %3833 = vmatmul.mubr.bf16.gmra.mrb[0].mxu0 %v3520
          %v3834 = vpop.f32.mrb[0].mxu0
          %v3835 = vadd.f32 0.0, %v3834
          %v3836 = vpop.f32.mrb[0].mxu0
          %v3837 = vpop.f32.mrb[0].mxu0
          %v3838 = vadd.f32 0.0, %v3837
          %v3839 = vpop.f32.mrb[0].mxu0
          %3840 = vmatprep.mubr.bf16.mxu0 0
          %3841 = vmatmul.mubr.bf16.gmra.mrb[0].mxu0 %v3521
          %v3842 = vpop.f32.mrb[0].mxu0
          %v3843 = vadd.f32 0.0, %v3842
          %v3844 = vpop.f32.mrb[0].mxu0
          %v3845 = vpop.f32.mrb[0].mxu0
          %v3846 = vadd.f32 0.0, %v3845
          %v3847 = vpop.f32.mrb[0].mxu0
          %3848 = vmatprep.mubr.bf16.mxu0 0
          %3849 = vmatmul.mubr.bf16.gmra.mrb[0].mxu0 %v3522
          %v3850 = vpop.f32.mrb[0].mxu0
          %v3851 = vadd.f32 0.0, %v3850
          %v3852 = vpop.f32.mrb[0].mxu0
          %v3853 = vpop.f32.mrb[0].mxu0
          %v3854 = vadd.f32 0.0, %v3853
          %v3855 = vpop.f32.mrb[0].mxu0
          %3856 = vmatprep.mubr.bf16.mxu0 0
          %3857 = vmatmul.mubr.bf16.gmra.mrb[0].mxu0 %v3523
          %v3858 = vpop.f32.mrb[0].mxu0
          %v3859 = vadd.f32 0.0, %v3858
          %v3860 = vpop.f32.mrb[0].mxu0
          %v3861 = vpop.f32.mrb[0].mxu0
          %v3862 = vadd.f32 0.0, %v3861
          %v3863 = vpop.f32.mrb[0].mxu0
          %3864 = vmatprep.mubr.bf16.mxu0 0
          %3865 = vmatmul.mubr.bf16.gmra.mrb[0].mxu0 %v3524
          %v3866 = vpop.f32.mrb[0].mxu0
          %v3867 = vadd.f32 0.0, %v3866
          %v3868 = vpop.f32.mrb[0].mxu0
          %v3869 = vpop.f32.mrb[0].mxu0
          %v3870 = vadd.f32 0.0, %v3869
          %v3871 = vpop.f32.mrb[0].mxu0
          %3872 = vmatprep.mubr.bf16.mxu0 0
          %3873 = vmatmul.mubr.bf16.gmra.mrb[0].mxu0 %v3525
          %v3874 = vpop.f32.mrb[0].mxu0
          %v3875 = vadd.f32 0.0, %v3874
          %v3876 = vpop.f32.mrb[0].mxu0
          %v3877 = vpop.f32.mrb[0].mxu0
          %v3878 = vadd.f32 0.0, %v3877
          %v3879 = vpop.f32.mrb[0].mxu0
          %3880 = vmatprep.mubr.bf16.mxu0 0
          %3881 = vmatmul.mubr.bf16.gmra.mrb[0].mxu0 %v3526
          %v3882 = vpop.f32.mrb[0].mxu0
          %v3883 = vadd.f32 0.0, %v3882
          %v3884 = vpop.f32.mrb[0].mxu0
          %v3885 = vpop.f32.mrb[0].mxu0
          %v3886 = vadd.f32 0.0, %v3885
          %v3887 = vpop.f32.mrb[0].mxu0
          %3888 = vmatprep.mubr.bf16.mxu0 0
          %3889 = vmatmul.mubr.bf16.gmra.mrb[0].mxu0 %v3527
          %v3890 = vpop.f32.mrb[0].mxu0
          %v3891 = vadd.f32 0.0, %v3890
          %v3892 = vpop.f32.mrb[0].mxu0
          %v3893 = vpop.f32.mrb[0].mxu0
          %v3894 = vadd.f32 0.0, %v3893
          %v3895 = vpop.f32.mrb[0].mxu0
          %3896 = vdwg.mxu0
          %v3913 = vunpack.c.l.b16 %v3272
          %v3914 = vunpack.c.l.b16 %v3273
          %v3915 = vunpack.c.l.b16 %v3274
          %v3916 = vunpack.c.l.b16 %v3275
          %v3917 = vunpack.c.l.b16 %v3276
          %v3918 = vunpack.c.l.b16 %v3277
          %v3919 = vunpack.c.l.b16 %v3278
          %v3920 = vunpack.c.l.b16 %v3279
          %v3921 = vunpack.c.l.b16 %v3280
          %v3922 = vunpack.c.l.b16 %v3281
          %v3923 = vunpack.c.l.b16 %v3282
          %v3924 = vunpack.c.l.b16 %v3283
          %v3925 = vunpack.c.l.b16 %v3284
          %v3926 = vunpack.c.l.b16 %v3285
          %v3927 = vunpack.c.l.b16 %v3286
          %v3928 = vunpack.c.l.b16 %v3287
          %v3929 = vpack.c.b16 %v3914, %v3913
          %v3930 = vpack.c.b16 %v3916, %v3915
          %v3931 = vpack.c.b16 %v3918, %v3917
          %v3932 = vpack.c.b16 %v3920, %v3919
          %v3933 = vpack.c.b16 %v3922, %v3921
          %v3934 = vpack.c.b16 %v3924, %v3923
          %v3935 = vpack.c.b16 %v3926, %v3925
          %v3936 = vpack.c.b16 %v3928, %v3927
          %3945 = vmatprep.subr.bf16.mxu0 0
          %3946 = vmatpush1.bf16.msra.mxu0 %v3929
          %3947 = vmatprep.subr.bf16.mxu0 0
          %3948 = vmatpush1.bf16.msra.mxu0 %v3930
          %3949 = vmatprep.subr.bf16.mxu0 0
          %3950 = vmatpush1.bf16.msra.mxu0 %v3931
          %3951 = vmatprep.subr.bf16.mxu0 0
          %3952 = vmatpush1.bf16.msra.mxu0 %v3932
          %3953 = vmatprep.subr.bf16.mxu0 0
          %3954 = vmatpush1.bf16.msra.mxu0 %v3933
          %3955 = vmatprep.subr.bf16.mxu0 0
          %3956 = vmatpush1.bf16.msra.mxu0 %v3934
          %3957 = vmatprep.subr.bf16.mxu0 0
          %3958 = vmatpush1.bf16.msra.mxu0 %v3935
          %3959 = vmatprep.subr.bf16.mxu0 0
          %3960 = vmatpush1.bf16.msra.mxu0 %v3936
          %3961 = vmatprep.subr.bf16.mxu0 0
          %3962 = vmatpush1.bf16.msra.mxu0 0
          %3963 = vmatprep.subr.bf16.mxu0 0
          %3964 = vmatpush1.bf16.msra.mxu0 0
          %3965 = vmatprep.subr.bf16.mxu0 0
          %3966 = vmatpush1.bf16.msra.mxu0 0
          %3967 = vmatprep.subr.bf16.mxu0 0
          %3968 = vmatpush1.bf16.msra.mxu0 0
          %3969 = vmatprep.subr.bf16.mxu0 0
          %3970 = vmatpush1.bf16.msra.mxu0 0
          %3971 = vmatprep.subr.bf16.mxu0 0
          %3972 = vmatpush1.bf16.msra.mxu0 0
          %3973 = vmatprep.subr.bf16.mxu0 0
          %3974 = vmatpush1.bf16.msra.mxu0 0
          %3975 = vmatprep.subr.bf16.mxu0 0
          %3976 = vmatpush1.bf16.msra.mxu0 0
          %3977 = vmatprep.mubr.bf16.mxu0 0
          %3978 = vmatmul.mubr.bf16.gmra.mrb[0].mxu0 %v3240
          %v3979 = vpop.f32.mrb[0].mxu0
          %v3980 = vadd.f32 %v3643, %v3979
          %v3981 = vpop.f32.mrb[0].mxu0
          %v3982 = vpop.f32.mrb[0].mxu0
          %v3983 = vadd.f32 %v3646, %v3982
          %v3984 = vpop.f32.mrb[0].mxu0
          %3985 = vmatprep.mubr.bf16.mxu0 0
          %3986 = vmatmul.mubr.bf16.gmra.mrb[0].mxu0 %v3241
          %v3987 = vpop.f32.mrb[0].mxu0
          %v3988 = vadd.f32 %v3651, %v3987
          %v3989 = vpop.f32.mrb[0].mxu0
          %v3990 = vpop.f32.mrb[0].mxu0
          %v3991 = vadd.f32 %v3654, %v3990
          %v3992 = vpop.f32.mrb[0].mxu0
          %3993 = vmatprep.mubr.bf16.mxu0 0
          %3994 = vmatmul.mubr.bf16.gmra.mrb[0].mxu0 %v3242
          %v3995 = vpop.f32.mrb[0].mxu0
          %v3996 = vadd.f32 %v3659, %v3995
          %v3997 = vpop.f32.mrb[0].mxu0
          %v3998 = vpop.f32.mrb[0].mxu0
          %v3999 = vadd.f32 %v3662, %v3998
          %v4000 = vpop.f32.mrb[0].mxu0
          %4001 = vmatprep.mubr.bf16.mxu0 0
          %4002 = vmatmul.mubr.bf16.gmra.mrb[0].mxu0 %v3243
          %v4003 = vpop.f32.mrb[0].mxu0
          %v4004 = vadd.f32 %v3667, %v4003
          %v4005 = vpop.f32.mrb[0].mxu0
          %v4006 = vpop.f32.mrb[0].mxu0
          %v4007 = vadd.f32 %v3670, %v4006
          %v4008 = vpop.f32.mrb[0].mxu0
          %4009 = vmatprep.mubr.bf16.mxu0 0
          %4010 = vmatmul.mubr.bf16.gmra.mrb[0].mxu0 %v3244
          %v4011 = vpop.f32.mrb[0].mxu0
          %v4012 = vadd.f32 %v3675, %v4011
          %v4013 = vpop.f32.mrb[0].mxu0
          %v4014 = vpop.f32.mrb[0].mxu0
          %v4015 = vadd.f32 %v3678, %v4014
          %v4016 = vpop.f32.mrb[0].mxu0
          %4017 = vmatprep.mubr.bf16.mxu0 0
          %4018 = vmatmul.mubr.bf16.gmra.mrb[0].mxu0 %v3245
          %v4019 = vpop.f32.mrb[0].mxu0
          %v4020 = vadd.f32 %v3683, %v4019
          %v4021 = vpop.f32.mrb[0].mxu0
          %v4022 = vpop.f32.mrb[0].mxu0
          %v4023 = vadd.f32 %v3686, %v4022
          %v4024 = vpop.f32.mrb[0].mxu0
          %4025 = vmatprep.mubr.bf16.mxu0 0
          %4026 = vmatmul.mubr.bf16.gmra.mrb[0].mxu0 %v3246
          %v4027 = vpop.f32.mrb[0].mxu0
          %v4028 = vadd.f32 %v3691, %v4027
          %v4029 = vpop.f32.mrb[0].mxu0
          %v4030 = vpop.f32.mrb[0].mxu0
          %v4031 = vadd.f32 %v3694, %v4030
          %v4032 = vpop.f32.mrb[0].mxu0
          %4033 = vmatprep.mubr.bf16.mxu0 0
          %4034 = vmatmul.mubr.bf16.gmra.mrb[0].mxu0 %v3247
          %v4035 = vpop.f32.mrb[0].mxu0
          %v4036 = vadd.f32 %v3699, %v4035
          %v4037 = vpop.f32.mrb[0].mxu0
          %v4038 = vpop.f32.mrb[0].mxu0
          %v4039 = vadd.f32 %v3702, %v4038
          %v4040 = vpop.f32.mrb[0].mxu0
          %4041 = vmatprep.mubr.bf16.mxu0 0
          %4042 = vmatmul.mubr.bf16.gmra.mrb[0].mxu0 %v3248
          %v4043 = vpop.f32.mrb[0].mxu0
          %v4044 = vadd.f32 %v3707, %v4043
          %v4045 = vpop.f32.mrb[0].mxu0
          %v4046 = vpop.f32.mrb[0].mxu0
          %v4047 = vadd.f32 %v3710, %v4046
          %v4048 = vpop.f32.mrb[0].mxu0
          %4049 = vmatprep.mubr.bf16.mxu0 0
          %4050 = vmatmul.mubr.bf16.gmra.mrb[0].mxu0 %v3249
          %v4051 = vpop.f32.mrb[0].mxu0
          %v4052 = vadd.f32 %v3715, %v4051
          %v4053 = vpop.f32.mrb[0].mxu0
          %v4054 = vpop.f32.mrb[0].mxu0
          %v4055 = vadd.f32 %v3718, %v4054
          %v4056 = vpop.f32.mrb[0].mxu0
          %4057 = vmatprep.mubr.bf16.mxu0 0
          %4058 = vmatmul.mubr.bf16.gmra.mrb[0].mxu0 %v3250
          %v4059 = vpop.f32.mrb[0].mxu0
          %v4060 = vadd.f32 %v3723, %v4059
          %v4061 = vpop.f32.mrb[0].mxu0
          %v4062 = vpop.f32.mrb[0].mxu0
          %v4063 = vadd.f32 %v3726, %v4062
          %v4064 = vpop.f32.mrb[0].mxu0
          %4065 = vmatprep.mubr.bf16.mxu0 0
          %4066 = vmatmul.mubr.bf16.gmra.mrb[0].mxu0 %v3251
          %v4067 = vpop.f32.mrb[0].mxu0
          %v4068 = vadd.f32 %v3731, %v4067
          %v4069 = vpop.f32.mrb[0].mxu0
          %v4070 = vpop.f32.mrb[0].mxu0
          %v4071 = vadd.f32 %v3734, %v4070
          %v4072 = vpop.f32.mrb[0].mxu0
          %4073 = vmatprep.mubr.bf16.mxu0 0
          %4074 = vmatmul.mubr.bf16.gmra.mrb[0].mxu0 %v3252
          %v4075 = vpop.f32.mrb[0].mxu0
          %v4076 = vadd.f32 %v3739, %v4075
          %v4077 = vpop.f32.mrb[0].mxu0
          %v4078 = vpop.f32.mrb[0].mxu0
          %v4079 = vadd.f32 %v3742, %v4078
          %v4080 = vpop.f32.mrb[0].mxu0
          %4081 = vmatprep.mubr.bf16.mxu0 0
          %4082 = vmatmul.mubr.bf16.gmra.mrb[0].mxu0 %v3253
          %v4083 = vpop.f32.mrb[0].mxu0
          %v4084 = vadd.f32 %v3747, %v4083
          %v4085 = vpop.f32.mrb[0].mxu0
          %v4086 = vpop.f32.mrb[0].mxu0
          %v4087 = vadd.f32 %v3750, %v4086
          %v4088 = vpop.f32.mrb[0].mxu0
          %4089 = vmatprep.mubr.bf16.mxu0 0
          %4090 = vmatmul.mubr.bf16.gmra.mrb[0].mxu0 %v3254
          %v4091 = vpop.f32.mrb[0].mxu0
          %v4092 = vadd.f32 %v3755, %v4091
          %v4093 = vpop.f32.mrb[0].mxu0
          %v4094 = vpop.f32.mrb[0].mxu0
          %v4095 = vadd.f32 %v3758, %v4094
          %v4096 = vpop.f32.mrb[0].mxu0
          %4097 = vmatprep.mubr.bf16.mxu0 0
          %4098 = vmatmul.mubr.bf16.gmra.mrb[0].mxu0 %v3255
          %v4099 = vpop.f32.mrb[0].mxu0
          %v4100 = vadd.f32 %v3763, %v4099
          %v4101 = vpop.f32.mrb[0].mxu0
          %v4102 = vpop.f32.mrb[0].mxu0
          %v4103 = vadd.f32 %v3766, %v4102
          %v4104 = vpop.f32.mrb[0].mxu0
          %4105 = vmatprep.mubr.bf16.mxu0 0
          %4106 = vmatmul.mubr.bf16.gmra.mrb[0].mxu0 %v3256
          %v4107 = vpop.f32.mrb[0].mxu0
          %v4108 = vadd.f32 %v3771, %v4107
          %v4109 = vpop.f32.mrb[0].mxu0
          %v4110 = vpop.f32.mrb[0].mxu0
          %v4111 = vadd.f32 %v3774, %v4110
          %v4112 = vpop.f32.mrb[0].mxu0
          %4113 = vmatprep.mubr.bf16.mxu0 0
          %4114 = vmatmul.mubr.bf16.gmra.mrb[0].mxu0 %v3257
          %v4115 = vpop.f32.mrb[0].mxu0
          %v4116 = vadd.f32 %v3779, %v4115
          %v4117 = vpop.f32.mrb[0].mxu0
          %v4118 = vpop.f32.mrb[0].mxu0
          %v4119 = vadd.f32 %v3782, %v4118
          %v4120 = vpop.f32.mrb[0].mxu0
          %4121 = vmatprep.mubr.bf16.mxu0 0
          %4122 = vmatmul.mubr.bf16.gmra.mrb[0].mxu0 %v3258
          %v4123 = vpop.f32.mrb[0].mxu0
          %v4124 = vadd.f32 %v3787, %v4123
          %v4125 = vpop.f32.mrb[0].mxu0
          %v4126 = vpop.f32.mrb[0].mxu0
          %v4127 = vadd.f32 %v3790, %v4126
          %v4128 = vpop.f32.mrb[0].mxu0
          %4129 = vmatprep.mubr.bf16.mxu0 0
          %4130 = vmatmul.mubr.bf16.gmra.mrb[0].mxu0 %v3259
          %v4131 = vpop.f32.mrb[0].mxu0
          %v4132 = vadd.f32 %v3795, %v4131
          %v4133 = vpop.f32.mrb[0].mxu0
          %v4134 = vpop.f32.mrb[0].mxu0
          %v4135 = vadd.f32 %v3798, %v4134
          %v4136 = vpop.f32.mrb[0].mxu0
          %4137 = vmatprep.mubr.bf16.mxu0 0
          %4138 = vmatmul.mubr.bf16.gmra.mrb[0].mxu0 %v3260
          %v4139 = vpop.f32.mrb[0].mxu0
          %v4140 = vadd.f32 %v3803, %v4139
          %v4141 = vpop.f32.mrb[0].mxu0
          %v4142 = vpop.f32.mrb[0].mxu0
          %v4143 = vadd.f32 %v3806, %v4142
          %v4144 = vpop.f32.mrb[0].mxu0
          %4145 = vmatprep.mubr.bf16.mxu0 0
          %4146 = vmatmul.mubr.bf16.gmra.mrb[0].mxu0 %v3261
          %v4147 = vpop.f32.mrb[0].mxu0
          %v4148 = vadd.f32 %v3811, %v4147
          %v4149 = vpop.f32.mrb[0].mxu0
          %v4150 = vpop.f32.mrb[0].mxu0
          %v4151 = vadd.f32 %v3814, %v4150
          %v4152 = vpop.f32.mrb[0].mxu0
          %4153 = vmatprep.mubr.bf16.mxu0 0
          %4154 = vmatmul.mubr.bf16.gmra.mrb[0].mxu0 %v3262
          %v4155 = vpop.f32.mrb[0].mxu0
          %v4156 = vadd.f32 %v3819, %v4155
          %v4157 = vpop.f32.mrb[0].mxu0
          %v4158 = vpop.f32.mrb[0].mxu0
          %v4159 = vadd.f32 %v3822, %v4158
          %v4160 = vpop.f32.mrb[0].mxu0
          %4161 = vmatprep.mubr.bf16.mxu0 0
          %4162 = vmatmul.mubr.bf16.gmra.mrb[0].mxu0 %v3263
          %v4163 = vpop.f32.mrb[0].mxu0
          %v4164 = vadd.f32 %v3827, %v4163
          %v4165 = vpop.f32.mrb[0].mxu0
          %v4166 = vpop.f32.mrb[0].mxu0
          %v4167 = vadd.f32 %v3830, %v4166
          %v4168 = vpop.f32.mrb[0].mxu0
          %4169 = vmatprep.mubr.bf16.mxu0 0
          %4170 = vmatmul.mubr.bf16.gmra.mrb[0].mxu0 %v3264
          %v4171 = vpop.f32.mrb[0].mxu0
          %v4172 = vadd.f32 %v3835, %v4171
          %v4173 = vpop.f32.mrb[0].mxu0
          %v4174 = vpop.f32.mrb[0].mxu0
          %v4175 = vadd.f32 %v3838, %v4174
          %v4176 = vpop.f32.mrb[0].mxu0
          %4177 = vmatprep.mubr.bf16.mxu0 0
          %4178 = vmatmul.mubr.bf16.gmra.mrb[0].mxu0 %v3265
          %v4179 = vpop.f32.mrb[0].mxu0
          %v4180 = vadd.f32 %v3843, %v4179
          %v4181 = vpop.f32.mrb[0].mxu0
          %v4182 = vpop.f32.mrb[0].mxu0
          %v4183 = vadd.f32 %v3846, %v4182
          %v4184 = vpop.f32.mrb[0].mxu0
          %4185 = vmatprep.mubr.bf16.mxu0 0
          %4186 = vmatmul.mubr.bf16.gmra.mrb[0].mxu0 %v3266
          %v4187 = vpop.f32.mrb[0].mxu0
          %v4188 = vadd.f32 %v3851, %v4187
          %v4189 = vpop.f32.mrb[0].mxu0
          %v4190 = vpop.f32.mrb[0].mxu0
          %v4191 = vadd.f32 %v3854, %v4190
          %v4192 = vpop.f32.mrb[0].mxu0
          %4193 = vmatprep.mubr.bf16.mxu0 0
          %4194 = vmatmul.mubr.bf16.gmra.mrb[0].mxu0 %v3267
          %v4195 = vpop.f32.mrb[0].mxu0
          %v4196 = vadd.f32 %v3859, %v4195
          %v4197 = vpop.f32.mrb[0].mxu0
          %v4198 = vpop.f32.mrb[0].mxu0
          %v4199 = vadd.f32 %v3862, %v4198
          %v4200 = vpop.f32.mrb[0].mxu0
          %4201 = vmatprep.mubr.bf16.mxu0 0
          %4202 = vmatmul.mubr.bf16.gmra.mrb[0].mxu0 %v3268
          %v4203 = vpop.f32.mrb[0].mxu0
          %v4204 = vadd.f32 %v3867, %v4203
          %v4205 = vpop.f32.mrb[0].mxu0
          %v4206 = vpop.f32.mrb[0].mxu0
          %v4207 = vadd.f32 %v3870, %v4206
          %v4208 = vpop.f32.mrb[0].mxu0
          %4209 = vmatprep.mubr.bf16.mxu0 0
          %4210 = vmatmul.mubr.bf16.gmra.mrb[0].mxu0 %v3269
          %v4211 = vpop.f32.mrb[0].mxu0
          %v4212 = vadd.f32 %v3875, %v4211
          %v4213 = vpop.f32.mrb[0].mxu0
          %v4214 = vpop.f32.mrb[0].mxu0
          %v4215 = vadd.f32 %v3878, %v4214
          %v4216 = vpop.f32.mrb[0].mxu0
          %4217 = vmatprep.mubr.bf16.mxu0 0
          %4218 = vmatmul.mubr.bf16.gmra.mrb[0].mxu0 %v3270
          %v4219 = vpop.f32.mrb[0].mxu0
          %v4220 = vadd.f32 %v3883, %v4219
          %v4221 = vpop.f32.mrb[0].mxu0
          %v4222 = vpop.f32.mrb[0].mxu0
          %v4223 = vadd.f32 %v3886, %v4222
          %v4224 = vpop.f32.mrb[0].mxu0
          %4225 = vmatprep.mubr.bf16.mxu0 0
          %4226 = vmatmul.mubr.bf16.gmra.mrb[0].mxu0 %v3271
          %v4227 = vpop.f32.mrb[0].mxu0
          %v4228 = vadd.f32 %v3891, %v4227
          %v4229 = vpop.f32.mrb[0].mxu0
          %v4230 = vpop.f32.mrb[0].mxu0
          %v4231 = vadd.f32 %v3894, %v4230
          %v4232 = vpop.f32.mrb[0].mxu0
          %4233 = vdwg.mxu0
          %v4234 = vld [vmem:[%s6] sm:$0x1]
          %v4236 = vlaneseq
          %v4237 = vshrl.u32 %v4236, 7
          %v4238 = vsub.s32 0, %v4237
          %v4239 = vrot.slane %v4234, %v4238
          %v4241 = vadd.f32 %v3980, %v4239
          %v4242 = vadd.f32 %v3983, %v4239
          %v4243 = vadd.f32 %v3988, %v4239
          %v4244 = vadd.f32 %v3991, %v4239
          %v4245 = vadd.f32 %v3996, %v4239
          %v4246 = vadd.f32 %v3999, %v4239
          %v4247 = vadd.f32 %v4004, %v4239
          %v4248 = vadd.f32 %v4007, %v4239
          %v4249 = vadd.f32 %v4012, %v4239
          %v4250 = vadd.f32 %v4015, %v4239
          %v4251 = vadd.f32 %v4020, %v4239
          %v4252 = vadd.f32 %v4023, %v4239
          %v4253 = vadd.f32 %v4028, %v4239
          %v4254 = vadd.f32 %v4031, %v4239
          %v4255 = vadd.f32 %v4036, %v4239
          %v4256 = vadd.f32 %v4039, %v4239
          %v4257 = vadd.f32 %v4044, %v4239
          %v4258 = vadd.f32 %v4047, %v4239
          %v4259 = vadd.f32 %v4052, %v4239
          %v4260 = vadd.f32 %v4055, %v4239
          %v4261 = vadd.f32 %v4060, %v4239
          %v4262 = vadd.f32 %v4063, %v4239
          %v4263 = vadd.f32 %v4068, %v4239
          %v4264 = vadd.f32 %v4071, %v4239
          %v4265 = vadd.f32 %v4076, %v4239
          %v4266 = vadd.f32 %v4079, %v4239
          %v4267 = vadd.f32 %v4084, %v4239
          %v4268 = vadd.f32 %v4087, %v4239
          %v4269 = vadd.f32 %v4092, %v4239
          %v4270 = vadd.f32 %v4095, %v4239
          %v4271 = vadd.f32 %v4100, %v4239
          %v4272 = vadd.f32 %v4103, %v4239
          %v4273 = vadd.f32 %v4108, %v4239
          %v4274 = vadd.f32 %v4111, %v4239
          %v4275 = vadd.f32 %v4116, %v4239
          %v4276 = vadd.f32 %v4119, %v4239
          %v4277 = vadd.f32 %v4124, %v4239
          %v4278 = vadd.f32 %v4127, %v4239
          %v4279 = vadd.f32 %v4132, %v4239
          %v4280 = vadd.f32 %v4135, %v4239
          %v4281 = vadd.f32 %v4140, %v4239
          %v4282 = vadd.f32 %v4143, %v4239
          %v4283 = vadd.f32 %v4148, %v4239
          %v4284 = vadd.f32 %v4151, %v4239
          %v4285 = vadd.f32 %v4156, %v4239
          %v4286 = vadd.f32 %v4159, %v4239
          %v4287 = vadd.f32 %v4164, %v4239
          %v4288 = vadd.f32 %v4167, %v4239
          %v4289 = vadd.f32 %v4172, %v4239
          %v4290 = vadd.f32 %v4175, %v4239
          %v4291 = vadd.f32 %v4180, %v4239
          %v4292 = vadd.f32 %v4183, %v4239
          %v4293 = vadd.f32 %v4188, %v4239
          %v4294 = vadd.f32 %v4191, %v4239
          %v4295 = vadd.f32 %v4196, %v4239
          %v4296 = vadd.f32 %v4199, %v4239
          %v4297 = vadd.f32 %v4204, %v4239
          %v4298 = vadd.f32 %v4207, %v4239
          %v4299 = vadd.f32 %v4212, %v4239
          %v4300 = vadd.f32 %v4215, %v4239
          %v4301 = vadd.f32 %v4220, %v4239
          %v4302 = vadd.f32 %v4223, %v4239
          %v4303 = vadd.f32 %v4228, %v4239
          %v4304 = vadd.f32 %v4231, %v4239
          %v4305 = vmax.f32 %v4241, 0.0
          %v4306 = vmax.f32 %v4242, 0.0
          %v4307 = vmax.f32 %v4243, 0.0
          %v4308 = vmax.f32 %v4244, 0.0
          %v4309 = vmax.f32 %v4245, 0.0
          %v4310 = vmax.f32 %v4246, 0.0
          %v4311 = vmax.f32 %v4247, 0.0
          %v4312 = vmax.f32 %v4248, 0.0
          %v4313 = vmax.f32 %v4249, 0.0
          %v4314 = vmax.f32 %v4250, 0.0
          %v4315 = vmax.f32 %v4251, 0.0
          %v4316 = vmax.f32 %v4252, 0.0
          %v4317 = vmax.f32 %v4253, 0.0
          %v4318 = vmax.f32 %v4254, 0.0
          %v4319 = vmax.f32 %v4255, 0.0
          %v4320 = vmax.f32 %v4256, 0.0
          %v4321 = vmax.f32 %v4257, 0.0
          %v4322 = vmax.f32 %v4258, 0.0
          %v4323 = vmax.f32 %v4259, 0.0
          %v4324 = vmax.f32 %v4260, 0.0
          %v4325 = vmax.f32 %v4261, 0.0
          %v4326 = vmax.f32 %v4262, 0.0
          %v4327 = vmax.f32 %v4263, 0.0
          %v4328 = vmax.f32 %v4264, 0.0
          %v4329 = vmax.f32 %v4265, 0.0
          %v4330 = vmax.f32 %v4266, 0.0
          %v4331 = vmax.f32 %v4267, 0.0
          %v4332 = vmax.f32 %v4268, 0.0
          %v4333 = vmax.f32 %v4269, 0.0
          %v4334 = vmax.f32 %v4270, 0.0
          %v4335 = vmax.f32 %v4271, 0.0
          %v4336 = vmax.f32 %v4272, 0.0
          %v4337 = vmax.f32 %v4273, 0.0
          %v4338 = vmax.f32 %v4274, 0.0
          %v4339 = vmax.f32 %v4275, 0.0
          %v4340 = vmax.f32 %v4276, 0.0
          %v4341 = vmax.f32 %v4277, 0.0
          %v4342 = vmax.f32 %v4278, 0.0
          %v4343 = vmax.f32 %v4279, 0.0
          %v4344 = vmax.f32 %v4280, 0.0
          %v4345 = vmax.f32 %v4281, 0.0
          %v4346 = vmax.f32 %v4282, 0.0
          %v4347 = vmax.f32 %v4283, 0.0
          %v4348 = vmax.f32 %v4284, 0.0
          %v4349 = vmax.f32 %v4285, 0.0
          %v4350 = vmax.f32 %v4286, 0.0
          %v4351 = vmax.f32 %v4287, 0.0
          %v4352 = vmax.f32 %v4288, 0.0
          %v4353 = vmax.f32 %v4289, 0.0
          %v4354 = vmax.f32 %v4290, 0.0
          %v4355 = vmax.f32 %v4291, 0.0
          %v4356 = vmax.f32 %v4292, 0.0
          %v4357 = vmax.f32 %v4293, 0.0
          %v4358 = vmax.f32 %v4294, 0.0
          %v4359 = vmax.f32 %v4295, 0.0
          %v4360 = vmax.f32 %v4296, 0.0
          %v4361 = vmax.f32 %v4297, 0.0
          %v4362 = vmax.f32 %v4298, 0.0
          %v4363 = vmax.f32 %v4299, 0.0
          %v4364 = vmax.f32 %v4300, 0.0
          %v4365 = vmax.f32 %v4301, 0.0
          %v4366 = vmax.f32 %v4302, 0.0
          %v4367 = vmax.f32 %v4303, 0.0
          %v4368 = vmax.f32 %v4304, 0.0
          %v4369 = vpack.c.bf16 %v4306, %v4305
          %v4370 = vpack.c.bf16 %v4308, %v4307
          %v4371 = vpack.c.bf16 %v4310, %v4309
          %v4372 = vpack.c.bf16 %v4312, %v4311
          %v4373 = vpack.c.bf16 %v4314, %v4313
          %v4374 = vpack.c.bf16 %v4316, %v4315
          %v4375 = vpack.c.bf16 %v4318, %v4317
          %v4376 = vpack.c.bf16 %v4320, %v4319
          %v4377 = vpack.c.bf16 %v4322, %v4321
          %v4378 = vpack.c.bf16 %v4324, %v4323
          %v4379 = vpack.c.bf16 %v4326, %v4325
          %v4380 = vpack.c.bf16 %v4328, %v4327
          %v4381 = vpack.c.bf16 %v4330, %v4329
          %v4382 = vpack.c.bf16 %v4332, %v4331
          %v4383 = vpack.c.bf16 %v4334, %v4333
          %v4384 = vpack.c.bf16 %v4336, %v4335
          %v4385 = vpack.c.bf16 %v4338, %v4337
          %v4386 = vpack.c.bf16 %v4340, %v4339
          %v4387 = vpack.c.bf16 %v4342, %v4341
          %v4388 = vpack.c.bf16 %v4344, %v4343
          %v4389 = vpack.c.bf16 %v4346, %v4345
          %v4390 = vpack.c.bf16 %v4348, %v4347
          %v4391 = vpack.c.bf16 %v4350, %v4349
          %v4392 = vpack.c.bf16 %v4352, %v4351
          %v4393 = vpack.c.bf16 %v4354, %v4353
          %v4394 = vpack.c.bf16 %v4356, %v4355
          %v4395 = vpack.c.bf16 %v4358, %v4357
          %v4396 = vpack.c.bf16 %v4360, %v4359
          %v4397 = vpack.c.bf16 %v4362, %v4361
          %v4398 = vpack.c.bf16 %v4364, %v4363
          %v4399 = vpack.c.bf16 %v4366, %v4365
          %v4400 = vpack.c.bf16 %v4368, %v4367
          %v4433 = vunpack.c.l.b16 %v4369
          %v4434 = vunpack.c.h.b16 %v4369
          %v4435 = vunpack.c.l.b16 %v4370
          %v4436 = vunpack.c.h.b16 %v4370
          %v4437 = vunpack.c.l.b16 %v4371
          %v4438 = vunpack.c.h.b16 %v4371
          %v4439 = vunpack.c.l.b16 %v4372
          %v4440 = vunpack.c.h.b16 %v4372
          %v4441 = vunpack.c.l.b16 %v4373
          %v4442 = vunpack.c.h.b16 %v4373
          %v4443 = vunpack.c.l.b16 %v4374
          %v4444 = vunpack.c.h.b16 %v4374
          %v4445 = vunpack.c.l.b16 %v4375
          %v4446 = vunpack.c.h.b16 %v4375
          %v4447 = vunpack.c.l.b16 %v4376
          %v4448 = vunpack.c.h.b16 %v4376
          %v4449 = vunpack.c.l.b16 %v4377
          %v4450 = vunpack.c.h.b16 %v4377
          %v4451 = vunpack.c.l.b16 %v4378
          %v4452 = vunpack.c.h.b16 %v4378
          %v4453 = vunpack.c.l.b16 %v4379
          %v4454 = vunpack.c.h.b16 %v4379
          %v4455 = vunpack.c.l.b16 %v4380
          %v4456 = vunpack.c.h.b16 %v4380
          %v4457 = vunpack.c.l.b16 %v4381
          %v4458 = vunpack.c.h.b16 %v4381
          %v4459 = vunpack.c.l.b16 %v4382
          %v4460 = vunpack.c.h.b16 %v4382
          %v4461 = vunpack.c.l.b16 %v4383
          %v4462 = vunpack.c.h.b16 %v4383
          %v4463 = vunpack.c.l.b16 %v4384
          %v4464 = vunpack.c.h.b16 %v4384
          %v4465 = vunpack.c.l.b16 %v4385
          %v4466 = vunpack.c.h.b16 %v4385
          %v4467 = vunpack.c.l.b16 %v4386
          %v4468 = vunpack.c.h.b16 %v4386
          %v4469 = vunpack.c.l.b16 %v4387
          %v4470 = vunpack.c.h.b16 %v4387
          %v4471 = vunpack.c.l.b16 %v4388
          %v4472 = vunpack.c.h.b16 %v4388
          %v4473 = vunpack.c.l.b16 %v4389
          %v4474 = vunpack.c.h.b16 %v4389
          %v4475 = vunpack.c.l.b16 %v4390
          %v4476 = vunpack.c.h.b16 %v4390
          %v4477 = vunpack.c.l.b16 %v4391
          %v4478 = vunpack.c.h.b16 %v4391
          %v4479 = vunpack.c.l.b16 %v4392
          %v4480 = vunpack.c.h.b16 %v4392
          %v4481 = vunpack.c.l.b16 %v4393
          %v4482 = vunpack.c.h.b16 %v4393
          %v4483 = vunpack.c.l.b16 %v4394
          %v4484 = vunpack.c.h.b16 %v4394
          %v4485 = vunpack.c.l.b16 %v4395
          %v4486 = vunpack.c.h.b16 %v4395
          %v4487 = vunpack.c.l.b16 %v4396
          %v4488 = vunpack.c.h.b16 %v4396
          %v4489 = vunpack.c.l.b16 %v4397
          %v4490 = vunpack.c.h.b16 %v4397
          %v4491 = vunpack.c.l.b16 %v4398
          %v4492 = vunpack.c.h.b16 %v4398
          %v4493 = vunpack.c.l.b16 %v4399
          %v4494 = vunpack.c.h.b16 %v4399
          %v4495 = vunpack.c.l.b16 %v4400
          %v4496 = vunpack.c.h.b16 %v4400
          %v4497 = vpack.c.b16 %v4433, %v4433
          %v4498 = vpack.c.b16 %v4434, %v4434
          %v4499 = vpack.c.b16 %v4435, %v4435
          %v4500 = vpack.c.b16 %v4436, %v4436
          %v4501 = vpack.c.b16 %v4437, %v4437
          %v4502 = vpack.c.b16 %v4438, %v4438
          %v4503 = vpack.c.b16 %v4439, %v4439
          %v4504 = vpack.c.b16 %v4440, %v4440
          %v4505 = vpack.c.b16 %v4441, %v4441
          %v4506 = vpack.c.b16 %v4442, %v4442
          %v4507 = vpack.c.b16 %v4443, %v4443
          %v4508 = vpack.c.b16 %v4444, %v4444
          %v4509 = vpack.c.b16 %v4445, %v4445
          %v4510 = vpack.c.b16 %v4446, %v4446
          %v4511 = vpack.c.b16 %v4447, %v4447
          %v4512 = vpack.c.b16 %v4448, %v4448
          %v4513 = vpack.c.b16 %v4449, %v4449
          %v4514 = vpack.c.b16 %v4450, %v4450
          %v4515 = vpack.c.b16 %v4451, %v4451
          %v4516 = vpack.c.b16 %v4452, %v4452
          %v4517 = vpack.c.b16 %v4453, %v4453
          %v4518 = vpack.c.b16 %v4454, %v4454
          %v4519 = vpack.c.b16 %v4455, %v4455
          %v4520 = vpack.c.b16 %v4456, %v4456
          %v4521 = vpack.c.b16 %v4457, %v4457
          %v4522 = vpack.c.b16 %v4458, %v4458
          %v4523 = vpack.c.b16 %v4459, %v4459
          %v4524 = vpack.c.b16 %v4460, %v4460
          %v4525 = vpack.c.b16 %v4461, %v4461
          %v4526 = vpack.c.b16 %v4462, %v4462
          %v4527 = vpack.c.b16 %v4463, %v4463
          %v4528 = vpack.c.b16 %v4464, %v4464
          %v4529 = vpack.c.b16 %v4465, %v4465
          %v4530 = vpack.c.b16 %v4466, %v4466
          %v4531 = vpack.c.b16 %v4467, %v4467
          %v4532 = vpack.c.b16 %v4468, %v4468
          %v4533 = vpack.c.b16 %v4469, %v4469
          %v4534 = vpack.c.b16 %v4470, %v4470
          %v4535 = vpack.c.b16 %v4471, %v4471
          %v4536 = vpack.c.b16 %v4472, %v4472
          %v4537 = vpack.c.b16 %v4473, %v4473
          %v4538 = vpack.c.b16 %v4474, %v4474
          %v4539 = vpack.c.b16 %v4475, %v4475
          %v4540 = vpack.c.b16 %v4476, %v4476
          %v4541 = vpack.c.b16 %v4477, %v4477
          %v4542 = vpack.c.b16 %v4478, %v4478
          %v4543 = vpack.c.b16 %v4479, %v4479
          %v4544 = vpack.c.b16 %v4480, %v4480
          %v4545 = vpack.c.b16 %v4481, %v4481
          %v4546 = vpack.c.b16 %v4482, %v4482
          %v4547 = vpack.c.b16 %v4483, %v4483
          %v4548 = vpack.c.b16 %v4484, %v4484
          %v4549 = vpack.c.b16 %v4485, %v4485
          %v4550 = vpack.c.b16 %v4486, %v4486
          %v4551 = vpack.c.b16 %v4487, %v4487
          %v4552 = vpack.c.b16 %v4488, %v4488
          %v4553 = vpack.c.b16 %v4489, %v4489
          %v4554 = vpack.c.b16 %v4490, %v4490
          %v4555 = vpack.c.b16 %v4491, %v4491
          %v4556 = vpack.c.b16 %v4492, %v4492
          %v4557 = vpack.c.b16 %v4493, %v4493
          %v4558 = vpack.c.b16 %v4494, %v4494
          %v4559 = vpack.c.b16 %v4495, %v4495
          %v4560 = vpack.c.b16 %v4496, %v4496
          %4625 = vst [vmem:[%s390] sm:$0xf] %v4497
          %4626 = vst [vmem:[%s390 + $0x4] sm:$0xf] %v4498
          %4627 = vst [vmem:[%s390 + $0x8] sm:$0xf] %v4499
          %4628 = vst [vmem:[%s390 + $0xc] sm:$0xf] %v4500
          %4629 = vst [vmem:[%s390 + $0x10] sm:$0xf] %v4501
          %4630 = vst [vmem:[%s390 + $0x14] sm:$0xf] %v4502
          %4631 = vst [vmem:[%s390 + $0x18] sm:$0xf] %v4503
          %4632 = vst [vmem:[%s390 + $0x1c] sm:$0xf] %v4504
          %4633 = vst [vmem:[%s390 + $0x20] sm:$0xf] %v4505
          %4634 = vst [vmem:[%s390 + $0x24] sm:$0xf] %v4506
          %4635 = vst [vmem:[%s390 + $0x28] sm:$0xf] %v4507
          %4636 = vst [vmem:[%s390 + $0x2c] sm:$0xf] %v4508
          %4637 = vst [vmem:[%s390 + $0x30] sm:$0xf] %v4509
          %4638 = vst [vmem:[%s390 + $0x34] sm:$0xf] %v4510
          %4639 = vst [vmem:[%s390 + $0x38] sm:$0xf] %v4511
          %4640 = vst [vmem:[%s390 + $0x3c] sm:$0xf] %v4512
          %4641 = vst [vmem:[%s390 + $0x40] sm:$0xf] %v4513
          %4642 = vst [vmem:[%s390 + $0x44] sm:$0xf] %v4514
          %4643 = vst [vmem:[%s390 + $0x48] sm:$0xf] %v4515
          %4644 = vst [vmem:[%s390 + $0x4c] sm:$0xf] %v4516
          %4645 = vst [vmem:[%s390 + $0x50] sm:$0xf] %v4517
          %4646 = vst [vmem:[%s390 + $0x54] sm:$0xf] %v4518
          %4647 = vst [vmem:[%s390 + $0x58] sm:$0xf] %v4519
          %4648 = vst [vmem:[%s390 + $0x5c] sm:$0xf] %v4520
          %4649 = vst [vmem:[%s390 + $0x60] sm:$0xf] %v4521
          %4650 = vst [vmem:[%s390 + $0x64] sm:$0xf] %v4522
          %4651 = vst [vmem:[%s390 + $0x68] sm:$0xf] %v4523
          %4652 = vst [vmem:[%s390 + $0x6c] sm:$0xf] %v4524
          %4653 = vst [vmem:[%s390 + $0x70] sm:$0xf] %v4525
          %4654 = vst [vmem:[%s390 + $0x74] sm:$0xf] %v4526
          %4655 = vst [vmem:[%s390 + $0x78] sm:$0xf] %v4527
          %4656 = vst [vmem:[%s390 + $0x7c] sm:$0xf] %v4528
          %4657 = vst [vmem:[%s390 + $0x80] sm:$0xf] %v4529
          %4658 = vst [vmem:[%s390 + $0x84] sm:$0xf] %v4530
          %4659 = vst [vmem:[%s390 + $0x88] sm:$0xf] %v4531
          %4660 = vst [vmem:[%s390 + $0x8c] sm:$0xf] %v4532
          %4661 = vst [vmem:[%s390 + $0x90] sm:$0xf] %v4533
          %4662 = vst [vmem:[%s390 + $0x94] sm:$0xf] %v4534
          %4663 = vst [vmem:[%s390 + $0x98] sm:$0xf] %v4535
          %4664 = vst [vmem:[%s390 + $0x9c] sm:$0xf] %v4536
          %4665 = vst [vmem:[%s390 + $0xa0] sm:$0xf] %v4537
          %4666 = vst [vmem:[%s390 + $0xa4] sm:$0xf] %v4538
          %4667 = vst [vmem:[%s390 + $0xa8] sm:$0xf] %v4539
          %4668 = vst [vmem:[%s390 + $0xac] sm:$0xf] %v4540
          %4669 = vst [vmem:[%s390 + $0xb0] sm:$0xf] %v4541
          %4670 = vst [vmem:[%s390 + $0xb4] sm:$0xf] %v4542
          %4671 = vst [vmem:[%s390 + $0xb8] sm:$0xf] %v4543
          %4672 = vst [vmem:[%s390 + $0xbc] sm:$0xf] %v4544
          %4673 = vst [vmem:[%s390 + $0xc0] sm:$0xf] %v4545
          %4674 = vst [vmem:[%s390 + $0xc4] sm:$0xf] %v4546
          %4675 = vst [vmem:[%s390 + $0xc8] sm:$0xf] %v4547
          %4676 = vst [vmem:[%s390 + $0xcc] sm:$0xf] %v4548
          %4677 = vst [vmem:[%s390 + $0xd0] sm:$0xf] %v4549
          %4678 = vst [vmem:[%s390 + $0xd4] sm:$0xf] %v4550
          %4679 = vst [vmem:[%s390 + $0xd8] sm:$0xf] %v4551
          %4680 = vst [vmem:[%s390 + $0xdc] sm:$0xf] %v4552
          %4681 = vst [vmem:[%s390 + $0xe0] sm:$0xf] %v4553
          %4682 = vst [vmem:[%s390 + $0xe4] sm:$0xf] %v4554
          %4683 = vst [vmem:[%s390 + $0xe8] sm:$0xf] %v4555
          %4684 = vst [vmem:[%s390 + $0xec] sm:$0xf] %v4556
          %4685 = vst [vmem:[%s390 + $0xf0] sm:$0xf] %v4557
          %4686 = vst [vmem:[%s390 + $0xf4] sm:$0xf] %v4558
          %4687 = vst [vmem:[%s390 + $0xf8] sm:$0xf] %v4559
          %4688 = vst [vmem:[%s390 + $0xfc] sm:$0xf] %v4560
        $region68: #{tpu_custom_call.1} parent=47 // pred_fallthru
          _
        %s4689 = sand.u32 %s214, 1
        %s4690 = scalar_lea.sflag [#allocation5], %s4689
        %s4691 = sand.u32 %s214, 1
        %s4692 = smul.addr %s4691, 256
        %s4693 = scalar_lea.vmem [#allocation9], %s4692
        // Predicated region
        $region69: #{tpu_custom_call.1} parent=47 // pred_check
          %p4694 = pneg %p224
        $region70: #{tpu_custom_call.1} parent=47 // pred_check_branch
          %4696 = sbr.rel (%p4694) target = $region72
        $region71: #{tpu_custom_call.1} parent=47 // pred_region
          %s4697 = smul.u32 64, %s29
          %s4699 = ssub.s32 4096, 4096
          %4700 = vsyncadd %s4690, %s4699
          %s4701 = smul.addr %s4697, 64
          %s4702 = scalar_lea.hbm %s7, %s4701
          %s4703 = sshll.u32 %s4693, 4
          %s4704 = int_to_ptr.vmem [resolvable:$true] %s4703
          %4709 = dma.vmem_to_hbm [thread:$0]  %s4704, 4096, %s4702, %s4690, 64, 64, 4
        $region72: #{tpu_custom_call.1} parent=47 // pred_fallthru
          _
      $region48: #{tpu_custom_call.1} parent=5 // pred_fallthru
        _
      %p4710 = scmp.le.s32.totalorder 2, %s20
      // Predicated region
      $region73: #{tpu_custom_call.1} parent=5 // pred_check
        %p4711 = pneg %p4710
      $region74: #{tpu_custom_call.1} parent=5 // pred_check_branch
        %4713 = sbr.rel (%p4711) target = $region76
      $region75: #{tpu_custom_call.1} parent=5 // pred_region
        %s4714 = ssub.s32 %s20, 2
        // Predicated region
        $region77: #{tpu_custom_call.1} parent=75 // pred_check
          %p4715 = pneg %p230
        $region78: #{tpu_custom_call.1} parent=75 // pred_check_branch
          %4717 = sbr.rel (%p4715) target = $region80
        $region79: #{tpu_custom_call.1} parent=75 // pred_region
          %s4718 = sand.u32 %s215, 1
          %s4719 = scalar_lea.sflag [#allocation5], %s4718
          %s4720 = sand.u32 %s215, 1
          %s4721 = smul.addr %s4720, 256
          %s4722 = scalar_lea.vmem [#allocation9], %s4721
          %4723 = dma.done %s4719, 4096
        $region80: #{tpu_custom_call.1} parent=75 // pred_fallthru
          _
      $region76: #{tpu_custom_call.1} parent=5 // pred_fallthru
        _
    $region6: #{tpu_custom_call.1} parent=1 // loop_footer
      %s24 = sadd.s32 1, %s20
    $region7: #{tpu_custom_call.1} parent=1 // loop_footer_branch
      %19 = sbr.rel target = $region3
    $region8: #{tpu_custom_call.1} parent=1 // loop_exit
      _
    %4724 = vsyncpa [#allocation4], 1
    %s4725 = scalar_lea.sflag [#allocation4], 1
    %4726 = vsyncpa %s4725, 1
    %4727 = vsyncpa [#allocation7], 1
    %4728 = vsyncpa [#allocation5], 1
    %s4729 = scalar_lea.sflag [#allocation5], 1
    %4730 = vsyncpa %s4729, 1

</llo_original>
